<compile_context>
chip_gen: v7x
topology: tpu7x:2x2x1
jax: 0.10.0
libtpu: 0.0.40
codegen_flags: <defaults>
</compile_context>

<pallas_src>
import jax
import jax.numpy as jnp
from jax.experimental import pallas as pl
from jax.experimental.pallas import tpu as pltpu  # noqa: F401  (TPU backend)

# ----------------------------- model dims (small) -----------------------------
B = 2        # logical batch
BP = 8       # padded batch (sublane-aligned)
S = 8        # source sequence length
T = 8        # target (decode) sequence length
E = 32       # embedding size
H = 32       # GRU hidden size
V_SRC = 16   # source vocab
V_TGT = 16   # target vocab
SOS = 1      # <sos> token id in target vocab


# ------------------------------ fused kernel ----------------------------------
def seq2seq_kernel(enc_gx_ref, enc_whh_ref, enc_bhh_ref,
                   dec_embg_ref, dec_whh_ref, dec_bhh_ref,
                   wout_ref, bout_ref, out_ref):
    """Fused encoder + greedy decoder, single invocation, loops fully unrolled.

    enc_gx_ref  : (S, BP, 3H)   precomputed src_emb @ W_ih + b_ih, layout [r|z|n]
    enc_whh_ref : (H, 3H)       hidden-gate weights, layout [r|z|n]
    enc_bhh_ref : (1, 3H)
    dec_embg_ref: (V_TGT, 3H)   tgt_emb @ W_ih + b_ih (embedding folded in)
    dec_whh_ref : (H, 3H)
    dec_bhh_ref : (1, 3H)
    wout_ref    : (H, V_TGT)
    bout_ref    : (1, V_TGT)
    out_ref     : (BP, T*V_TGT) lane-dense log-prob slab
    """
    enc_whh = enc_whh_ref[...]
    enc_bhh = enc_bhh_ref[...]
    dec_whh = dec_whh_ref[...]
    dec_bhh = dec_bhh_ref[...]
    dec_embg = dec_embg_ref[...]
    w_out = wout_ref[...]
    b_out = bout_ref[...]

    def gru_step(gx, h, whh, bhh):
        # PyTorch nn.GRU cell.  One MXU push for all three hidden gates;
        # b_hh_n must stay inside the r-gated term, so the full b_hh is added
        # to gh (not folded into gx).
        gh = jnp.dot(h, whh, preferred_element_type=jnp.float32) + bhh
        rz = jax.nn.sigmoid(gx[:, :2 * H] + gh[:, :2 * H])
        r = rz[:, :H]
        z = rz[:, H:]
        n = jnp.tanh(gx[:, 2 * H:] + r * gh[:, 2 * H:])
        return (1.0 - z) * n + z * h

    # ---------------- encoder: GRU over S source steps ----------------
    h = jnp.zeros((BP, H), jnp.float32)
    for s in range(S):
        h = gru_step(enc_gx_ref[s], h, enc_whh, enc_bhh)

    # ---------------- decoder: greedy decode (tf_ratio = 0.0) ----------------
    iota_v = jax.lax.broadcasted_iota(jnp.int32, (BP, V_TGT), 1)
    prev = (iota_v == SOS).astype(jnp.float32)          # one-hot <sos>

    outs = []
    for _t in range(T):
        # input-side gates: one-hot @ (tgt_emb @ W_ih + b_ih)  -- one MXU push
        gx = jnp.dot(prev, dec_embg, preferred_element_type=jnp.float32)
        h = gru_step(gx, h, dec_whh, dec_bhh)

        logits = jnp.dot(h, w_out, preferred_element_type=jnp.float32) + b_out
        # numerically stable log_softmax
        m = jnp.max(logits, axis=-1, keepdims=True)
        lse = m + jnp.log(jnp.sum(jnp.exp(logits - m), axis=-1, keepdims=True))
        outs.append(logits - lse)

        # greedy next token: first index attaining the max (torch.argmax tie-break)
        idx = jnp.min(jnp.where(logits == m, iota_v, V_TGT), axis=-1, keepdims=True)
        prev = (iota_v == idx).astype(jnp.float32)

    # single lane-dense (BP, T*V_TGT) = (8, 128) unmasked store
    out_ref[...] = jnp.concatenate(outs, axis=-1)


# ------------------------------- wrapper ---------------------------------------
def init_params(key):
    ks = jax.random.split(key, 8)
    scale = 0.1
    return {
        "src_emb": scale * jax.random.normal(ks[0], (V_SRC, E), jnp.float32),
        "enc_w_ih": scale * jax.random.normal(ks[1], (E, 3 * H), jnp.float32),
        "enc_w_hh": scale * jax.random.normal(ks[2], (H, 3 * H), jnp.float32),
        "enc_b_ih": jnp.zeros((1, 3 * H), jnp.float32),
        "enc_b_hh": jnp.zeros((1, 3 * H), jnp.float32),
        "tgt_emb": scale * jax.random.normal(ks[3], (V_TGT, E), jnp.float32),
        "dec_w_ih": scale * jax.random.normal(ks[4], (E, 3 * H), jnp.float32),
        "dec_w_hh": scale * jax.random.normal(ks[5], (H, 3 * H), jnp.float32),
        "dec_b_ih": jnp.zeros((1, 3 * H), jnp.float32),
        "dec_b_hh": jnp.zeros((1, 3 * H), jnp.float32),
        "w_out": scale * jax.random.normal(ks[6], (H, V_TGT), jnp.float32),
        "b_out": jnp.zeros((1, V_TGT), jnp.float32),
    }


@jax.jit
def transduction_forward(source_tokens, params):
    """source_tokens: (S, B) int32 -> dec_outputs: (T, B, V_TGT) float32.
    Mirrors TransductionModel.forward with tf_ratio = 0.0 (greedy decoding)."""
    # pad batch to sublane width; padded rows are sliced away at the end
    src_pad = jnp.pad(source_tokens, ((0, 0), (0, BP - B)))
    src_emb = params["src_emb"][src_pad]                          # (S, BP, E)

    # hoist the encoder input-side GRU matmul off the serial path
    enc_gx = (jnp.einsum("sbe,eg->sbg", src_emb, params["enc_w_ih"])
              + params["enc_b_ih"])                               # (S, BP, 3H)

    # fold target embedding + input gates + b_ih into one matrix (gates stay
    # lane-concatenated [r|z|n] so the kernel does one matmul per GRU half-step)
    dec_embg = params["tgt_emb"] @ params["dec_w_ih"] + params["dec_b_ih"]  # (V_TGT, 3H)

    out_flat = pl.pallas_call(
        seq2seq_kernel,
        out_shape=jax.ShapeDtypeStruct((BP, T * V_TGT), jnp.float32),
    )(enc_gx, params["enc_w_hh"], params["enc_b_hh"],
      dec_embg, params["dec_w_hh"], params["dec_b_hh"],
      params["w_out"], params["b_out"])

    # (BP, T*V) -> (B, T, V) -> (T, B, V)  (PyTorch seq-first decoder output)
    out = out_flat[:B].reshape(B, T, V_TGT)
    return jnp.transpose(out, (1, 0, 2))


# -------------------- pure-JAX reference for the first decode step --------------
def _reference_step0(source_tokens, params):
    def gru(x, h, w_ih, w_hh, b_ih, b_hh):
        gx = x @ w_ih + b_ih
        gh = h @ w_hh + b_hh
        r = jax.nn.sigmoid(gx[:, :H] + gh[:, :H])
        z = jax.nn.sigmoid(gx[:, H:2 * H] + gh[:, H:2 * H])
        n = jnp.tanh(gx[:, 2 * H:] + r * gh[:, 2 * H:])
        return (1.0 - z) * n + z * h

    src_emb = params["src_emb"][source_tokens]                    # (S, B, E)
    h = jnp.zeros((B, H), jnp.float32)
    for s in range(S):
        h = gru(src_emb[s], h, params["enc_w_ih"], params["enc_w_hh"],
                params["enc_b_ih"], params["enc_b_hh"])
    x0 = jnp.broadcast_to(params["tgt_emb"][SOS], (B, E))
    h = gru(x0, h, params["dec_w_ih"], params["dec_w_hh"],
            params["dec_b_ih"], params["dec_b_hh"])
    logits = h @ params["w_out"] + params["b_out"]
    return jax.nn.log_softmax(logits, axis=-1)                    # (B, V_TGT)


if __name__ == "__main__":
    key = jax.random.PRNGKey(0)
    pkey, dkey = jax.random.split(key)
    params = init_params(pkey)
    source = jax.random.randint(dkey, (S, B), 0, V_SRC, dtype=jnp.int32)

    out = transduction_forward(source, params)
    jax.block_until_ready(out)

    assert out.shape == (T, B, V_TGT), out.shape
    assert out.dtype == jnp.float32
    assert bool(jnp.all(jnp.isfinite(out)))

    # rows of dec_outputs are log-probabilities -> logsumexp ~= 0
    row_lse = jax.scipy.special.logsumexp(out, axis=-1)
    assert jnp.allclose(row_lse, 0.0, atol=1e-4), row_lse

    # first decode step (no greedy-feedback dependence) vs pure-JAX reference
    ref0 = _reference_step0(source, params)
    assert jnp.allclose(out[0], ref0, atol=2e-2), jnp.max(jnp.abs(out[0] - ref0))

    print("KERNEL_OK")
</pallas_src>

<mosaic_0001>
module attributes {stable_mosaic.version = 11 : i64} {
  func.func @seq2seq_kernel(%arg0: memref<8x8x96xf32, #tpu.memory_space<vmem>>, %arg1: memref<32x96xf32, #tpu.memory_space<vmem>>, %arg2: memref<1x96xf32, #tpu.memory_space<vmem>>, %arg3: memref<16x96xf32, #tpu.memory_space<vmem>>, %arg4: memref<32x96xf32, #tpu.memory_space<vmem>>, %arg5: memref<1x96xf32, #tpu.memory_space<vmem>>, %arg6: memref<32x16xf32, #tpu.memory_space<vmem>>, %arg7: memref<1x16xf32, #tpu.memory_space<vmem>>, %arg8: memref<8x128xf32, #tpu.memory_space<vmem>>) attributes {dimension_semantics = [], scalar_prefetch = 0 : i64, scratch_operands = 0 : i64, tpu.core_type = #tpu.core_type<tc>} {
    %c0 = arith.constant 0 : index
    %c0_0 = arith.constant 0 : index
    %0 = vector.load %arg1[%c0, %c0_0] : memref<32x96xf32, #tpu.memory_space<vmem>>, vector<32x96xf32>
    %c0_1 = arith.constant 0 : index
    %c0_2 = arith.constant 0 : index
    %1 = vector.load %arg2[%c0_1, %c0_2] : memref<1x96xf32, #tpu.memory_space<vmem>>, vector<1x96xf32>
    %c0_3 = arith.constant 0 : index
    %c0_4 = arith.constant 0 : index
    %2 = vector.load %arg4[%c0_3, %c0_4] : memref<32x96xf32, #tpu.memory_space<vmem>>, vector<32x96xf32>
    %c0_5 = arith.constant 0 : index
    %c0_6 = arith.constant 0 : index
    %3 = vector.load %arg5[%c0_5, %c0_6] : memref<1x96xf32, #tpu.memory_space<vmem>>, vector<1x96xf32>
    %c0_7 = arith.constant 0 : index
    %c0_8 = arith.constant 0 : index
    %4 = vector.load %arg3[%c0_7, %c0_8] : memref<16x96xf32, #tpu.memory_space<vmem>>, vector<16x96xf32>
    %c0_9 = arith.constant 0 : index
    %c0_10 = arith.constant 0 : index
    %5 = vector.load %arg6[%c0_9, %c0_10] : memref<32x16xf32, #tpu.memory_space<vmem>>, vector<32x16xf32>
    %c0_11 = arith.constant 0 : index
    %c0_12 = arith.constant 0 : index
    %6 = vector.load %arg7[%c0_11, %c0_12] : memref<1x16xf32, #tpu.memory_space<vmem>>, vector<1x16xf32>
    %cst = arith.constant 0.000000e+00 : f32
    %7 = vector.broadcast %cst : f32 to vector<8x32xf32>
    %c0_13 = arith.constant 0 : index
    %c0_14 = arith.constant 0 : index
    %c0_15 = arith.constant 0 : index
    %8 = vector.load %arg0[%c0_13, %c0_14, %c0_15] : memref<8x8x96xf32, #tpu.memory_space<vmem>>, vector<1x8x96xf32>
    %9 = vector.shape_cast %8 : vector<1x8x96xf32> to vector<8x96xf32>
    %cst_16 = arith.constant dense<0.000000e+00> : vector<8x96xf32>
    %10 = tpu.matmul %7, %0, %cst_16 {dimension_numbers = #tpu.dot_dimension_numbers<[1], [0], [0], [1], [0, 0, 1, 1], [], []>} : vector<8x32xf32>, vector<32x96xf32>, vector<8x96xf32> -> vector<8x96xf32>
    %11 = vector.broadcast %1 : vector<1x96xf32> to vector<8x96xf32>
    %12 = arith.addf %10, %11 : vector<8x96xf32>
    %13 = vector.extract_strided_slice %9 {offsets = [0, 0], sizes = [8, 64], strides = [1, 1]} : vector<8x96xf32> to vector<8x64xf32>
    %14 = vector.extract_strided_slice %12 {offsets = [0, 0], sizes = [8, 64], strides = [1, 1]} : vector<8x96xf32> to vector<8x64xf32>
    %15 = arith.addf %13, %14 : vector<8x64xf32>
    %16 = arith.negf %15 : vector<8x64xf32>
    %17 = math.exp %16 : vector<8x64xf32>
    %cst_17 = arith.constant 1.000000e+00 : f32
    %18 = vector.broadcast %cst_17 : f32 to vector<8x64xf32>
    %19 = arith.addf %18, %17 : vector<8x64xf32>
    %20 = arith.divf %18, %19 : vector<8x64xf32>
    %21 = vector.extract_strided_slice %20 {offsets = [0, 0], sizes = [8, 32], strides = [1, 1]} : vector<8x64xf32> to vector<8x32xf32>
    %22 = vector.extract_strided_slice %20 {offsets = [0, 32], sizes = [8, 32], strides = [1, 1]} : vector<8x64xf32> to vector<8x32xf32>
    %23 = vector.extract_strided_slice %9 {offsets = [0, 64], sizes = [8, 32], strides = [1, 1]} : vector<8x96xf32> to vector<8x32xf32>
    %24 = vector.extract_strided_slice %12 {offsets = [0, 64], sizes = [8, 32], strides = [1, 1]} : vector<8x96xf32> to vector<8x32xf32>
    %25 = arith.mulf %21, %24 : vector<8x32xf32>
    %26 = arith.addf %23, %25 : vector<8x32xf32>
    %27 = math.tanh %26 : vector<8x32xf32>
    %cst_18 = arith.constant 1.000000e+00 : f32
    %28 = vector.broadcast %cst_18 : f32 to vector<8x32xf32>
    %29 = arith.subf %28, %22 : vector<8x32xf32>
    %30 = arith.mulf %29, %27 : vector<8x32xf32>
    %31 = arith.mulf %22, %7 : vector<8x32xf32>
    %32 = arith.addf %30, %31 : vector<8x32xf32>
    %c1 = arith.constant 1 : index
    %c0_19 = arith.constant 0 : index
    %c0_20 = arith.constant 0 : index
    %33 = vector.load %arg0[%c1, %c0_19, %c0_20] : memref<8x8x96xf32, #tpu.memory_space<vmem>>, vector<1x8x96xf32>
    %34 = vector.shape_cast %33 : vector<1x8x96xf32> to vector<8x96xf32>
    %cst_21 = arith.constant dense<0.000000e+00> : vector<8x96xf32>
    %35 = tpu.matmul %32, %0, %cst_21 {dimension_numbers = #tpu.dot_dimension_numbers<[1], [0], [0], [1], [0, 0, 1, 1], [], []>} : vector<8x32xf32>, vector<32x96xf32>, vector<8x96xf32> -> vector<8x96xf32>
    %36 = vector.broadcast %1 : vector<1x96xf32> to vector<8x96xf32>
    %37 = arith.addf %35, %36 : vector<8x96xf32>
    %38 = vector.extract_strided_slice %34 {offsets = [0, 0], sizes = [8, 64], strides = [1, 1]} : vector<8x96xf32> to vector<8x64xf32>
    %39 = vector.extract_strided_slice %37 {offsets = [0, 0], sizes = [8, 64], strides = [1, 1]} : vector<8x96xf32> to vector<8x64xf32>
    %40 = arith.addf %38, %39 : vector<8x64xf32>
    %41 = arith.negf %40 : vector<8x64xf32>
    %42 = math.exp %41 : vector<8x64xf32>
    %cst_22 = arith.constant 1.000000e+00 : f32
    %43 = vector.broadcast %cst_22 : f32 to vector<8x64xf32>
    %44 = arith.addf %43, %42 : vector<8x64xf32>
    %45 = arith.divf %43, %44 : vector<8x64xf32>
    %46 = vector.extract_strided_slice %45 {offsets = [0, 0], sizes = [8, 32], strides = [1, 1]} : vector<8x64xf32> to vector<8x32xf32>
    %47 = vector.extract_strided_slice %45 {offsets = [0, 32], sizes = [8, 32], strides = [1, 1]} : vector<8x64xf32> to vector<8x32xf32>
    %48 = vector.extract_strided_slice %34 {offsets = [0, 64], sizes = [8, 32], strides = [1, 1]} : vector<8x96xf32> to vector<8x32xf32>
    %49 = vector.extract_strided_slice %37 {offsets = [0, 64], sizes = [8, 32], strides = [1, 1]} : vector<8x96xf32> to vector<8x32xf32>
    %50 = arith.mulf %46, %49 : vector<8x32xf32>
    %51 = arith.addf %48, %50 : vector<8x32xf32>
    %52 = math.tanh %51 : vector<8x32xf32>
    %cst_23 = arith.constant 1.000000e+00 : f32
    %53 = vector.broadcast %cst_23 : f32 to vector<8x32xf32>
    %54 = arith.subf %53, %47 : vector<8x32xf32>
    %55 = arith.mulf %54, %52 : vector<8x32xf32>
    %56 = arith.mulf %47, %32 : vector<8x32xf32>
    %57 = arith.addf %55, %56 : vector<8x32xf32>
    %c2 = arith.constant 2 : index
    %c0_24 = arith.constant 0 : index
    %c0_25 = arith.constant 0 : index
    %58 = vector.load %arg0[%c2, %c0_24, %c0_25] : memref<8x8x96xf32, #tpu.memory_space<vmem>>, vector<1x8x96xf32>
    %59 = vector.shape_cast %58 : vector<1x8x96xf32> to vector<8x96xf32>
    %cst_26 = arith.constant dense<0.000000e+00> : vector<8x96xf32>
    %60 = tpu.matmul %57, %0, %cst_26 {dimension_numbers = #tpu.dot_dimension_numbers<[1], [0], [0], [1], [0, 0, 1, 1], [], []>} : vector<8x32xf32>, vector<32x96xf32>, vector<8x96xf32> -> vector<8x96xf32>
    %61 = vector.broadcast %1 : vector<1x96xf32> to vector<8x96xf32>
    %62 = arith.addf %60, %61 : vector<8x96xf32>
    %63 = vector.extract_strided_slice %59 {offsets = [0, 0], sizes = [8, 64], strides = [1, 1]} : vector<8x96xf32> to vector<8x64xf32>
    %64 = vector.extract_strided_slice %62 {offsets = [0, 0], sizes = [8, 64], strides = [1, 1]} : vector<8x96xf32> to vector<8x64xf32>
    %65 = arith.addf %63, %64 : vector<8x64xf32>
    %66 = arith.negf %65 : vector<8x64xf32>
    %67 = math.exp %66 : vector<8x64xf32>
    %cst_27 = arith.constant 1.000000e+00 : f32
    %68 = vector.broadcast %cst_27 : f32 to vector<8x64xf32>
    %69 = arith.addf %68, %67 : vector<8x64xf32>
    %70 = arith.divf %68, %69 : vector<8x64xf32>
    %71 = vector.extract_strided_slice %70 {offsets = [0, 0], sizes = [8, 32], strides = [1, 1]} : vector<8x64xf32> to vector<8x32xf32>
    %72 = vector.extract_strided_slice %70 {offsets = [0, 32], sizes = [8, 32], strides = [1, 1]} : vector<8x64xf32> to vector<8x32xf32>
    %73 = vector.extract_strided_slice %59 {offsets = [0, 64], sizes = [8, 32], strides = [1, 1]} : vector<8x96xf32> to vector<8x32xf32>
    %74 = vector.extract_strided_slice %62 {offsets = [0, 64], sizes = [8, 32], strides = [1, 1]} : vector<8x96xf32> to vector<8x32xf32>
    %75 = arith.mulf %71, %74 : vector<8x32xf32>
    %76 = arith.addf %73, %75 : vector<8x32xf32>
    %77 = math.tanh %76 : vector<8x32xf32>
    %cst_28 = arith.constant 1.000000e+00 : f32
    %78 = vector.broadcast %cst_28 : f32 to vector<8x32xf32>
    %79 = arith.subf %78, %72 : vector<8x32xf32>
    %80 = arith.mulf %79, %77 : vector<8x32xf32>
    %81 = arith.mulf %72, %57 : vector<8x32xf32>
    %82 = arith.addf %80, %81 : vector<8x32xf32>
    %c3 = arith.constant 3 : index
    %c0_29 = arith.constant 0 : index
    %c0_30 = arith.constant 0 : index
    %83 = vector.load %arg0[%c3, %c0_29, %c0_30] : memref<8x8x96xf32, #tpu.memory_space<vmem>>, vector<1x8x96xf32>
    %84 = vector.shape_cast %83 : vector<1x8x96xf32> to vector<8x96xf32>
    %cst_31 = arith.constant dense<0.000000e+00> : vector<8x96xf32>
    %85 = tpu.matmul %82, %0, %cst_31 {dimension_numbers = #tpu.dot_dimension_numbers<[1], [0], [0], [1], [0, 0, 1, 1], [], []>} : vector<8x32xf32>, vector<32x96xf32>, vector<8x96xf32> -> vector<8x96xf32>
    %86 = vector.broadcast %1 : vector<1x96xf32> to vector<8x96xf32>
    %87 = arith.addf %85, %86 : vector<8x96xf32>
    %88 = vector.extract_strided_slice %84 {offsets = [0, 0], sizes = [8, 64], strides = [1, 1]} : vector<8x96xf32> to vector<8x64xf32>
    %89 = vector.extract_strided_slice %87 {offsets = [0, 0], sizes = [8, 64], strides = [1, 1]} : vector<8x96xf32> to vector<8x64xf32>
    %90 = arith.addf %88, %89 : vector<8x64xf32>
    %91 = arith.negf %90 : vector<8x64xf32>
    %92 = math.exp %91 : vector<8x64xf32>
    %cst_32 = arith.constant 1.000000e+00 : f32
    %93 = vector.broadcast %cst_32 : f32 to vector<8x64xf32>
    %94 = arith.addf %93, %92 : vector<8x64xf32>
    %95 = arith.divf %93, %94 : vector<8x64xf32>
    %96 = vector.extract_strided_slice %95 {offsets = [0, 0], sizes = [8, 32], strides = [1, 1]} : vector<8x64xf32> to vector<8x32xf32>
    %97 = vector.extract_strided_slice %95 {offsets = [0, 32], sizes = [8, 32], strides = [1, 1]} : vector<8x64xf32> to vector<8x32xf32>
    %98 = vector.extract_strided_slice %84 {offsets = [0, 64], sizes = [8, 32], strides = [1, 1]} : vector<8x96xf32> to vector<8x32xf32>
    %99 = vector.extract_strided_slice %87 {offsets = [0, 64], sizes = [8, 32], strides = [1, 1]} : vector<8x96xf32> to vector<8x32xf32>
    %100 = arith.mulf %96, %99 : vector<8x32xf32>
    %101 = arith.addf %98, %100 : vector<8x32xf32>
    %102 = math.tanh %101 : vector<8x32xf32>
    %cst_33 = arith.constant 1.000000e+00 : f32
    %103 = vector.broadcast %cst_33 : f32 to vector<8x32xf32>
    %104 = arith.subf %103, %97 : vector<8x32xf32>
    %105 = arith.mulf %104, %102 : vector<8x32xf32>
    %106 = arith.mulf %97, %82 : vector<8x32xf32>
    %107 = arith.addf %105, %106 : vector<8x32xf32>
    %c4 = arith.constant 4 : index
    %c0_34 = arith.constant 0 : index
    %c0_35 = arith.constant 0 : index
    %108 = vector.load %arg0[%c4, %c0_34, %c0_35] : memref<8x8x96xf32, #tpu.memory_space<vmem>>, vector<1x8x96xf32>
    %109 = vector.shape_cast %108 : vector<1x8x96xf32> to vector<8x96xf32>
    %cst_36 = arith.constant dense<0.000000e+00> : vector<8x96xf32>
    %110 = tpu.matmul %107, %0, %cst_36 {dimension_numbers = #tpu.dot_dimension_numbers<[1], [0], [0], [1], [0, 0, 1, 1], [], []>} : vector<8x32xf32>, vector<32x96xf32>, vector<8x96xf32> -> vector<8x96xf32>
    %111 = vector.broadcast %1 : vector<1x96xf32> to vector<8x96xf32>
    %112 = arith.addf %110, %111 : vector<8x96xf32>
    %113 = vector.extract_strided_slice %109 {offsets = [0, 0], sizes = [8, 64], strides = [1, 1]} : vector<8x96xf32> to vector<8x64xf32>
    %114 = vector.extract_strided_slice %112 {offsets = [0, 0], sizes = [8, 64], strides = [1, 1]} : vector<8x96xf32> to vector<8x64xf32>
    %115 = arith.addf %113, %114 : vector<8x64xf32>
    %116 = arith.negf %115 : vector<8x64xf32>
    %117 = math.exp %116 : vector<8x64xf32>
    %cst_37 = arith.constant 1.000000e+00 : f32
    %118 = vector.broadcast %cst_37 : f32 to vector<8x64xf32>
    %119 = arith.addf %118, %117 : vector<8x64xf32>
    %120 = arith.divf %118, %119 : vector<8x64xf32>
    %121 = vector.extract_strided_slice %120 {offsets = [0, 0], sizes = [8, 32], strides = [1, 1]} : vector<8x64xf32> to vector<8x32xf32>
    %122 = vector.extract_strided_slice %120 {offsets = [0, 32], sizes = [8, 32], strides = [1, 1]} : vector<8x64xf32> to vector<8x32xf32>
    %123 = vector.extract_strided_slice %109 {offsets = [0, 64], sizes = [8, 32], strides = [1, 1]} : vector<8x96xf32> to vector<8x32xf32>
    %124 = vector.extract_strided_slice %112 {offsets = [0, 64], sizes = [8, 32], strides = [1, 1]} : vector<8x96xf32> to vector<8x32xf32>
    %125 = arith.mulf %121, %124 : vector<8x32xf32>
    %126 = arith.addf %123, %125 : vector<8x32xf32>
    %127 = math.tanh %126 : vector<8x32xf32>
    %cst_38 = arith.constant 1.000000e+00 : f32
    %128 = vector.broadcast %cst_38 : f32 to vector<8x32xf32>
    %129 = arith.subf %128, %122 : vector<8x32xf32>
    %130 = arith.mulf %129, %127 : vector<8x32xf32>
    %131 = arith.mulf %122, %107 : vector<8x32xf32>
    %132 = arith.addf %130, %131 : vector<8x32xf32>
    %c5 = arith.constant 5 : index
    %c0_39 = arith.constant 0 : index
    %c0_40 = arith.constant 0 : index
    %133 = vector.load %arg0[%c5, %c0_39, %c0_40] : memref<8x8x96xf32, #tpu.memory_space<vmem>>, vector<1x8x96xf32>
    %134 = vector.shape_cast %133 : vector<1x8x96xf32> to vector<8x96xf32>
    %cst_41 = arith.constant dense<0.000000e+00> : vector<8x96xf32>
    %135 = tpu.matmul %132, %0, %cst_41 {dimension_numbers = #tpu.dot_dimension_numbers<[1], [0], [0], [1], [0, 0, 1, 1], [], []>} : vector<8x32xf32>, vector<32x96xf32>, vector<8x96xf32> -> vector<8x96xf32>
    %136 = vector.broadcast %1 : vector<1x96xf32> to vector<8x96xf32>
    %137 = arith.addf %135, %136 : vector<8x96xf32>
    %138 = vector.extract_strided_slice %134 {offsets = [0, 0], sizes = [8, 64], strides = [1, 1]} : vector<8x96xf32> to vector<8x64xf32>
    %139 = vector.extract_strided_slice %137 {offsets = [0, 0], sizes = [8, 64], strides = [1, 1]} : vector<8x96xf32> to vector<8x64xf32>
    %140 = arith.addf %138, %139 : vector<8x64xf32>
    %141 = arith.negf %140 : vector<8x64xf32>
    %142 = math.exp %141 : vector<8x64xf32>
    %cst_42 = arith.constant 1.000000e+00 : f32
    %143 = vector.broadcast %cst_42 : f32 to vector<8x64xf32>
    %144 = arith.addf %143, %142 : vector<8x64xf32>
    %145 = arith.divf %143, %144 : vector<8x64xf32>
    %146 = vector.extract_strided_slice %145 {offsets = [0, 0], sizes = [8, 32], strides = [1, 1]} : vector<8x64xf32> to vector<8x32xf32>
    %147 = vector.extract_strided_slice %145 {offsets = [0, 32], sizes = [8, 32], strides = [1, 1]} : vector<8x64xf32> to vector<8x32xf32>
    %148 = vector.extract_strided_slice %134 {offsets = [0, 64], sizes = [8, 32], strides = [1, 1]} : vector<8x96xf32> to vector<8x32xf32>
    %149 = vector.extract_strided_slice %137 {offsets = [0, 64], sizes = [8, 32], strides = [1, 1]} : vector<8x96xf32> to vector<8x32xf32>
    %150 = arith.mulf %146, %149 : vector<8x32xf32>
    %151 = arith.addf %148, %150 : vector<8x32xf32>
    %152 = math.tanh %151 : vector<8x32xf32>
    %cst_43 = arith.constant 1.000000e+00 : f32
    %153 = vector.broadcast %cst_43 : f32 to vector<8x32xf32>
    %154 = arith.subf %153, %147 : vector<8x32xf32>
    %155 = arith.mulf %154, %152 : vector<8x32xf32>
    %156 = arith.mulf %147, %132 : vector<8x32xf32>
    %157 = arith.addf %155, %156 : vector<8x32xf32>
    %c6 = arith.constant 6 : index
    %c0_44 = arith.constant 0 : index
    %c0_45 = arith.constant 0 : index
    %158 = vector.load %arg0[%c6, %c0_44, %c0_45] : memref<8x8x96xf32, #tpu.memory_space<vmem>>, vector<1x8x96xf32>
    %159 = vector.shape_cast %158 : vector<1x8x96xf32> to vector<8x96xf32>
    %cst_46 = arith.constant dense<0.000000e+00> : vector<8x96xf32>
    %160 = tpu.matmul %157, %0, %cst_46 {dimension_numbers = #tpu.dot_dimension_numbers<[1], [0], [0], [1], [0, 0, 1, 1], [], []>} : vector<8x32xf32>, vector<32x96xf32>, vector<8x96xf32> -> vector<8x96xf32>
    %161 = vector.broadcast %1 : vector<1x96xf32> to vector<8x96xf32>
    %162 = arith.addf %160, %161 : vector<8x96xf32>
    %163 = vector.extract_strided_slice %159 {offsets = [0, 0], sizes = [8, 64], strides = [1, 1]} : vector<8x96xf32> to vector<8x64xf32>
    %164 = vector.extract_strided_slice %162 {offsets = [0, 0], sizes = [8, 64], strides = [1, 1]} : vector<8x96xf32> to vector<8x64xf32>
    %165 = arith.addf %163, %164 : vector<8x64xf32>
    %166 = arith.negf %165 : vector<8x64xf32>
    %167 = math.exp %166 : vector<8x64xf32>
    %cst_47 = arith.constant 1.000000e+00 : f32
    %168 = vector.broadcast %cst_47 : f32 to vector<8x64xf32>
    %169 = arith.addf %168, %167 : vector<8x64xf32>
    %170 = arith.divf %168, %169 : vector<8x64xf32>
    %171 = vector.extract_strided_slice %170 {offsets = [0, 0], sizes = [8, 32], strides = [1, 1]} : vector<8x64xf32> to vector<8x32xf32>
    %172 = vector.extract_strided_slice %170 {offsets = [0, 32], sizes = [8, 32], strides = [1, 1]} : vector<8x64xf32> to vector<8x32xf32>
    %173 = vector.extract_strided_slice %159 {offsets = [0, 64], sizes = [8, 32], strides = [1, 1]} : vector<8x96xf32> to vector<8x32xf32>
    %174 = vector.extract_strided_slice %162 {offsets = [0, 64], sizes = [8, 32], strides = [1, 1]} : vector<8x96xf32> to vector<8x32xf32>
    %175 = arith.mulf %171, %174 : vector<8x32xf32>
    %176 = arith.addf %173, %175 : vector<8x32xf32>
    %177 = math.tanh %176 : vector<8x32xf32>
    %cst_48 = arith.constant 1.000000e+00 : f32
    %178 = vector.broadcast %cst_48 : f32 to vector<8x32xf32>
    %179 = arith.subf %178, %172 : vector<8x32xf32>
    %180 = arith.mulf %179, %177 : vector<8x32xf32>
    %181 = arith.mulf %172, %157 : vector<8x32xf32>
    %182 = arith.addf %180, %181 : vector<8x32xf32>
    %c7 = arith.constant 7 : index
    %c0_49 = arith.constant 0 : index
    %c0_50 = arith.constant 0 : index
    %183 = vector.load %arg0[%c7, %c0_49, %c0_50] : memref<8x8x96xf32, #tpu.memory_space<vmem>>, vector<1x8x96xf32>
    %184 = vector.shape_cast %183 : vector<1x8x96xf32> to vector<8x96xf32>
    %cst_51 = arith.constant dense<0.000000e+00> : vector<8x96xf32>
    %185 = tpu.matmul %182, %0, %cst_51 {dimension_numbers = #tpu.dot_dimension_numbers<[1], [0], [0], [1], [0, 0, 1, 1], [], []>} : vector<8x32xf32>, vector<32x96xf32>, vector<8x96xf32> -> vector<8x96xf32>
    %186 = vector.broadcast %1 : vector<1x96xf32> to vector<8x96xf32>
    %187 = arith.addf %185, %186 : vector<8x96xf32>
    %188 = vector.extract_strided_slice %184 {offsets = [0, 0], sizes = [8, 64], strides = [1, 1]} : vector<8x96xf32> to vector<8x64xf32>
    %189 = vector.extract_strided_slice %187 {offsets = [0, 0], sizes = [8, 64], strides = [1, 1]} : vector<8x96xf32> to vector<8x64xf32>
    %190 = arith.addf %188, %189 : vector<8x64xf32>
    %191 = arith.negf %190 : vector<8x64xf32>
    %192 = math.exp %191 : vector<8x64xf32>
    %cst_52 = arith.constant 1.000000e+00 : f32
    %193 = vector.broadcast %cst_52 : f32 to vector<8x64xf32>
    %194 = arith.addf %193, %192 : vector<8x64xf32>
    %195 = arith.divf %193, %194 : vector<8x64xf32>
    %196 = vector.extract_strided_slice %195 {offsets = [0, 0], sizes = [8, 32], strides = [1, 1]} : vector<8x64xf32> to vector<8x32xf32>
    %197 = vector.extract_strided_slice %195 {offsets = [0, 32], sizes = [8, 32], strides = [1, 1]} : vector<8x64xf32> to vector<8x32xf32>
    %198 = vector.extract_strided_slice %184 {offsets = [0, 64], sizes = [8, 32], strides = [1, 1]} : vector<8x96xf32> to vector<8x32xf32>
    %199 = vector.extract_strided_slice %187 {offsets = [0, 64], sizes = [8, 32], strides = [1, 1]} : vector<8x96xf32> to vector<8x32xf32>
    %200 = arith.mulf %196, %199 : vector<8x32xf32>
    %201 = arith.addf %198, %200 : vector<8x32xf32>
    %202 = math.tanh %201 : vector<8x32xf32>
    %cst_53 = arith.constant 1.000000e+00 : f32
    %203 = vector.broadcast %cst_53 : f32 to vector<8x32xf32>
    %204 = arith.subf %203, %197 : vector<8x32xf32>
    %205 = arith.mulf %204, %202 : vector<8x32xf32>
    %206 = arith.mulf %197, %182 : vector<8x32xf32>
    %207 = arith.addf %205, %206 : vector<8x32xf32>
    %208 = tpu.iota {dimensions = array<i32: 1>} : vector<8x16xi32>
    %c1_i32 = arith.constant 1 : i32
    %209 = vector.broadcast %c1_i32 : i32 to vector<8x16xi32>
    %210 = arith.cmpi eq, %208, %209 : vector<8x16xi32>
    %211 = arith.extui %210 : vector<8x16xi1> to vector<8x16xi32>
    %212 = arith.sitofp %211 : vector<8x16xi32> to vector<8x16xf32>
    %cst_54 = arith.constant dense<0.000000e+00> : vector<8x96xf32>
    %213 = tpu.matmul %212, %4, %cst_54 {dimension_numbers = #tpu.dot_dimension_numbers<[1], [0], [0], [1], [0, 0, 1, 1], [], []>} : vector<8x16xf32>, vector<16x96xf32>, vector<8x96xf32> -> vector<8x96xf32>
    %cst_55 = arith.constant dense<0.000000e+00> : vector<8x96xf32>
    %214 = tpu.matmul %207, %2, %cst_55 {dimension_numbers = #tpu.dot_dimension_numbers<[1], [0], [0], [1], [0, 0, 1, 1], [], []>} : vector<8x32xf32>, vector<32x96xf32>, vector<8x96xf32> -> vector<8x96xf32>
    %215 = vector.broadcast %3 : vector<1x96xf32> to vector<8x96xf32>
    %216 = arith.addf %214, %215 : vector<8x96xf32>
    %217 = vector.extract_strided_slice %213 {offsets = [0, 0], sizes = [8, 64], strides = [1, 1]} : vector<8x96xf32> to vector<8x64xf32>
    %218 = vector.extract_strided_slice %216 {offsets = [0, 0], sizes = [8, 64], strides = [1, 1]} : vector<8x96xf32> to vector<8x64xf32>
    %219 = arith.addf %217, %218 : vector<8x64xf32>
    %220 = arith.negf %219 : vector<8x64xf32>
    %221 = math.exp %220 : vector<8x64xf32>
    %cst_56 = arith.constant 1.000000e+00 : f32
    %222 = vector.broadcast %cst_56 : f32 to vector<8x64xf32>
    %223 = arith.addf %222, %221 : vector<8x64xf32>
    %224 = arith.divf %222, %223 : vector<8x64xf32>
    %225 = vector.extract_strided_slice %224 {offsets = [0, 0], sizes = [8, 32], strides = [1, 1]} : vector<8x64xf32> to vector<8x32xf32>
    %226 = vector.extract_strided_slice %224 {offsets = [0, 32], sizes = [8, 32], strides = [1, 1]} : vector<8x64xf32> to vector<8x32xf32>
    %227 = vector.extract_strided_slice %213 {offsets = [0, 64], sizes = [8, 32], strides = [1, 1]} : vector<8x96xf32> to vector<8x32xf32>
    %228 = vector.extract_strided_slice %216 {offsets = [0, 64], sizes = [8, 32], strides = [1, 1]} : vector<8x96xf32> to vector<8x32xf32>
    %229 = arith.mulf %225, %228 : vector<8x32xf32>
    %230 = arith.addf %227, %229 : vector<8x32xf32>
    %231 = math.tanh %230 : vector<8x32xf32>
    %cst_57 = arith.constant 1.000000e+00 : f32
    %232 = vector.broadcast %cst_57 : f32 to vector<8x32xf32>
    %233 = arith.subf %232, %226 : vector<8x32xf32>
    %234 = arith.mulf %233, %231 : vector<8x32xf32>
    %235 = arith.mulf %226, %207 : vector<8x32xf32>
    %236 = arith.addf %234, %235 : vector<8x32xf32>
    %cst_58 = arith.constant dense<0.000000e+00> : vector<8x16xf32>
    %237 = tpu.matmul %236, %5, %cst_58 {dimension_numbers = #tpu.dot_dimension_numbers<[1], [0], [0], [1], [0, 0, 1, 1], [], []>} : vector<8x32xf32>, vector<32x16xf32>, vector<8x16xf32> -> vector<8x16xf32>
    %238 = vector.broadcast %6 : vector<1x16xf32> to vector<8x16xf32>
    %239 = arith.addf %237, %238 : vector<8x16xf32>
    %cst_59 = arith.constant dense<0xFF800000> : vector<8xf32>
    %240 = vector.multi_reduction <maximumf>, %239, %cst_59 [1] : vector<8x16xf32> to vector<8xf32>
    %241 = vector.shape_cast %240 : vector<8xf32> to vector<8x1xf32>
    %242 = vector.broadcast %241 : vector<8x1xf32> to vector<8x16xf32>
    %243 = arith.subf %239, %242 : vector<8x16xf32>
    %244 = math.exp %243 : vector<8x16xf32>
    %cst_60 = arith.constant dense<0.000000e+00> : vector<8xf32>
    %245 = vector.multi_reduction <add>, %244, %cst_60 [1] : vector<8x16xf32> to vector<8xf32>
    %246 = vector.shape_cast %245 : vector<8xf32> to vector<8x1xf32>
    %247 = math.log %246 : vector<8x1xf32>
    %248 = arith.addf %241, %247 : vector<8x1xf32>
    %249 = vector.broadcast %248 : vector<8x1xf32> to vector<8x16xf32>
    %250 = arith.subf %239, %249 : vector<8x16xf32>
    %251 = vector.broadcast %241 : vector<8x1xf32> to vector<8x16xf32>
    %252 = arith.cmpf oeq, %239, %251 : vector<8x16xf32>
    %c16_i32 = arith.constant 16 : i32
    %253 = vector.broadcast %c16_i32 : i32 to vector<8x16xi32>
    %254 = arith.select %252, %208, %253 : vector<8x16xi1>, vector<8x16xi32>
    %cst_61 = arith.constant dense<2147483647> : vector<8xi32>
    %255 = vector.multi_reduction <minsi>, %254, %cst_61 [1] : vector<8x16xi32> to vector<8xi32>
    %256 = vector.shape_cast %255 : vector<8xi32> to vector<8x1xi32>
    %257 = vector.broadcast %256 : vector<8x1xi32> to vector<8x16xi32>
    %258 = arith.cmpi eq, %208, %257 : vector<8x16xi32>
    %259 = arith.extui %258 : vector<8x16xi1> to vector<8x16xi32>
    %260 = arith.sitofp %259 : vector<8x16xi32> to vector<8x16xf32>
    %cst_62 = arith.constant dense<0.000000e+00> : vector<8x96xf32>
    %261 = tpu.matmul %260, %4, %cst_62 {dimension_numbers = #tpu.dot_dimension_numbers<[1], [0], [0], [1], [0, 0, 1, 1], [], []>} : vector<8x16xf32>, vector<16x96xf32>, vector<8x96xf32> -> vector<8x96xf32>
    %cst_63 = arith.constant dense<0.000000e+00> : vector<8x96xf32>
    %262 = tpu.matmul %236, %2, %cst_63 {dimension_numbers = #tpu.dot_dimension_numbers<[1], [0], [0], [1], [0, 0, 1, 1], [], []>} : vector<8x32xf32>, vector<32x96xf32>, vector<8x96xf32> -> vector<8x96xf32>
    %263 = vector.broadcast %3 : vector<1x96xf32> to vector<8x96xf32>
    %264 = arith.addf %262, %263 : vector<8x96xf32>
    %265 = vector.extract_strided_slice %261 {offsets = [0, 0], sizes = [8, 64], strides = [1, 1]} : vector<8x96xf32> to vector<8x64xf32>
    %266 = vector.extract_strided_slice %264 {offsets = [0, 0], sizes = [8, 64], strides = [1, 1]} : vector<8x96xf32> to vector<8x64xf32>
    %267 = arith.addf %265, %266 : vector<8x64xf32>
    %268 = arith.negf %267 : vector<8x64xf32>
    %269 = math.exp %268 : vector<8x64xf32>
    %cst_64 = arith.constant 1.000000e+00 : f32
    %270 = vector.broadcast %cst_64 : f32 to vector<8x64xf32>
    %271 = arith.addf %270, %269 : vector<8x64xf32>
    %272 = arith.divf %270, %271 : vector<8x64xf32>
    %273 = vector.extract_strided_slice %272 {offsets = [0, 0], sizes = [8, 32], strides = [1, 1]} : vector<8x64xf32> to vector<8x32xf32>
    %274 = vector.extract_strided_slice %272 {offsets = [0, 32], sizes = [8, 32], strides = [1, 1]} : vector<8x64xf32> to vector<8x32xf32>
    %275 = vector.extract_strided_slice %261 {offsets = [0, 64], sizes = [8, 32], strides = [1, 1]} : vector<8x96xf32> to vector<8x32xf32>
    %276 = vector.extract_strided_slice %264 {offsets = [0, 64], sizes = [8, 32], strides = [1, 1]} : vector<8x96xf32> to vector<8x32xf32>
    %277 = arith.mulf %273, %276 : vector<8x32xf32>
    %278 = arith.addf %275, %277 : vector<8x32xf32>
    %279 = math.tanh %278 : vector<8x32xf32>
    %cst_65 = arith.constant 1.000000e+00 : f32
    %280 = vector.broadcast %cst_65 : f32 to vector<8x32xf32>
    %281 = arith.subf %280, %274 : vector<8x32xf32>
    %282 = arith.mulf %281, %279 : vector<8x32xf32>
    %283 = arith.mulf %274, %236 : vector<8x32xf32>
    %284 = arith.addf %282, %283 : vector<8x32xf32>
    %cst_66 = arith.constant dense<0.000000e+00> : vector<8x16xf32>
    %285 = tpu.matmul %284, %5, %cst_66 {dimension_numbers = #tpu.dot_dimension_numbers<[1], [0], [0], [1], [0, 0, 1, 1], [], []>} : vector<8x32xf32>, vector<32x16xf32>, vector<8x16xf32> -> vector<8x16xf32>
    %286 = vector.broadcast %6 : vector<1x16xf32> to vector<8x16xf32>
    %287 = arith.addf %285, %286 : vector<8x16xf32>
    %cst_67 = arith.constant dense<0xFF800000> : vector<8xf32>
    %288 = vector.multi_reduction <maximumf>, %287, %cst_67 [1] : vector<8x16xf32> to vector<8xf32>
    %289 = vector.shape_cast %288 : vector<8xf32> to vector<8x1xf32>
    %290 = vector.broadcast %289 : vector<8x1xf32> to vector<8x16xf32>
    %291 = arith.subf %287, %290 : vector<8x16xf32>
    %292 = math.exp %291 : vector<8x16xf32>
    %cst_68 = arith.constant dense<0.000000e+00> : vector<8xf32>
    %293 = vector.multi_reduction <add>, %292, %cst_68 [1] : vector<8x16xf32> to vector<8xf32>
    %294 = vector.shape_cast %293 : vector<8xf32> to vector<8x1xf32>
    %295 = math.log %294 : vector<8x1xf32>
    %296 = arith.addf %289, %295 : vector<8x1xf32>
    %297 = vector.broadcast %296 : vector<8x1xf32> to vector<8x16xf32>
    %298 = arith.subf %287, %297 : vector<8x16xf32>
    %299 = vector.broadcast %289 : vector<8x1xf32> to vector<8x16xf32>
    %300 = arith.cmpf oeq, %287, %299 : vector<8x16xf32>
    %c16_i32_69 = arith.constant 16 : i32
    %301 = vector.broadcast %c16_i32_69 : i32 to vector<8x16xi32>
    %302 = arith.select %300, %208, %301 : vector<8x16xi1>, vector<8x16xi32>
    %cst_70 = arith.constant dense<2147483647> : vector<8xi32>
    %303 = vector.multi_reduction <minsi>, %302, %cst_70 [1] : vector<8x16xi32> to vector<8xi32>
    %304 = vector.shape_cast %303 : vector<8xi32> to vector<8x1xi32>
    %305 = vector.broadcast %304 : vector<8x1xi32> to vector<8x16xi32>
    %306 = arith.cmpi eq, %208, %305 : vector<8x16xi32>
    %307 = arith.extui %306 : vector<8x16xi1> to vector<8x16xi32>
    %308 = arith.sitofp %307 : vector<8x16xi32> to vector<8x16xf32>
    %cst_71 = arith.constant dense<0.000000e+00> : vector<8x96xf32>
    %309 = tpu.matmul %308, %4, %cst_71 {dimension_numbers = #tpu.dot_dimension_numbers<[1], [0], [0], [1], [0, 0, 1, 1], [], []>} : vector<8x16xf32>, vector<16x96xf32>, vector<8x96xf32> -> vector<8x96xf32>
    %cst_72 = arith.constant dense<0.000000e+00> : vector<8x96xf32>
    %310 = tpu.matmul %284, %2, %cst_72 {dimension_numbers = #tpu.dot_dimension_numbers<[1], [0], [0], [1], [0, 0, 1, 1], [], []>} : vector<8x32xf32>, vector<32x96xf32>, vector<8x96xf32> -> vector<8x96xf32>
    %311 = vector.broadcast %3 : vector<1x96xf32> to vector<8x96xf32>
    %312 = arith.addf %310, %311 : vector<8x96xf32>
    %313 = vector.extract_strided_slice %309 {offsets = [0, 0], sizes = [8, 64], strides = [1, 1]} : vector<8x96xf32> to vector<8x64xf32>
    %314 = vector.extract_strided_slice %312 {offsets = [0, 0], sizes = [8, 64], strides = [1, 1]} : vector<8x96xf32> to vector<8x64xf32>
    %315 = arith.addf %313, %314 : vector<8x64xf32>
    %316 = arith.negf %315 : vector<8x64xf32>
    %317 = math.exp %316 : vector<8x64xf32>
    %cst_73 = arith.constant 1.000000e+00 : f32
    %318 = vector.broadcast %cst_73 : f32 to vector<8x64xf32>
    %319 = arith.addf %318, %317 : vector<8x64xf32>
    %320 = arith.divf %318, %319 : vector<8x64xf32>
    %321 = vector.extract_strided_slice %320 {offsets = [0, 0], sizes = [8, 32], strides = [1, 1]} : vector<8x64xf32> to vector<8x32xf32>
    %322 = vector.extract_strided_slice %320 {offsets = [0, 32], sizes = [8, 32], strides = [1, 1]} : vector<8x64xf32> to vector<8x32xf32>
    %323 = vector.extract_strided_slice %309 {offsets = [0, 64], sizes = [8, 32], strides = [1, 1]} : vector<8x96xf32> to vector<8x32xf32>
    %324 = vector.extract_strided_slice %312 {offsets = [0, 64], sizes = [8, 32], strides = [1, 1]} : vector<8x96xf32> to vector<8x32xf32>
    %325 = arith.mulf %321, %324 : vector<8x32xf32>
    %326 = arith.addf %323, %325 : vector<8x32xf32>
    %327 = math.tanh %326 : vector<8x32xf32>
    %cst_74 = arith.constant 1.000000e+00 : f32
    %328 = vector.broadcast %cst_74 : f32 to vector<8x32xf32>
    %329 = arith.subf %328, %322 : vector<8x32xf32>
    %330 = arith.mulf %329, %327 : vector<8x32xf32>
    %331 = arith.mulf %322, %284 : vector<8x32xf32>
    %332 = arith.addf %330, %331 : vector<8x32xf32>
    %cst_75 = arith.constant dense<0.000000e+00> : vector<8x16xf32>
    %333 = tpu.matmul %332, %5, %cst_75 {dimension_numbers = #tpu.dot_dimension_numbers<[1], [0], [0], [1], [0, 0, 1, 1], [], []>} : vector<8x32xf32>, vector<32x16xf32>, vector<8x16xf32> -> vector<8x16xf32>
    %334 = vector.broadcast %6 : vector<1x16xf32> to vector<8x16xf32>
    %335 = arith.addf %333, %334 : vector<8x16xf32>
    %cst_76 = arith.constant dense<0xFF800000> : vector<8xf32>
    %336 = vector.multi_reduction <maximumf>, %335, %cst_76 [1] : vector<8x16xf32> to vector<8xf32>
    %337 = vector.shape_cast %336 : vector<8xf32> to vector<8x1xf32>
    %338 = vector.broadcast %337 : vector<8x1xf32> to vector<8x16xf32>
    %339 = arith.subf %335, %338 : vector<8x16xf32>
    %340 = math.exp %339 : vector<8x16xf32>
    %cst_77 = arith.constant dense<0.000000e+00> : vector<8xf32>
    %341 = vector.multi_reduction <add>, %340, %cst_77 [1] : vector<8x16xf32> to vector<8xf32>
    %342 = vector.shape_cast %341 : vector<8xf32> to vector<8x1xf32>
    %343 = math.log %342 : vector<8x1xf32>
    %344 = arith.addf %337, %343 : vector<8x1xf32>
    %345 = vector.broadcast %344 : vector<8x1xf32> to vector<8x16xf32>
    %346 = arith.subf %335, %345 : vector<8x16xf32>
    %347 = vector.broadcast %337 : vector<8x1xf32> to vector<8x16xf32>
    %348 = arith.cmpf oeq, %335, %347 : vector<8x16xf32>
    %c16_i32_78 = arith.constant 16 : i32
    %349 = vector.broadcast %c16_i32_78 : i32 to vector<8x16xi32>
    %350 = arith.select %348, %208, %349 : vector<8x16xi1>, vector<8x16xi32>
    %cst_79 = arith.constant dense<2147483647> : vector<8xi32>
    %351 = vector.multi_reduction <minsi>, %350, %cst_79 [1] : vector<8x16xi32> to vector<8xi32>
    %352 = vector.shape_cast %351 : vector<8xi32> to vector<8x1xi32>
    %353 = vector.broadcast %352 : vector<8x1xi32> to vector<8x16xi32>
    %354 = arith.cmpi eq, %208, %353 : vector<8x16xi32>
    %355 = arith.extui %354 : vector<8x16xi1> to vector<8x16xi32>
    %356 = arith.sitofp %355 : vector<8x16xi32> to vector<8x16xf32>
    %cst_80 = arith.constant dense<0.000000e+00> : vector<8x96xf32>
    %357 = tpu.matmul %356, %4, %cst_80 {dimension_numbers = #tpu.dot_dimension_numbers<[1], [0], [0], [1], [0, 0, 1, 1], [], []>} : vector<8x16xf32>, vector<16x96xf32>, vector<8x96xf32> -> vector<8x96xf32>
    %cst_81 = arith.constant dense<0.000000e+00> : vector<8x96xf32>
    %358 = tpu.matmul %332, %2, %cst_81 {dimension_numbers = #tpu.dot_dimension_numbers<[1], [0], [0], [1], [0, 0, 1, 1], [], []>} : vector<8x32xf32>, vector<32x96xf32>, vector<8x96xf32> -> vector<8x96xf32>
    %359 = vector.broadcast %3 : vector<1x96xf32> to vector<8x96xf32>
    %360 = arith.addf %358, %359 : vector<8x96xf32>
    %361 = vector.extract_strided_slice %357 {offsets = [0, 0], sizes = [8, 64], strides = [1, 1]} : vector<8x96xf32> to vector<8x64xf32>
    %362 = vector.extract_strided_slice %360 {offsets = [0, 0], sizes = [8, 64], strides = [1, 1]} : vector<8x96xf32> to vector<8x64xf32>
    %363 = arith.addf %361, %362 : vector<8x64xf32>
    %364 = arith.negf %363 : vector<8x64xf32>
    %365 = math.exp %364 : vector<8x64xf32>
    %cst_82 = arith.constant 1.000000e+00 : f32
    %366 = vector.broadcast %cst_82 : f32 to vector<8x64xf32>
    %367 = arith.addf %366, %365 : vector<8x64xf32>
    %368 = arith.divf %366, %367 : vector<8x64xf32>
    %369 = vector.extract_strided_slice %368 {offsets = [0, 0], sizes = [8, 32], strides = [1, 1]} : vector<8x64xf32> to vector<8x32xf32>
    %370 = vector.extract_strided_slice %368 {offsets = [0, 32], sizes = [8, 32], strides = [1, 1]} : vector<8x64xf32> to vector<8x32xf32>
    %371 = vector.extract_strided_slice %357 {offsets = [0, 64], sizes = [8, 32], strides = [1, 1]} : vector<8x96xf32> to vector<8x32xf32>
    %372 = vector.extract_strided_slice %360 {offsets = [0, 64], sizes = [8, 32], strides = [1, 1]} : vector<8x96xf32> to vector<8x32xf32>
    %373 = arith.mulf %369, %372 : vector<8x32xf32>
    %374 = arith.addf %371, %373 : vector<8x32xf32>
    %375 = math.tanh %374 : vector<8x32xf32>
    %cst_83 = arith.constant 1.000000e+00 : f32
    %376 = vector.broadcast %cst_83 : f32 to vector<8x32xf32>
    %377 = arith.subf %376, %370 : vector<8x32xf32>
    %378 = arith.mulf %377, %375 : vector<8x32xf32>
    %379 = arith.mulf %370, %332 : vector<8x32xf32>
    %380 = arith.addf %378, %379 : vector<8x32xf32>
    %cst_84 = arith.constant dense<0.000000e+00> : vector<8x16xf32>
    %381 = tpu.matmul %380, %5, %cst_84 {dimension_numbers = #tpu.dot_dimension_numbers<[1], [0], [0], [1], [0, 0, 1, 1], [], []>} : vector<8x32xf32>, vector<32x16xf32>, vector<8x16xf32> -> vector<8x16xf32>
    %382 = vector.broadcast %6 : vector<1x16xf32> to vector<8x16xf32>
    %383 = arith.addf %381, %382 : vector<8x16xf32>
    %cst_85 = arith.constant dense<0xFF800000> : vector<8xf32>
    %384 = vector.multi_reduction <maximumf>, %383, %cst_85 [1] : vector<8x16xf32> to vector<8xf32>
    %385 = vector.shape_cast %384 : vector<8xf32> to vector<8x1xf32>
    %386 = vector.broadcast %385 : vector<8x1xf32> to vector<8x16xf32>
    %387 = arith.subf %383, %386 : vector<8x16xf32>
    %388 = math.exp %387 : vector<8x16xf32>
    %cst_86 = arith.constant dense<0.000000e+00> : vector<8xf32>
    %389 = vector.multi_reduction <add>, %388, %cst_86 [1] : vector<8x16xf32> to vector<8xf32>
    %390 = vector.shape_cast %389 : vector<8xf32> to vector<8x1xf32>
    %391 = math.log %390 : vector<8x1xf32>
    %392 = arith.addf %385, %391 : vector<8x1xf32>
    %393 = vector.broadcast %392 : vector<8x1xf32> to vector<8x16xf32>
    %394 = arith.subf %383, %393 : vector<8x16xf32>
    %395 = vector.broadcast %385 : vector<8x1xf32> to vector<8x16xf32>
    %396 = arith.cmpf oeq, %383, %395 : vector<8x16xf32>
    %c16_i32_87 = arith.constant 16 : i32
    %397 = vector.broadcast %c16_i32_87 : i32 to vector<8x16xi32>
    %398 = arith.select %396, %208, %397 : vector<8x16xi1>, vector<8x16xi32>
    %cst_88 = arith.constant dense<2147483647> : vector<8xi32>
    %399 = vector.multi_reduction <minsi>, %398, %cst_88 [1] : vector<8x16xi32> to vector<8xi32>
    %400 = vector.shape_cast %399 : vector<8xi32> to vector<8x1xi32>
    %401 = vector.broadcast %400 : vector<8x1xi32> to vector<8x16xi32>
    %402 = arith.cmpi eq, %208, %401 : vector<8x16xi32>
    %403 = arith.extui %402 : vector<8x16xi1> to vector<8x16xi32>
    %404 = arith.sitofp %403 : vector<8x16xi32> to vector<8x16xf32>
    %cst_89 = arith.constant dense<0.000000e+00> : vector<8x96xf32>
    %405 = tpu.matmul %404, %4, %cst_89 {dimension_numbers = #tpu.dot_dimension_numbers<[1], [0], [0], [1], [0, 0, 1, 1], [], []>} : vector<8x16xf32>, vector<16x96xf32>, vector<8x96xf32> -> vector<8x96xf32>
    %cst_90 = arith.constant dense<0.000000e+00> : vector<8x96xf32>
    %406 = tpu.matmul %380, %2, %cst_90 {dimension_numbers = #tpu.dot_dimension_numbers<[1], [0], [0], [1], [0, 0, 1, 1], [], []>} : vector<8x32xf32>, vector<32x96xf32>, vector<8x96xf32> -> vector<8x96xf32>
    %407 = vector.broadcast %3 : vector<1x96xf32> to vector<8x96xf32>
    %408 = arith.addf %406, %407 : vector<8x96xf32>
    %409 = vector.extract_strided_slice %405 {offsets = [0, 0], sizes = [8, 64], strides = [1, 1]} : vector<8x96xf32> to vector<8x64xf32>
    %410 = vector.extract_strided_slice %408 {offsets = [0, 0], sizes = [8, 64], strides = [1, 1]} : vector<8x96xf32> to vector<8x64xf32>
    %411 = arith.addf %409, %410 : vector<8x64xf32>
    %412 = arith.negf %411 : vector<8x64xf32>
    %413 = math.exp %412 : vector<8x64xf32>
    %cst_91 = arith.constant 1.000000e+00 : f32
    %414 = vector.broadcast %cst_91 : f32 to vector<8x64xf32>
    %415 = arith.addf %414, %413 : vector<8x64xf32>
    %416 = arith.divf %414, %415 : vector<8x64xf32>
    %417 = vector.extract_strided_slice %416 {offsets = [0, 0], sizes = [8, 32], strides = [1, 1]} : vector<8x64xf32> to vector<8x32xf32>
    %418 = vector.extract_strided_slice %416 {offsets = [0, 32], sizes = [8, 32], strides = [1, 1]} : vector<8x64xf32> to vector<8x32xf32>
    %419 = vector.extract_strided_slice %405 {offsets = [0, 64], sizes = [8, 32], strides = [1, 1]} : vector<8x96xf32> to vector<8x32xf32>
    %420 = vector.extract_strided_slice %408 {offsets = [0, 64], sizes = [8, 32], strides = [1, 1]} : vector<8x96xf32> to vector<8x32xf32>
    %421 = arith.mulf %417, %420 : vector<8x32xf32>
    %422 = arith.addf %419, %421 : vector<8x32xf32>
    %423 = math.tanh %422 : vector<8x32xf32>
    %cst_92 = arith.constant 1.000000e+00 : f32
    %424 = vector.broadcast %cst_92 : f32 to vector<8x32xf32>
    %425 = arith.subf %424, %418 : vector<8x32xf32>
    %426 = arith.mulf %425, %423 : vector<8x32xf32>
    %427 = arith.mulf %418, %380 : vector<8x32xf32>
    %428 = arith.addf %426, %427 : vector<8x32xf32>
    %cst_93 = arith.constant dense<0.000000e+00> : vector<8x16xf32>
    %429 = tpu.matmul %428, %5, %cst_93 {dimension_numbers = #tpu.dot_dimension_numbers<[1], [0], [0], [1], [0, 0, 1, 1], [], []>} : vector<8x32xf32>, vector<32x16xf32>, vector<8x16xf32> -> vector<8x16xf32>
    %430 = vector.broadcast %6 : vector<1x16xf32> to vector<8x16xf32>
    %431 = arith.addf %429, %430 : vector<8x16xf32>
    %cst_94 = arith.constant dense<0xFF800000> : vector<8xf32>
    %432 = vector.multi_reduction <maximumf>, %431, %cst_94 [1] : vector<8x16xf32> to vector<8xf32>
    %433 = vector.shape_cast %432 : vector<8xf32> to vector<8x1xf32>
    %434 = vector.broadcast %433 : vector<8x1xf32> to vector<8x16xf32>
    %435 = arith.subf %431, %434 : vector<8x16xf32>
    %436 = math.exp %435 : vector<8x16xf32>
    %cst_95 = arith.constant dense<0.000000e+00> : vector<8xf32>
    %437 = vector.multi_reduction <add>, %436, %cst_95 [1] : vector<8x16xf32> to vector<8xf32>
    %438 = vector.shape_cast %437 : vector<8xf32> to vector<8x1xf32>
    %439 = math.log %438 : vector<8x1xf32>
    %440 = arith.addf %433, %439 : vector<8x1xf32>
    %441 = vector.broadcast %440 : vector<8x1xf32> to vector<8x16xf32>
    %442 = arith.subf %431, %441 : vector<8x16xf32>
    %443 = vector.broadcast %433 : vector<8x1xf32> to vector<8x16xf32>
    %444 = arith.cmpf oeq, %431, %443 : vector<8x16xf32>
    %c16_i32_96 = arith.constant 16 : i32
    %445 = vector.broadcast %c16_i32_96 : i32 to vector<8x16xi32>
    %446 = arith.select %444, %208, %445 : vector<8x16xi1>, vector<8x16xi32>
    %cst_97 = arith.constant dense<2147483647> : vector<8xi32>
    %447 = vector.multi_reduction <minsi>, %446, %cst_97 [1] : vector<8x16xi32> to vector<8xi32>
    %448 = vector.shape_cast %447 : vector<8xi32> to vector<8x1xi32>
    %449 = vector.broadcast %448 : vector<8x1xi32> to vector<8x16xi32>
    %450 = arith.cmpi eq, %208, %449 : vector<8x16xi32>
    %451 = arith.extui %450 : vector<8x16xi1> to vector<8x16xi32>
    %452 = arith.sitofp %451 : vector<8x16xi32> to vector<8x16xf32>
    %cst_98 = arith.constant dense<0.000000e+00> : vector<8x96xf32>
    %453 = tpu.matmul %452, %4, %cst_98 {dimension_numbers = #tpu.dot_dimension_numbers<[1], [0], [0], [1], [0, 0, 1, 1], [], []>} : vector<8x16xf32>, vector<16x96xf32>, vector<8x96xf32> -> vector<8x96xf32>
    %cst_99 = arith.constant dense<0.000000e+00> : vector<8x96xf32>
    %454 = tpu.matmul %428, %2, %cst_99 {dimension_numbers = #tpu.dot_dimension_numbers<[1], [0], [0], [1], [0, 0, 1, 1], [], []>} : vector<8x32xf32>, vector<32x96xf32>, vector<8x96xf32> -> vector<8x96xf32>
    %455 = vector.broadcast %3 : vector<1x96xf32> to vector<8x96xf32>
    %456 = arith.addf %454, %455 : vector<8x96xf32>
    %457 = vector.extract_strided_slice %453 {offsets = [0, 0], sizes = [8, 64], strides = [1, 1]} : vector<8x96xf32> to vector<8x64xf32>
    %458 = vector.extract_strided_slice %456 {offsets = [0, 0], sizes = [8, 64], strides = [1, 1]} : vector<8x96xf32> to vector<8x64xf32>
    %459 = arith.addf %457, %458 : vector<8x64xf32>
    %460 = arith.negf %459 : vector<8x64xf32>
    %461 = math.exp %460 : vector<8x64xf32>
    %cst_100 = arith.constant 1.000000e+00 : f32
    %462 = vector.broadcast %cst_100 : f32 to vector<8x64xf32>
    %463 = arith.addf %462, %461 : vector<8x64xf32>
    %464 = arith.divf %462, %463 : vector<8x64xf32>
    %465 = vector.extract_strided_slice %464 {offsets = [0, 0], sizes = [8, 32], strides = [1, 1]} : vector<8x64xf32> to vector<8x32xf32>
    %466 = vector.extract_strided_slice %464 {offsets = [0, 32], sizes = [8, 32], strides = [1, 1]} : vector<8x64xf32> to vector<8x32xf32>
    %467 = vector.extract_strided_slice %453 {offsets = [0, 64], sizes = [8, 32], strides = [1, 1]} : vector<8x96xf32> to vector<8x32xf32>
    %468 = vector.extract_strided_slice %456 {offsets = [0, 64], sizes = [8, 32], strides = [1, 1]} : vector<8x96xf32> to vector<8x32xf32>
    %469 = arith.mulf %465, %468 : vector<8x32xf32>
    %470 = arith.addf %467, %469 : vector<8x32xf32>
    %471 = math.tanh %470 : vector<8x32xf32>
    %cst_101 = arith.constant 1.000000e+00 : f32
    %472 = vector.broadcast %cst_101 : f32 to vector<8x32xf32>
    %473 = arith.subf %472, %466 : vector<8x32xf32>
    %474 = arith.mulf %473, %471 : vector<8x32xf32>
    %475 = arith.mulf %466, %428 : vector<8x32xf32>
    %476 = arith.addf %474, %475 : vector<8x32xf32>
    %cst_102 = arith.constant dense<0.000000e+00> : vector<8x16xf32>
    %477 = tpu.matmul %476, %5, %cst_102 {dimension_numbers = #tpu.dot_dimension_numbers<[1], [0], [0], [1], [0, 0, 1, 1], [], []>} : vector<8x32xf32>, vector<32x16xf32>, vector<8x16xf32> -> vector<8x16xf32>
    %478 = vector.broadcast %6 : vector<1x16xf32> to vector<8x16xf32>
    %479 = arith.addf %477, %478 : vector<8x16xf32>
    %cst_103 = arith.constant dense<0xFF800000> : vector<8xf32>
    %480 = vector.multi_reduction <maximumf>, %479, %cst_103 [1] : vector<8x16xf32> to vector<8xf32>
    %481 = vector.shape_cast %480 : vector<8xf32> to vector<8x1xf32>
    %482 = vector.broadcast %481 : vector<8x1xf32> to vector<8x16xf32>
    %483 = arith.subf %479, %482 : vector<8x16xf32>
    %484 = math.exp %483 : vector<8x16xf32>
    %cst_104 = arith.constant dense<0.000000e+00> : vector<8xf32>
    %485 = vector.multi_reduction <add>, %484, %cst_104 [1] : vector<8x16xf32> to vector<8xf32>
    %486 = vector.shape_cast %485 : vector<8xf32> to vector<8x1xf32>
    %487 = math.log %486 : vector<8x1xf32>
    %488 = arith.addf %481, %487 : vector<8x1xf32>
    %489 = vector.broadcast %488 : vector<8x1xf32> to vector<8x16xf32>
    %490 = arith.subf %479, %489 : vector<8x16xf32>
    %491 = vector.broadcast %481 : vector<8x1xf32> to vector<8x16xf32>
    %492 = arith.cmpf oeq, %479, %491 : vector<8x16xf32>
    %c16_i32_105 = arith.constant 16 : i32
    %493 = vector.broadcast %c16_i32_105 : i32 to vector<8x16xi32>
    %494 = arith.select %492, %208, %493 : vector<8x16xi1>, vector<8x16xi32>
    %cst_106 = arith.constant dense<2147483647> : vector<8xi32>
    %495 = vector.multi_reduction <minsi>, %494, %cst_106 [1] : vector<8x16xi32> to vector<8xi32>
    %496 = vector.shape_cast %495 : vector<8xi32> to vector<8x1xi32>
    %497 = vector.broadcast %496 : vector<8x1xi32> to vector<8x16xi32>
    %498 = arith.cmpi eq, %208, %497 : vector<8x16xi32>
    %499 = arith.extui %498 : vector<8x16xi1> to vector<8x16xi32>
    %500 = arith.sitofp %499 : vector<8x16xi32> to vector<8x16xf32>
    %cst_107 = arith.constant dense<0.000000e+00> : vector<8x96xf32>
    %501 = tpu.matmul %500, %4, %cst_107 {dimension_numbers = #tpu.dot_dimension_numbers<[1], [0], [0], [1], [0, 0, 1, 1], [], []>} : vector<8x16xf32>, vector<16x96xf32>, vector<8x96xf32> -> vector<8x96xf32>
    %cst_108 = arith.constant dense<0.000000e+00> : vector<8x96xf32>
    %502 = tpu.matmul %476, %2, %cst_108 {dimension_numbers = #tpu.dot_dimension_numbers<[1], [0], [0], [1], [0, 0, 1, 1], [], []>} : vector<8x32xf32>, vector<32x96xf32>, vector<8x96xf32> -> vector<8x96xf32>
    %503 = vector.broadcast %3 : vector<1x96xf32> to vector<8x96xf32>
    %504 = arith.addf %502, %503 : vector<8x96xf32>
    %505 = vector.extract_strided_slice %501 {offsets = [0, 0], sizes = [8, 64], strides = [1, 1]} : vector<8x96xf32> to vector<8x64xf32>
    %506 = vector.extract_strided_slice %504 {offsets = [0, 0], sizes = [8, 64], strides = [1, 1]} : vector<8x96xf32> to vector<8x64xf32>
    %507 = arith.addf %505, %506 : vector<8x64xf32>
    %508 = arith.negf %507 : vector<8x64xf32>
    %509 = math.exp %508 : vector<8x64xf32>
    %cst_109 = arith.constant 1.000000e+00 : f32
    %510 = vector.broadcast %cst_109 : f32 to vector<8x64xf32>
    %511 = arith.addf %510, %509 : vector<8x64xf32>
    %512 = arith.divf %510, %511 : vector<8x64xf32>
    %513 = vector.extract_strided_slice %512 {offsets = [0, 0], sizes = [8, 32], strides = [1, 1]} : vector<8x64xf32> to vector<8x32xf32>
    %514 = vector.extract_strided_slice %512 {offsets = [0, 32], sizes = [8, 32], strides = [1, 1]} : vector<8x64xf32> to vector<8x32xf32>
    %515 = vector.extract_strided_slice %501 {offsets = [0, 64], sizes = [8, 32], strides = [1, 1]} : vector<8x96xf32> to vector<8x32xf32>
    %516 = vector.extract_strided_slice %504 {offsets = [0, 64], sizes = [8, 32], strides = [1, 1]} : vector<8x96xf32> to vector<8x32xf32>
    %517 = arith.mulf %513, %516 : vector<8x32xf32>
    %518 = arith.addf %515, %517 : vector<8x32xf32>
    %519 = math.tanh %518 : vector<8x32xf32>
    %cst_110 = arith.constant 1.000000e+00 : f32
    %520 = vector.broadcast %cst_110 : f32 to vector<8x32xf32>
    %521 = arith.subf %520, %514 : vector<8x32xf32>
    %522 = arith.mulf %521, %519 : vector<8x32xf32>
    %523 = arith.mulf %514, %476 : vector<8x32xf32>
    %524 = arith.addf %522, %523 : vector<8x32xf32>
    %cst_111 = arith.constant dense<0.000000e+00> : vector<8x16xf32>
    %525 = tpu.matmul %524, %5, %cst_111 {dimension_numbers = #tpu.dot_dimension_numbers<[1], [0], [0], [1], [0, 0, 1, 1], [], []>} : vector<8x32xf32>, vector<32x16xf32>, vector<8x16xf32> -> vector<8x16xf32>
    %526 = vector.broadcast %6 : vector<1x16xf32> to vector<8x16xf32>
    %527 = arith.addf %525, %526 : vector<8x16xf32>
    %cst_112 = arith.constant dense<0xFF800000> : vector<8xf32>
    %528 = vector.multi_reduction <maximumf>, %527, %cst_112 [1] : vector<8x16xf32> to vector<8xf32>
    %529 = vector.shape_cast %528 : vector<8xf32> to vector<8x1xf32>
    %530 = vector.broadcast %529 : vector<8x1xf32> to vector<8x16xf32>
    %531 = arith.subf %527, %530 : vector<8x16xf32>
    %532 = math.exp %531 : vector<8x16xf32>
    %cst_113 = arith.constant dense<0.000000e+00> : vector<8xf32>
    %533 = vector.multi_reduction <add>, %532, %cst_113 [1] : vector<8x16xf32> to vector<8xf32>
    %534 = vector.shape_cast %533 : vector<8xf32> to vector<8x1xf32>
    %535 = math.log %534 : vector<8x1xf32>
    %536 = arith.addf %529, %535 : vector<8x1xf32>
    %537 = vector.broadcast %536 : vector<8x1xf32> to vector<8x16xf32>
    %538 = arith.subf %527, %537 : vector<8x16xf32>
    %539 = vector.broadcast %529 : vector<8x1xf32> to vector<8x16xf32>
    %540 = arith.cmpf oeq, %527, %539 : vector<8x16xf32>
    %c16_i32_114 = arith.constant 16 : i32
    %541 = vector.broadcast %c16_i32_114 : i32 to vector<8x16xi32>
    %542 = arith.select %540, %208, %541 : vector<8x16xi1>, vector<8x16xi32>
    %cst_115 = arith.constant dense<2147483647> : vector<8xi32>
    %543 = vector.multi_reduction <minsi>, %542, %cst_115 [1] : vector<8x16xi32> to vector<8xi32>
    %544 = vector.shape_cast %543 : vector<8xi32> to vector<8x1xi32>
    %545 = vector.broadcast %544 : vector<8x1xi32> to vector<8x16xi32>
    %546 = arith.cmpi eq, %208, %545 : vector<8x16xi32>
    %547 = arith.extui %546 : vector<8x16xi1> to vector<8x16xi32>
    %548 = arith.sitofp %547 : vector<8x16xi32> to vector<8x16xf32>
    %cst_116 = arith.constant dense<0.000000e+00> : vector<8x96xf32>
    %549 = tpu.matmul %548, %4, %cst_116 {dimension_numbers = #tpu.dot_dimension_numbers<[1], [0], [0], [1], [0, 0, 1, 1], [], []>} : vector<8x16xf32>, vector<16x96xf32>, vector<8x96xf32> -> vector<8x96xf32>
    %cst_117 = arith.constant dense<0.000000e+00> : vector<8x96xf32>
    %550 = tpu.matmul %524, %2, %cst_117 {dimension_numbers = #tpu.dot_dimension_numbers<[1], [0], [0], [1], [0, 0, 1, 1], [], []>} : vector<8x32xf32>, vector<32x96xf32>, vector<8x96xf32> -> vector<8x96xf32>
    %551 = vector.broadcast %3 : vector<1x96xf32> to vector<8x96xf32>
    %552 = arith.addf %550, %551 : vector<8x96xf32>
    %553 = vector.extract_strided_slice %549 {offsets = [0, 0], sizes = [8, 64], strides = [1, 1]} : vector<8x96xf32> to vector<8x64xf32>
    %554 = vector.extract_strided_slice %552 {offsets = [0, 0], sizes = [8, 64], strides = [1, 1]} : vector<8x96xf32> to vector<8x64xf32>
    %555 = arith.addf %553, %554 : vector<8x64xf32>
    %556 = arith.negf %555 : vector<8x64xf32>
    %557 = math.exp %556 : vector<8x64xf32>
    %cst_118 = arith.constant 1.000000e+00 : f32
    %558 = vector.broadcast %cst_118 : f32 to vector<8x64xf32>
    %559 = arith.addf %558, %557 : vector<8x64xf32>
    %560 = arith.divf %558, %559 : vector<8x64xf32>
    %561 = vector.extract_strided_slice %560 {offsets = [0, 0], sizes = [8, 32], strides = [1, 1]} : vector<8x64xf32> to vector<8x32xf32>
    %562 = vector.extract_strided_slice %560 {offsets = [0, 32], sizes = [8, 32], strides = [1, 1]} : vector<8x64xf32> to vector<8x32xf32>
    %563 = vector.extract_strided_slice %549 {offsets = [0, 64], sizes = [8, 32], strides = [1, 1]} : vector<8x96xf32> to vector<8x32xf32>
    %564 = vector.extract_strided_slice %552 {offsets = [0, 64], sizes = [8, 32], strides = [1, 1]} : vector<8x96xf32> to vector<8x32xf32>
    %565 = arith.mulf %561, %564 : vector<8x32xf32>
    %566 = arith.addf %563, %565 : vector<8x32xf32>
    %567 = math.tanh %566 : vector<8x32xf32>
    %cst_119 = arith.constant 1.000000e+00 : f32
    %568 = vector.broadcast %cst_119 : f32 to vector<8x32xf32>
    %569 = arith.subf %568, %562 : vector<8x32xf32>
    %570 = arith.mulf %569, %567 : vector<8x32xf32>
    %571 = arith.mulf %562, %524 : vector<8x32xf32>
    %572 = arith.addf %570, %571 : vector<8x32xf32>
    %cst_120 = arith.constant dense<0.000000e+00> : vector<8x16xf32>
    %573 = tpu.matmul %572, %5, %cst_120 {dimension_numbers = #tpu.dot_dimension_numbers<[1], [0], [0], [1], [0, 0, 1, 1], [], []>} : vector<8x32xf32>, vector<32x16xf32>, vector<8x16xf32> -> vector<8x16xf32>
    %574 = vector.broadcast %6 : vector<1x16xf32> to vector<8x16xf32>
    %575 = arith.addf %573, %574 : vector<8x16xf32>
    %cst_121 = arith.constant dense<0xFF800000> : vector<8xf32>
    %576 = vector.multi_reduction <maximumf>, %575, %cst_121 [1] : vector<8x16xf32> to vector<8xf32>
    %577 = vector.shape_cast %576 : vector<8xf32> to vector<8x1xf32>
    %578 = vector.broadcast %577 : vector<8x1xf32> to vector<8x16xf32>
    %579 = arith.subf %575, %578 : vector<8x16xf32>
    %580 = math.exp %579 : vector<8x16xf32>
    %cst_122 = arith.constant dense<0.000000e+00> : vector<8xf32>
    %581 = vector.multi_reduction <add>, %580, %cst_122 [1] : vector<8x16xf32> to vector<8xf32>
    %582 = vector.shape_cast %581 : vector<8xf32> to vector<8x1xf32>
    %583 = math.log %582 : vector<8x1xf32>
    %584 = arith.addf %577, %583 : vector<8x1xf32>
    %585 = vector.broadcast %584 : vector<8x1xf32> to vector<8x16xf32>
    %586 = arith.subf %575, %585 : vector<8x16xf32>
    %587 = tpu.concatenate %250, %298, %346, %394, %442, %490, %538, %586 in 1 : vector<8x16xf32>, vector<8x16xf32>, vector<8x16xf32>, vector<8x16xf32>, vector<8x16xf32>, vector<8x16xf32>, vector<8x16xf32>, vector<8x16xf32> -> vector<8x128xf32>
    %c0_123 = arith.constant 0 : index
    %c0_124 = arith.constant 0 : index
    %588 = vector.load %arg8[%c0_123, %c0_124] : memref<8x128xf32, #tpu.memory_space<vmem>>, vector<8x128xf32>
    tpu.vector_store %arg8[%c0_123, %c0_124], %587 {strides = array<i32>} : memref<8x128xf32, #tpu.memory_space<vmem>>, vector<8x128xf32>,
    return
  }
}

</mosaic_0001>

<llo_original>
// kernel: transduction_forward.1
$region0: #{transduction_forward.1}
  #allocation0 [shape = 'u32[]', space=smem, size = 0x4, offset = 0x4, fixed_abs, tag = 'smem constant byte address 0x4 - core index']
  #allocation1 [shape = 'u32[144,128]{1,0:T(1,128)}', space=vmem, size = 0x12000, scoped, tag = 'internal scratch']
  %s0 = inlined_call_operand.vmem [shape: f32[8,8,96], index: 0, kind: input, shape index: {}]
  %s1 = inlined_call_operand.vmem [shape: f32[32,96], index: 1, kind: input, shape index: {}]
  %s2 = inlined_call_operand.vmem [shape: f32[1,96], index: 2, kind: input, shape index: {}]
  %s3 = inlined_call_operand.vmem [shape: f32[16,96], index: 3, kind: input, shape index: {}]
  %s4 = inlined_call_operand.vmem [shape: f32[32,96], index: 4, kind: input, shape index: {}]
  %s5 = inlined_call_operand.vmem [shape: f32[1,96], index: 5, kind: input, shape index: {}]
  %s6 = inlined_call_operand.vmem [shape: f32[32,16], index: 6, kind: input, shape index: {}]
  %s7 = inlined_call_operand.vmem [shape: f32[1,16], index: 7, kind: input, shape index: {}]
  %s8 = inlined_call_operand.vmem [shape: f32[8,128], index: 8, kind: output, shape index: {}]
  %s9 = sld [smem:[#allocation0]]
  $region42: #{transduction_forward.1} parent=0
    _
  %s11 = ssub.s32 1, %s9
  %s12 = scalar_select 0, %s11, %s9
  // Predicated region
  $region2: #{transduction_forward.1} parent=0 // pred_check
    _
  $region3: #{transduction_forward.1} parent=0 // pred_check_branch
    %14 = sbr.rel (0) target = $region5
  $region4: #{transduction_forward.1} parent=0 // pred_region
    _
  $region5: #{transduction_forward.1} parent=0 // pred_fallthru
    _
  // Predicated region
  $region6: #{transduction_forward.1} parent=0 // pred_check
    _
  $region7: #{transduction_forward.1} parent=0 // pred_check_branch
    %16 = sbr.rel (0) target = $region9
  $region8: #{transduction_forward.1} parent=0 // pred_region
    _
  $region9: #{transduction_forward.1} parent=0 // pred_fallthru
    _
  // Predicated region
  $region10: #{transduction_forward.1} parent=0 // pred_check
    _
  $region11: #{transduction_forward.1} parent=0 // pred_check_branch
    %18 = sbr.rel (0) target = $region13
  $region12: #{transduction_forward.1} parent=0 // pred_region
    _
  $region13: #{transduction_forward.1} parent=0 // pred_fallthru
    _
  // Predicated region
  $region14: #{transduction_forward.1} parent=0 // pred_check
    _
  $region15: #{transduction_forward.1} parent=0 // pred_check_branch
    %20 = sbr.rel (0) target = $region17
  $region16: #{transduction_forward.1} parent=0 // pred_region
    _
  $region17: #{transduction_forward.1} parent=0 // pred_fallthru
    _
  // Predicated region
  $region18: #{transduction_forward.1} parent=0 // pred_check
    _
  $region19: #{transduction_forward.1} parent=0 // pred_check_branch
    %22 = sbr.rel (0) target = $region21
  $region20: #{transduction_forward.1} parent=0 // pred_region
    _
  $region21: #{transduction_forward.1} parent=0 // pred_fallthru
    _
  // Predicated region
  $region22: #{transduction_forward.1} parent=0 // pred_check
    _
  $region23: #{transduction_forward.1} parent=0 // pred_check_branch
    %24 = sbr.rel (0) target = $region25
  $region24: #{transduction_forward.1} parent=0 // pred_region
    _
  $region25: #{transduction_forward.1} parent=0 // pred_fallthru
    _
  // Predicated region
  $region26: #{transduction_forward.1} parent=0 // pred_check
    _
  $region27: #{transduction_forward.1} parent=0 // pred_check_branch
    %26 = sbr.rel (0) target = $region29
  $region28: #{transduction_forward.1} parent=0 // pred_region
    _
  $region29: #{transduction_forward.1} parent=0 // pred_fallthru
    _
  // Predicated region
  $region30: #{transduction_forward.1} parent=0 // pred_check
    _
  $region31: #{transduction_forward.1} parent=0 // pred_check_branch
    %28 = sbr.rel (0) target = $region33
  $region32: #{transduction_forward.1} parent=0 // pred_region
    _
  $region33: #{transduction_forward.1} parent=0 // pred_fallthru
    _
  %v29 = vld [vmem:[%s1] sm:$0xff]
  %v30 = vld [vmem:[%s1 + $0x8] sm:$0xff]
  %v31 = vld [vmem:[%s1 + $0x10] sm:$0xff]
  %v32 = vld [vmem:[%s1 + $0x18] sm:$0xff]
  %v33 = vld [vmem:[%s2] sm:$0x1]
  %v34 = vld [vmem:[%s4] sm:$0xff]
  %v35 = vld [vmem:[%s4 + $0x8] sm:$0xff]
  %v36 = vld [vmem:[%s4 + $0x10] sm:$0xff]
  %v37 = vld [vmem:[%s4 + $0x18] sm:$0xff]
  %v38 = vld [vmem:[%s5] sm:$0x1]
  %v39 = vld [vmem:[%s3] sm:$0xff]
  %v40 = vld [vmem:[%s3 + $0x8] sm:$0xff]
  %v41 = vld [vmem:[%s6] sm:$0xff]
  %v42 = vld [vmem:[%s6 + $0x8] sm:$0xff]
  %v43 = vld [vmem:[%s6 + $0x10] sm:$0xff]
  %v44 = vld [vmem:[%s6 + $0x18] sm:$0xff]
  %v45 = vld [vmem:[%s7] sm:$0x1]
  %v46 = vld [vmem:[%s0] sm:$0xff]
  %v48 = vlaneseq
  %v49 = vshrl.u32 %v48, 7
  %v50 = vsub.s32 0, %v49
  %v51 = vrot.slane %v33, %v50
  %vm53 = vcmask 261120
  %v55 = vsel %vm53, 0.0, 0
  %57 = vmatprep.subr.mxu0 0.0
  %58 = vmatpush1.msra.mxu0 %v29
  %59 = vmatprep.subr.mxu0 0.0
  %60 = vmatpush1.msra.mxu0 %v30
  %61 = vmatprep.subr.mxu0 0.0
  %62 = vmatpush1.msra.mxu0 %v31
  %63 = vmatprep.subr.mxu0 0.0
  %64 = vmatpush1.msra.mxu0 %v32
  %65 = vmatprep.subr.mxu0 0.0
  %66 = vmatpush1.msra.mxu0 0.0
  %67 = vmatprep.subr.mxu0 0.0
  %68 = vmatpush1.msra.mxu0 0.0
  %69 = vmatprep.subr.mxu0 0.0
  %70 = vmatpush1.msra.mxu0 0.0
  %71 = vmatprep.subr.mxu0 0.0
  %72 = vmatpush1.msra.mxu0 0.0
  %73 = vmatprep.subr.mxu0 0.0
  %74 = vmatpush1.msra.mxu0 0.0
  %75 = vmatprep.subr.mxu0 0.0
  %76 = vmatpush1.msra.mxu0 0.0
  %77 = vmatprep.subr.mxu0 0.0
  %78 = vmatpush1.msra.mxu0 0.0
  %79 = vmatprep.subr.mxu0 0.0
  %80 = vmatpush1.msra.mxu0 0.0
  %81 = vmatprep.subr.mxu0 0.0
  %82 = vmatpush1.msra.mxu0 0.0
  %83 = vmatprep.subr.mxu0 0.0
  %84 = vmatpush1.msra.mxu0 0.0
  %85 = vmatprep.subr.mxu0 0.0
  %86 = vmatpush1.msra.mxu0 0.0
  %87 = vmatprep.subr.mxu0 0.0
  %88 = vmatpush1.msra.mxu0 0.0
  %89 = vmatprep.subr.mxu0 0.0
  %90 = vmatpush1.msra.mxu0 0.0
  %91 = vmatprep.subr.mxu0 0.0
  %92 = vmatpush1.msra.mxu0 0.0
  %93 = vmatprep.subr.mxu0 0.0
  %94 = vmatpush1.msra.mxu0 0.0
  %95 = vmatprep.subr.mxu0 0.0
  %96 = vmatpush1.msra.mxu0 0.0
  %97 = vmatprep.subr.mxu0 0.0
  %98 = vmatpush1.msra.mxu0 0.0
  %99 = vmatprep.subr.mxu0 0.0
  %100 = vmatpush1.msra.mxu0 0.0
  %101 = vmatprep.subr.mxu0 0.0
  %102 = vmatpush1.msra.mxu0 0.0
  %103 = vmatprep.subr.mxu0 0.0
  %104 = vmatpush1.msra.mxu0 0.0
  %105 = vmatprep.subr.mxu0 0.0
  %106 = vmatpush1.msra.mxu0 0.0
  %107 = vmatprep.subr.mxu0 0.0
  %108 = vmatpush1.msra.mxu0 0.0
  %109 = vmatprep.subr.mxu0 0.0
  %110 = vmatpush1.msra.mxu0 0.0
  %111 = vmatprep.subr.mxu0 0.0
  %112 = vmatpush1.msra.mxu0 0.0
  %113 = vmatprep.subr.mxu0 0.0
  %114 = vmatpush1.msra.mxu0 0.0
  %115 = vmatprep.subr.mxu0 0.0
  %116 = vmatpush1.msra.mxu0 0.0
  %117 = vmatprep.subr.mxu0 0.0
  %118 = vmatpush1.msra.mxu0 0.0
  %119 = vmatprep.subr.mxu0 0.0
  %120 = vmatpush1.msra.mxu0 0.0
  %121 = vmatprep.mubr.f32.mxu0 0.0
  %122 = vmatmul.mubr.f32.gmra.mrb[0].mxu0 %v55
  %v123 = vpop.f32.mrb[0].mxu0
  %v124 = vadd.f32 %v51, %v123
  %v125 = vpop.f32.mrb[0].mxu0
  %126 = vdwg.mxu0
  %v127 = vadd.f32 %v46, %v124
  %v128 = vxor.u32 %v127, 2147483648
  %v129 = vmul.f32 %v128, 1.442695
  %v130 = vpow.pop %v129
  %v131 = vadd.f32 %v130, 1.0
  %v132 = vrcp.pop %v131
  %v133 = vmul.f32 1.0, %v132
  %135 = vrot.lane.b32.xlu0 %v124, 64
  %v136 = vpop.permute.xlu0 %135
  %v138 = vmul.f32 %v133, %v136
  %140 = vrot.lane.b32.xlu0 %v138, 64
  %v141 = vpop.permute.xlu0 %140
  %v143 = vadd.f32 %v46, %v141
  %v144 = vtanh.pop %v143
  %v145 = vsub.f32 1.0, %v133
  %147 = vrot.lane.b32.xlu0 %v144, 96
  %v148 = vpop.permute.xlu0 %147
  %v150 = vmul.f32 %v145, %v148
  %v151 = vmul.f32 %v133, 0.0
  %v152 = vadd.f32 %v150, %v151
  %s153 = scalar_lea.vmem %s0, 8
  %v154 = vld [vmem:[%s153] sm:$0xff]
  %156 = vrot.lane.b32.xlu0 %v152, 96
  %v157 = vpop.permute.xlu0 %156
  %v158 = vsel %vm53, %v157, 0
  %160 = vmatprep.subr.mxu0 0.0
  %161 = vmatpush1.msra.mxu0 %v29
  %162 = vmatprep.subr.mxu0 0.0
  %163 = vmatpush1.msra.mxu0 %v30
  %164 = vmatprep.subr.mxu0 0.0
  %165 = vmatpush1.msra.mxu0 %v31
  %166 = vmatprep.subr.mxu0 0.0
  %167 = vmatpush1.msra.mxu0 %v32
  %168 = vmatprep.subr.mxu0 0.0
  %169 = vmatpush1.msra.mxu0 0.0
  %170 = vmatprep.subr.mxu0 0.0
  %171 = vmatpush1.msra.mxu0 0.0
  %172 = vmatprep.subr.mxu0 0.0
  %173 = vmatpush1.msra.mxu0 0.0
  %174 = vmatprep.subr.mxu0 0.0
  %175 = vmatpush1.msra.mxu0 0.0
  %176 = vmatprep.subr.mxu0 0.0
  %177 = vmatpush1.msra.mxu0 0.0
  %178 = vmatprep.subr.mxu0 0.0
  %179 = vmatpush1.msra.mxu0 0.0
  %180 = vmatprep.subr.mxu0 0.0
  %181 = vmatpush1.msra.mxu0 0.0
  %182 = vmatprep.subr.mxu0 0.0
  %183 = vmatpush1.msra.mxu0 0.0
  %184 = vmatprep.subr.mxu0 0.0
  %185 = vmatpush1.msra.mxu0 0.0
  %186 = vmatprep.subr.mxu0 0.0
  %187 = vmatpush1.msra.mxu0 0.0
  %188 = vmatprep.subr.mxu0 0.0
  %189 = vmatpush1.msra.mxu0 0.0
  %190 = vmatprep.subr.mxu0 0.0
  %191 = vmatpush1.msra.mxu0 0.0
  %192 = vmatprep.subr.mxu0 0.0
  %193 = vmatpush1.msra.mxu0 0.0
  %194 = vmatprep.subr.mxu0 0.0
  %195 = vmatpush1.msra.mxu0 0.0
  %196 = vmatprep.subr.mxu0 0.0
  %197 = vmatpush1.msra.mxu0 0.0
  %198 = vmatprep.subr.mxu0 0.0
  %199 = vmatpush1.msra.mxu0 0.0
  %200 = vmatprep.subr.mxu0 0.0
  %201 = vmatpush1.msra.mxu0 0.0
  %202 = vmatprep.subr.mxu0 0.0
  %203 = vmatpush1.msra.mxu0 0.0
  %204 = vmatprep.subr.mxu0 0.0
  %205 = vmatpush1.msra.mxu0 0.0
  %206 = vmatprep.subr.mxu0 0.0
  %207 = vmatpush1.msra.mxu0 0.0
  %208 = vmatprep.subr.mxu0 0.0
  %209 = vmatpush1.msra.mxu0 0.0
  %210 = vmatprep.subr.mxu0 0.0
  %211 = vmatpush1.msra.mxu0 0.0
  %212 = vmatprep.subr.mxu0 0.0
  %213 = vmatpush1.msra.mxu0 0.0
  %214 = vmatprep.subr.mxu0 0.0
  %215 = vmatpush1.msra.mxu0 0.0
  %216 = vmatprep.subr.mxu0 0.0
  %217 = vmatpush1.msra.mxu0 0.0
  %218 = vmatprep.subr.mxu0 0.0
  %219 = vmatpush1.msra.mxu0 0.0
  %220 = vmatprep.subr.mxu0 0.0
  %221 = vmatpush1.msra.mxu0 0.0
  %222 = vmatprep.subr.mxu0 0.0
  %223 = vmatpush1.msra.mxu0 0.0
  %224 = vmatprep.mubr.f32.mxu0 0.0
  %225 = vmatmul.mubr.f32.gmra.mrb[0].mxu0 %v158
  %v226 = vpop.f32.mrb[0].mxu0
  %v227 = vadd.f32 %v51, %v226
  %v228 = vpop.f32.mrb[0].mxu0
  %229 = vdwg.mxu0
  %v230 = vadd.f32 %v154, %v227
  %v231 = vxor.u32 %v230, 2147483648
  %v232 = vmul.f32 %v231, 1.442695
  %v233 = vpow.pop %v232
  %v234 = vadd.f32 %v233, 1.0
  %v235 = vrcp.pop %v234
  %v236 = vmul.f32 1.0, %v235
  %238 = vrot.lane.b32.xlu0 %v227, 64
  %v239 = vpop.permute.xlu0 %238
  %v241 = vmul.f32 %v236, %v239
  %243 = vrot.lane.b32.xlu0 %v241, 64
  %v244 = vpop.permute.xlu0 %243
  %v246 = vadd.f32 %v154, %v244
  %v247 = vtanh.pop %v246
  %v248 = vsub.f32 1.0, %v236
  %250 = vrot.lane.b32.xlu0 %v247, 96
  %v251 = vpop.permute.xlu0 %250
  %v253 = vmul.f32 %v248, %v251
  %v254 = vmul.f32 %v236, %v152
  %v255 = vadd.f32 %v253, %v254
  %s256 = scalar_lea.vmem %s0, 16
  %v257 = vld [vmem:[%s256] sm:$0xff]
  %259 = vrot.lane.b32.xlu0 %v255, 96
  %v260 = vpop.permute.xlu0 %259
  %v261 = vsel %vm53, %v260, 0
  %263 = vmatprep.subr.mxu0 0.0
  %264 = vmatpush1.msra.mxu0 %v29
  %265 = vmatprep.subr.mxu0 0.0
  %266 = vmatpush1.msra.mxu0 %v30
  %267 = vmatprep.subr.mxu0 0.0
  %268 = vmatpush1.msra.mxu0 %v31
  %269 = vmatprep.subr.mxu0 0.0
  %270 = vmatpush1.msra.mxu0 %v32
  %271 = vmatprep.subr.mxu0 0.0
  %272 = vmatpush1.msra.mxu0 0.0
  %273 = vmatprep.subr.mxu0 0.0
  %274 = vmatpush1.msra.mxu0 0.0
  %275 = vmatprep.subr.mxu0 0.0
  %276 = vmatpush1.msra.mxu0 0.0
  %277 = vmatprep.subr.mxu0 0.0
  %278 = vmatpush1.msra.mxu0 0.0
  %279 = vmatprep.subr.mxu0 0.0
  %280 = vmatpush1.msra.mxu0 0.0
  %281 = vmatprep.subr.mxu0 0.0
  %282 = vmatpush1.msra.mxu0 0.0
  %283 = vmatprep.subr.mxu0 0.0
  %284 = vmatpush1.msra.mxu0 0.0
  %285 = vmatprep.subr.mxu0 0.0
  %286 = vmatpush1.msra.mxu0 0.0
  %287 = vmatprep.subr.mxu0 0.0
  %288 = vmatpush1.msra.mxu0 0.0
  %289 = vmatprep.subr.mxu0 0.0
  %290 = vmatpush1.msra.mxu0 0.0
  %291 = vmatprep.subr.mxu0 0.0
  %292 = vmatpush1.msra.mxu0 0.0
  %293 = vmatprep.subr.mxu0 0.0
  %294 = vmatpush1.msra.mxu0 0.0
  %295 = vmatprep.subr.mxu0 0.0
  %296 = vmatpush1.msra.mxu0 0.0
  %297 = vmatprep.subr.mxu0 0.0
  %298 = vmatpush1.msra.mxu0 0.0
  %299 = vmatprep.subr.mxu0 0.0
  %300 = vmatpush1.msra.mxu0 0.0
  %301 = vmatprep.subr.mxu0 0.0
  %302 = vmatpush1.msra.mxu0 0.0
  %303 = vmatprep.subr.mxu0 0.0
  %304 = vmatpush1.msra.mxu0 0.0
  %305 = vmatprep.subr.mxu0 0.0
  %306 = vmatpush1.msra.mxu0 0.0
  %307 = vmatprep.subr.mxu0 0.0
  %308 = vmatpush1.msra.mxu0 0.0
  %309 = vmatprep.subr.mxu0 0.0
  %310 = vmatpush1.msra.mxu0 0.0
  %311 = vmatprep.subr.mxu0 0.0
  %312 = vmatpush1.msra.mxu0 0.0
  %313 = vmatprep.subr.mxu0 0.0
  %314 = vmatpush1.msra.mxu0 0.0
  %315 = vmatprep.subr.mxu0 0.0
  %316 = vmatpush1.msra.mxu0 0.0
  %317 = vmatprep.subr.mxu0 0.0
  %318 = vmatpush1.msra.mxu0 0.0
  %319 = vmatprep.subr.mxu0 0.0
  %320 = vmatpush1.msra.mxu0 0.0
  %321 = vmatprep.subr.mxu0 0.0
  %322 = vmatpush1.msra.mxu0 0.0
  %323 = vmatprep.subr.mxu0 0.0
  %324 = vmatpush1.msra.mxu0 0.0
  %325 = vmatprep.subr.mxu0 0.0
  %326 = vmatpush1.msra.mxu0 0.0
  %327 = vmatprep.mubr.f32.mxu0 0.0
  %328 = vmatmul.mubr.f32.gmra.mrb[0].mxu0 %v261
  %v329 = vpop.f32.mrb[0].mxu0
  %v330 = vadd.f32 %v51, %v329
  %v331 = vpop.f32.mrb[0].mxu0
  %332 = vdwg.mxu0
  %v333 = vadd.f32 %v257, %v330
  %v334 = vxor.u32 %v333, 2147483648
  %v335 = vmul.f32 %v334, 1.442695
  %v336 = vpow.pop %v335
  %v337 = vadd.f32 %v336, 1.0
  %v338 = vrcp.pop %v337
  %v339 = vmul.f32 1.0, %v338
  %341 = vrot.lane.b32.xlu0 %v330, 64
  %v342 = vpop.permute.xlu0 %341
  %v344 = vmul.f32 %v339, %v342
  %346 = vrot.lane.b32.xlu0 %v344, 64
  %v347 = vpop.permute.xlu0 %346
  %v349 = vadd.f32 %v257, %v347
  %v350 = vtanh.pop %v349
  %v351 = vsub.f32 1.0, %v339
  %353 = vrot.lane.b32.xlu0 %v350, 96
  %v354 = vpop.permute.xlu0 %353
  %v356 = vmul.f32 %v351, %v354
  %v357 = vmul.f32 %v339, %v255
  %v358 = vadd.f32 %v356, %v357
  %s359 = scalar_lea.vmem %s0, 24
  %v360 = vld [vmem:[%s359] sm:$0xff]
  %362 = vrot.lane.b32.xlu0 %v358, 96
  %v363 = vpop.permute.xlu0 %362
  %v364 = vsel %vm53, %v363, 0
  %366 = vmatprep.subr.mxu0 0.0
  %367 = vmatpush1.msra.mxu0 %v29
  %368 = vmatprep.subr.mxu0 0.0
  %369 = vmatpush1.msra.mxu0 %v30
  %370 = vmatprep.subr.mxu0 0.0
  %371 = vmatpush1.msra.mxu0 %v31
  %372 = vmatprep.subr.mxu0 0.0
  %373 = vmatpush1.msra.mxu0 %v32
  %374 = vmatprep.subr.mxu0 0.0
  %375 = vmatpush1.msra.mxu0 0.0
  %376 = vmatprep.subr.mxu0 0.0
  %377 = vmatpush1.msra.mxu0 0.0
  %378 = vmatprep.subr.mxu0 0.0
  %379 = vmatpush1.msra.mxu0 0.0
  %380 = vmatprep.subr.mxu0 0.0
  %381 = vmatpush1.msra.mxu0 0.0
  %382 = vmatprep.subr.mxu0 0.0
  %383 = vmatpush1.msra.mxu0 0.0
  %384 = vmatprep.subr.mxu0 0.0
  %385 = vmatpush1.msra.mxu0 0.0
  %386 = vmatprep.subr.mxu0 0.0
  %387 = vmatpush1.msra.mxu0 0.0
  %388 = vmatprep.subr.mxu0 0.0
  %389 = vmatpush1.msra.mxu0 0.0
  %390 = vmatprep.subr.mxu0 0.0
  %391 = vmatpush1.msra.mxu0 0.0
  %392 = vmatprep.subr.mxu0 0.0
  %393 = vmatpush1.msra.mxu0 0.0
  %394 = vmatprep.subr.mxu0 0.0
  %395 = vmatpush1.msra.mxu0 0.0
  %396 = vmatprep.subr.mxu0 0.0
  %397 = vmatpush1.msra.mxu0 0.0
  %398 = vmatprep.subr.mxu0 0.0
  %399 = vmatpush1.msra.mxu0 0.0
  %400 = vmatprep.subr.mxu0 0.0
  %401 = vmatpush1.msra.mxu0 0.0
  %402 = vmatprep.subr.mxu0 0.0
  %403 = vmatpush1.msra.mxu0 0.0
  %404 = vmatprep.subr.mxu0 0.0
  %405 = vmatpush1.msra.mxu0 0.0
  %406 = vmatprep.subr.mxu0 0.0
  %407 = vmatpush1.msra.mxu0 0.0
  %408 = vmatprep.subr.mxu0 0.0
  %409 = vmatpush1.msra.mxu0 0.0
  %410 = vmatprep.subr.mxu0 0.0
  %411 = vmatpush1.msra.mxu0 0.0
  %412 = vmatprep.subr.mxu0 0.0
  %413 = vmatpush1.msra.mxu0 0.0
  %414 = vmatprep.subr.mxu0 0.0
  %415 = vmatpush1.msra.mxu0 0.0
  %416 = vmatprep.subr.mxu0 0.0
  %417 = vmatpush1.msra.mxu0 0.0
  %418 = vmatprep.subr.mxu0 0.0
  %419 = vmatpush1.msra.mxu0 0.0
  %420 = vmatprep.subr.mxu0 0.0
  %421 = vmatpush1.msra.mxu0 0.0
  %422 = vmatprep.subr.mxu0 0.0
  %423 = vmatpush1.msra.mxu0 0.0
  %424 = vmatprep.subr.mxu0 0.0
  %425 = vmatpush1.msra.mxu0 0.0
  %426 = vmatprep.subr.mxu0 0.0
  %427 = vmatpush1.msra.mxu0 0.0
  %428 = vmatprep.subr.mxu0 0.0
  %429 = vmatpush1.msra.mxu0 0.0
  %430 = vmatprep.mubr.f32.mxu0 0.0
  %431 = vmatmul.mubr.f32.gmra.mrb[0].mxu0 %v364
  %v432 = vpop.f32.mrb[0].mxu0
  %v433 = vadd.f32 %v51, %v432
  %v434 = vpop.f32.mrb[0].mxu0
  %435 = vdwg.mxu0
  %v436 = vadd.f32 %v360, %v433
  %v437 = vxor.u32 %v436, 2147483648
  %v438 = vmul.f32 %v437, 1.442695
  %v439 = vpow.pop %v438
  %v440 = vadd.f32 %v439, 1.0
  %v441 = vrcp.pop %v440
  %v442 = vmul.f32 1.0, %v441
  %444 = vrot.lane.b32.xlu0 %v433, 64
  %v445 = vpop.permute.xlu0 %444
  %v447 = vmul.f32 %v442, %v445
  %449 = vrot.lane.b32.xlu0 %v447, 64
  %v450 = vpop.permute.xlu0 %449
  %v452 = vadd.f32 %v360, %v450
  %v453 = vtanh.pop %v452
  %v454 = vsub.f32 1.0, %v442
  %456 = vrot.lane.b32.xlu0 %v453, 96
  %v457 = vpop.permute.xlu0 %456
  %v459 = vmul.f32 %v454, %v457
  %v460 = vmul.f32 %v442, %v358
  %v461 = vadd.f32 %v459, %v460
  %s462 = scalar_lea.vmem %s0, 32
  %v463 = vld [vmem:[%s462] sm:$0xff]
  %465 = vrot.lane.b32.xlu0 %v461, 96
  %v466 = vpop.permute.xlu0 %465
  %v467 = vsel %vm53, %v466, 0
  %469 = vmatprep.subr.mxu0 0.0
  %470 = vmatpush1.msra.mxu0 %v29
  %471 = vmatprep.subr.mxu0 0.0
  %472 = vmatpush1.msra.mxu0 %v30
  %473 = vmatprep.subr.mxu0 0.0
  %474 = vmatpush1.msra.mxu0 %v31
  %475 = vmatprep.subr.mxu0 0.0
  %476 = vmatpush1.msra.mxu0 %v32
  %477 = vmatprep.subr.mxu0 0.0
  %478 = vmatpush1.msra.mxu0 0.0
  %479 = vmatprep.subr.mxu0 0.0
  %480 = vmatpush1.msra.mxu0 0.0
  %481 = vmatprep.subr.mxu0 0.0
  %482 = vmatpush1.msra.mxu0 0.0
  %483 = vmatprep.subr.mxu0 0.0
  %484 = vmatpush1.msra.mxu0 0.0
  %485 = vmatprep.subr.mxu0 0.0
  %486 = vmatpush1.msra.mxu0 0.0
  %487 = vmatprep.subr.mxu0 0.0
  %488 = vmatpush1.msra.mxu0 0.0
  %489 = vmatprep.subr.mxu0 0.0
  %490 = vmatpush1.msra.mxu0 0.0
  %491 = vmatprep.subr.mxu0 0.0
  %492 = vmatpush1.msra.mxu0 0.0
  %493 = vmatprep.subr.mxu0 0.0
  %494 = vmatpush1.msra.mxu0 0.0
  %495 = vmatprep.subr.mxu0 0.0
  %496 = vmatpush1.msra.mxu0 0.0
  %497 = vmatprep.subr.mxu0 0.0
  %498 = vmatpush1.msra.mxu0 0.0
  %499 = vmatprep.subr.mxu0 0.0
  %500 = vmatpush1.msra.mxu0 0.0
  %501 = vmatprep.subr.mxu0 0.0
  %502 = vmatpush1.msra.mxu0 0.0
  %503 = vmatprep.subr.mxu0 0.0
  %504 = vmatpush1.msra.mxu0 0.0
  %505 = vmatprep.subr.mxu0 0.0
  %506 = vmatpush1.msra.mxu0 0.0
  %507 = vmatprep.subr.mxu0 0.0
  %508 = vmatpush1.msra.mxu0 0.0
  %509 = vmatprep.subr.mxu0 0.0
  %510 = vmatpush1.msra.mxu0 0.0
  %511 = vmatprep.subr.mxu0 0.0
  %512 = vmatpush1.msra.mxu0 0.0
  %513 = vmatprep.subr.mxu0 0.0
  %514 = vmatpush1.msra.mxu0 0.0
  %515 = vmatprep.subr.mxu0 0.0
  %516 = vmatpush1.msra.mxu0 0.0
  %517 = vmatprep.subr.mxu0 0.0
  %518 = vmatpush1.msra.mxu0 0.0
  %519 = vmatprep.subr.mxu0 0.0
  %520 = vmatpush1.msra.mxu0 0.0
  %521 = vmatprep.subr.mxu0 0.0
  %522 = vmatpush1.msra.mxu0 0.0
  %523 = vmatprep.subr.mxu0 0.0
  %524 = vmatpush1.msra.mxu0 0.0
  %525 = vmatprep.subr.mxu0 0.0
  %526 = vmatpush1.msra.mxu0 0.0
  %527 = vmatprep.subr.mxu0 0.0
  %528 = vmatpush1.msra.mxu0 0.0
  %529 = vmatprep.subr.mxu0 0.0
  %530 = vmatpush1.msra.mxu0 0.0
  %531 = vmatprep.subr.mxu0 0.0
  %532 = vmatpush1.msra.mxu0 0.0
  %533 = vmatprep.mubr.f32.mxu0 0.0
  %534 = vmatmul.mubr.f32.gmra.mrb[0].mxu0 %v467
  %v535 = vpop.f32.mrb[0].mxu0
  %v536 = vadd.f32 %v51, %v535
  %v537 = vpop.f32.mrb[0].mxu0
  %538 = vdwg.mxu0
  %v539 = vadd.f32 %v463, %v536
  %v540 = vxor.u32 %v539, 2147483648
  %v541 = vmul.f32 %v540, 1.442695
  %v542 = vpow.pop %v541
  %v543 = vadd.f32 %v542, 1.0
  %v544 = vrcp.pop %v543
  %v545 = vmul.f32 1.0, %v544
  %547 = vrot.lane.b32.xlu0 %v536, 64
  %v548 = vpop.permute.xlu0 %547
  %v550 = vmul.f32 %v545, %v548
  %552 = vrot.lane.b32.xlu0 %v550, 64
  %v553 = vpop.permute.xlu0 %552
  %v555 = vadd.f32 %v463, %v553
  %v556 = vtanh.pop %v555
  %v557 = vsub.f32 1.0, %v545
  %559 = vrot.lane.b32.xlu0 %v556, 96
  %v560 = vpop.permute.xlu0 %559
  %v562 = vmul.f32 %v557, %v560
  %v563 = vmul.f32 %v545, %v461
  %v564 = vadd.f32 %v562, %v563
  %s565 = scalar_lea.vmem %s0, 40
  %v566 = vld [vmem:[%s565] sm:$0xff]
  %568 = vrot.lane.b32.xlu0 %v564, 96
  %v569 = vpop.permute.xlu0 %568
  %v570 = vsel %vm53, %v569, 0
  %572 = vmatprep.subr.mxu0 0.0
  %573 = vmatpush1.msra.mxu0 %v29
  %574 = vmatprep.subr.mxu0 0.0
  %575 = vmatpush1.msra.mxu0 %v30
  %576 = vmatprep.subr.mxu0 0.0
  %577 = vmatpush1.msra.mxu0 %v31
  %578 = vmatprep.subr.mxu0 0.0
  %579 = vmatpush1.msra.mxu0 %v32
  %580 = vmatprep.subr.mxu0 0.0
  %581 = vmatpush1.msra.mxu0 0.0
  %582 = vmatprep.subr.mxu0 0.0
  %583 = vmatpush1.msra.mxu0 0.0
  %584 = vmatprep.subr.mxu0 0.0
  %585 = vmatpush1.msra.mxu0 0.0
  %586 = vmatprep.subr.mxu0 0.0
  %587 = vmatpush1.msra.mxu0 0.0
  %588 = vmatprep.subr.mxu0 0.0
  %589 = vmatpush1.msra.mxu0 0.0
  %590 = vmatprep.subr.mxu0 0.0
  %591 = vmatpush1.msra.mxu0 0.0
  %592 = vmatprep.subr.mxu0 0.0
  %593 = vmatpush1.msra.mxu0 0.0
  %594 = vmatprep.subr.mxu0 0.0
  %595 = vmatpush1.msra.mxu0 0.0
  %596 = vmatprep.subr.mxu0 0.0
  %597 = vmatpush1.msra.mxu0 0.0
  %598 = vmatprep.subr.mxu0 0.0
  %599 = vmatpush1.msra.mxu0 0.0
  %600 = vmatprep.subr.mxu0 0.0
  %601 = vmatpush1.msra.mxu0 0.0
  %602 = vmatprep.subr.mxu0 0.0
  %603 = vmatpush1.msra.mxu0 0.0
  %604 = vmatprep.subr.mxu0 0.0
  %605 = vmatpush1.msra.mxu0 0.0
  %606 = vmatprep.subr.mxu0 0.0
  %607 = vmatpush1.msra.mxu0 0.0
  %608 = vmatprep.subr.mxu0 0.0
  %609 = vmatpush1.msra.mxu0 0.0
  %610 = vmatprep.subr.mxu0 0.0
  %611 = vmatpush1.msra.mxu0 0.0
  %612 = vmatprep.subr.mxu0 0.0
  %613 = vmatpush1.msra.mxu0 0.0
  %614 = vmatprep.subr.mxu0 0.0
  %615 = vmatpush1.msra.mxu0 0.0
  %616 = vmatprep.subr.mxu0 0.0
  %617 = vmatpush1.msra.mxu0 0.0
  %618 = vmatprep.subr.mxu0 0.0
  %619 = vmatpush1.msra.mxu0 0.0
  %620 = vmatprep.subr.mxu0 0.0
  %621 = vmatpush1.msra.mxu0 0.0
  %622 = vmatprep.subr.mxu0 0.0
  %623 = vmatpush1.msra.mxu0 0.0
  %624 = vmatprep.subr.mxu0 0.0
  %625 = vmatpush1.msra.mxu0 0.0
  %626 = vmatprep.subr.mxu0 0.0
  %627 = vmatpush1.msra.mxu0 0.0
  %628 = vmatprep.subr.mxu0 0.0
  %629 = vmatpush1.msra.mxu0 0.0
  %630 = vmatprep.subr.mxu0 0.0
  %631 = vmatpush1.msra.mxu0 0.0
  %632 = vmatprep.subr.mxu0 0.0
  %633 = vmatpush1.msra.mxu0 0.0
  %634 = vmatprep.subr.mxu0 0.0
  %635 = vmatpush1.msra.mxu0 0.0
  %636 = vmatprep.mubr.f32.mxu0 0.0
  %637 = vmatmul.mubr.f32.gmra.mrb[0].mxu0 %v570
  %v638 = vpop.f32.mrb[0].mxu0
  %v639 = vadd.f32 %v51, %v638
  %v640 = vpop.f32.mrb[0].mxu0
  %641 = vdwg.mxu0
  %v642 = vadd.f32 %v566, %v639
  %v643 = vxor.u32 %v642, 2147483648
  %v644 = vmul.f32 %v643, 1.442695
  %v645 = vpow.pop %v644
  %v646 = vadd.f32 %v645, 1.0
  %v647 = vrcp.pop %v646
  %v648 = vmul.f32 1.0, %v647
  %650 = vrot.lane.b32.xlu0 %v639, 64
  %v651 = vpop.permute.xlu0 %650
  %v653 = vmul.f32 %v648, %v651
  %655 = vrot.lane.b32.xlu0 %v653, 64
  %v656 = vpop.permute.xlu0 %655
  %v658 = vadd.f32 %v566, %v656
  %v659 = vtanh.pop %v658
  %v660 = vsub.f32 1.0, %v648
  %662 = vrot.lane.b32.xlu0 %v659, 96
  %v663 = vpop.permute.xlu0 %662
  %v665 = vmul.f32 %v660, %v663
  %v666 = vmul.f32 %v648, %v564
  %v667 = vadd.f32 %v665, %v666
  %s668 = scalar_lea.vmem %s0, 48
  %v669 = vld [vmem:[%s668] sm:$0xff]
  %671 = vrot.lane.b32.xlu0 %v667, 96
  %v672 = vpop.permute.xlu0 %671
  %v673 = vsel %vm53, %v672, 0
  %675 = vmatprep.subr.mxu0 0.0
  %676 = vmatpush1.msra.mxu0 %v29
  %677 = vmatprep.subr.mxu0 0.0
  %678 = vmatpush1.msra.mxu0 %v30
  %679 = vmatprep.subr.mxu0 0.0
  %680 = vmatpush1.msra.mxu0 %v31
  %681 = vmatprep.subr.mxu0 0.0
  %682 = vmatpush1.msra.mxu0 %v32
  %683 = vmatprep.subr.mxu0 0.0
  %684 = vmatpush1.msra.mxu0 0.0
  %685 = vmatprep.subr.mxu0 0.0
  %686 = vmatpush1.msra.mxu0 0.0
  %687 = vmatprep.subr.mxu0 0.0
  %688 = vmatpush1.msra.mxu0 0.0
  %689 = vmatprep.subr.mxu0 0.0
  %690 = vmatpush1.msra.mxu0 0.0
  %691 = vmatprep.subr.mxu0 0.0
  %692 = vmatpush1.msra.mxu0 0.0
  %693 = vmatprep.subr.mxu0 0.0
  %694 = vmatpush1.msra.mxu0 0.0
  %695 = vmatprep.subr.mxu0 0.0
  %696 = vmatpush1.msra.mxu0 0.0
  %697 = vmatprep.subr.mxu0 0.0
  %698 = vmatpush1.msra.mxu0 0.0
  %699 = vmatprep.subr.mxu0 0.0
  %700 = vmatpush1.msra.mxu0 0.0
  %701 = vmatprep.subr.mxu0 0.0
  %702 = vmatpush1.msra.mxu0 0.0
  %703 = vmatprep.subr.mxu0 0.0
  %704 = vmatpush1.msra.mxu0 0.0
  %705 = vmatprep.subr.mxu0 0.0
  %706 = vmatpush1.msra.mxu0 0.0
  %707 = vmatprep.subr.mxu0 0.0
  %708 = vmatpush1.msra.mxu0 0.0
  %709 = vmatprep.subr.mxu0 0.0
  %710 = vmatpush1.msra.mxu0 0.0
  %711 = vmatprep.subr.mxu0 0.0
  %712 = vmatpush1.msra.mxu0 0.0
  %713 = vmatprep.subr.mxu0 0.0
  %714 = vmatpush1.msra.mxu0 0.0
  %715 = vmatprep.subr.mxu0 0.0
  %716 = vmatpush1.msra.mxu0 0.0
  %717 = vmatprep.subr.mxu0 0.0
  %718 = vmatpush1.msra.mxu0 0.0
  %719 = vmatprep.subr.mxu0 0.0
  %720 = vmatpush1.msra.mxu0 0.0
  %721 = vmatprep.subr.mxu0 0.0
  %722 = vmatpush1.msra.mxu0 0.0
  %723 = vmatprep.subr.mxu0 0.0
  %724 = vmatpush1.msra.mxu0 0.0
  %725 = vmatprep.subr.mxu0 0.0
  %726 = vmatpush1.msra.mxu0 0.0
  %727 = vmatprep.subr.mxu0 0.0
  %728 = vmatpush1.msra.mxu0 0.0
  %729 = vmatprep.subr.mxu0 0.0
  %730 = vmatpush1.msra.mxu0 0.0
  %731 = vmatprep.subr.mxu0 0.0
  %732 = vmatpush1.msra.mxu0 0.0
  %733 = vmatprep.subr.mxu0 0.0
  %734 = vmatpush1.msra.mxu0 0.0
  %735 = vmatprep.subr.mxu0 0.0
  %736 = vmatpush1.msra.mxu0 0.0
  %737 = vmatprep.subr.mxu0 0.0
  %738 = vmatpush1.msra.mxu0 0.0
  %739 = vmatprep.mubr.f32.mxu0 0.0
  %740 = vmatmul.mubr.f32.gmra.mrb[0].mxu0 %v673
  %v741 = vpop.f32.mrb[0].mxu0
  %v742 = vadd.f32 %v51, %v741
  %v743 = vpop.f32.mrb[0].mxu0
  %744 = vdwg.mxu0
  %v745 = vadd.f32 %v669, %v742
  %v746 = vxor.u32 %v745, 2147483648
  %v747 = vmul.f32 %v746, 1.442695
  %v748 = vpow.pop %v747
  %v749 = vadd.f32 %v748, 1.0
  %v750 = vrcp.pop %v749
  %v751 = vmul.f32 1.0, %v750
  %753 = vrot.lane.b32.xlu0 %v742, 64
  %v754 = vpop.permute.xlu0 %753
  %v756 = vmul.f32 %v751, %v754
  %758 = vrot.lane.b32.xlu0 %v756, 64
  %v759 = vpop.permute.xlu0 %758
  %v761 = vadd.f32 %v669, %v759
  %v762 = vtanh.pop %v761
  %v763 = vsub.f32 1.0, %v751
  %765 = vrot.lane.b32.xlu0 %v762, 96
  %v766 = vpop.permute.xlu0 %765
  %v768 = vmul.f32 %v763, %v766
  %v769 = vmul.f32 %v751, %v667
  %v770 = vadd.f32 %v768, %v769
  %s771 = scalar_lea.vmem %s0, 56
  %v772 = vld [vmem:[%s771] sm:$0xff]
  %774 = vrot.lane.b32.xlu0 %v770, 96
  %v775 = vpop.permute.xlu0 %774
  %v776 = vsel %vm53, %v775, 0
  %778 = vmatprep.subr.mxu0 0.0
  %779 = vmatpush1.msra.mxu0 %v29
  %780 = vmatprep.subr.mxu0 0.0
  %781 = vmatpush1.msra.mxu0 %v30
  %782 = vmatprep.subr.mxu0 0.0
  %783 = vmatpush1.msra.mxu0 %v31
  %784 = vmatprep.subr.mxu0 0.0
  %785 = vmatpush1.msra.mxu0 %v32
  %786 = vmatprep.subr.mxu0 0.0
  %787 = vmatpush1.msra.mxu0 0.0
  %788 = vmatprep.subr.mxu0 0.0
  %789 = vmatpush1.msra.mxu0 0.0
  %790 = vmatprep.subr.mxu0 0.0
  %791 = vmatpush1.msra.mxu0 0.0
  %792 = vmatprep.subr.mxu0 0.0
  %793 = vmatpush1.msra.mxu0 0.0
  %794 = vmatprep.subr.mxu0 0.0
  %795 = vmatpush1.msra.mxu0 0.0
  %796 = vmatprep.subr.mxu0 0.0
  %797 = vmatpush1.msra.mxu0 0.0
  %798 = vmatprep.subr.mxu0 0.0
  %799 = vmatpush1.msra.mxu0 0.0
  %800 = vmatprep.subr.mxu0 0.0
  %801 = vmatpush1.msra.mxu0 0.0
  %802 = vmatprep.subr.mxu0 0.0
  %803 = vmatpush1.msra.mxu0 0.0
  %804 = vmatprep.subr.mxu0 0.0
  %805 = vmatpush1.msra.mxu0 0.0
  %806 = vmatprep.subr.mxu0 0.0
  %807 = vmatpush1.msra.mxu0 0.0
  %808 = vmatprep.subr.mxu0 0.0
  %809 = vmatpush1.msra.mxu0 0.0
  %810 = vmatprep.subr.mxu0 0.0
  %811 = vmatpush1.msra.mxu0 0.0
  %812 = vmatprep.subr.mxu0 0.0
  %813 = vmatpush1.msra.mxu0 0.0
  %814 = vmatprep.subr.mxu0 0.0
  %815 = vmatpush1.msra.mxu0 0.0
  %816 = vmatprep.subr.mxu0 0.0
  %817 = vmatpush1.msra.mxu0 0.0
  %818 = vmatprep.subr.mxu0 0.0
  %819 = vmatpush1.msra.mxu0 0.0
  %820 = vmatprep.subr.mxu0 0.0
  %821 = vmatpush1.msra.mxu0 0.0
  %822 = vmatprep.subr.mxu0 0.0
  %823 = vmatpush1.msra.mxu0 0.0
  %824 = vmatprep.subr.mxu0 0.0
  %825 = vmatpush1.msra.mxu0 0.0
  %826 = vmatprep.subr.mxu0 0.0
  %827 = vmatpush1.msra.mxu0 0.0
  %828 = vmatprep.subr.mxu0 0.0
  %829 = vmatpush1.msra.mxu0 0.0
  %830 = vmatprep.subr.mxu0 0.0
  %831 = vmatpush1.msra.mxu0 0.0
  %832 = vmatprep.subr.mxu0 0.0
  %833 = vmatpush1.msra.mxu0 0.0
  %834 = vmatprep.subr.mxu0 0.0
  %835 = vmatpush1.msra.mxu0 0.0
  %836 = vmatprep.subr.mxu0 0.0
  %837 = vmatpush1.msra.mxu0 0.0
  %838 = vmatprep.subr.mxu0 0.0
  %839 = vmatpush1.msra.mxu0 0.0
  %840 = vmatprep.subr.mxu0 0.0
  %841 = vmatpush1.msra.mxu0 0.0
  %842 = vmatprep.mubr.f32.mxu0 0.0
  %843 = vmatmul.mubr.f32.gmra.mrb[0].mxu0 %v776
  %v844 = vpop.f32.mrb[0].mxu0
  %v845 = vadd.f32 %v51, %v844
  %v846 = vpop.f32.mrb[0].mxu0
  %847 = vdwg.mxu0
  %v848 = vadd.f32 %v772, %v845
  %v849 = vxor.u32 %v848, 2147483648
  %v850 = vmul.f32 %v849, 1.442695
  %v851 = vpow.pop %v850
  %v852 = vadd.f32 %v851, 1.0
  %v853 = vrcp.pop %v852
  %v854 = vmul.f32 1.0, %v853
  %856 = vrot.lane.b32.xlu0 %v845, 64
  %v857 = vpop.permute.xlu0 %856
  %v859 = vmul.f32 %v854, %v857
  %861 = vrot.lane.b32.xlu0 %v859, 64
  %v862 = vpop.permute.xlu0 %861
  %v864 = vadd.f32 %v772, %v862
  %v865 = vtanh.pop %v864
  %v866 = vsub.f32 1.0, %v854
  %868 = vrot.lane.b32.xlu0 %v865, 96
  %v869 = vpop.permute.xlu0 %868
  %v871 = vmul.f32 %v866, %v869
  %v872 = vmul.f32 %v854, %v770
  %v873 = vadd.f32 %v871, %v872
  %v874 = vlaneseq
  %v875 = vand.u32 %v874, 127
  %vm876 = vcmp.eq.s32.totalorder %v875, 1
  %v877 = vsel %vm876, 1, 0
  %v878 = vcvt.s32.f32 %v877
  %vm879 = vcmask 130048
  %v881 = vsel %vm879, %v878, 0
  %883 = vmatprep.subr.mxu0 0.0
  %884 = vmatpush1.msra.mxu0 %v39
  %885 = vmatprep.subr.mxu0 0.0
  %886 = vmatpush1.msra.mxu0 %v40
  %887 = vmatprep.subr.mxu0 0.0
  %888 = vmatpush1.msra.mxu0 0.0
  %889 = vmatprep.subr.mxu0 0.0
  %890 = vmatpush1.msra.mxu0 0.0
  %891 = vmatprep.subr.mxu0 0.0
  %892 = vmatpush1.msra.mxu0 0.0
  %893 = vmatprep.subr.mxu0 0.0
  %894 = vmatpush1.msra.mxu0 0.0
  %895 = vmatprep.subr.mxu0 0.0
  %896 = vmatpush1.msra.mxu0 0.0
  %897 = vmatprep.subr.mxu0 0.0
  %898 = vmatpush1.msra.mxu0 0.0
  %899 = vmatprep.subr.mxu0 0.0
  %900 = vmatpush1.msra.mxu0 0.0
  %901 = vmatprep.subr.mxu0 0.0
  %902 = vmatpush1.msra.mxu0 0.0
  %903 = vmatprep.subr.mxu0 0.0
  %904 = vmatpush1.msra.mxu0 0.0
  %905 = vmatprep.subr.mxu0 0.0
  %906 = vmatpush1.msra.mxu0 0.0
  %907 = vmatprep.subr.mxu0 0.0
  %908 = vmatpush1.msra.mxu0 0.0
  %909 = vmatprep.subr.mxu0 0.0
  %910 = vmatpush1.msra.mxu0 0.0
  %911 = vmatprep.subr.mxu0 0.0
  %912 = vmatpush1.msra.mxu0 0.0
  %913 = vmatprep.subr.mxu0 0.0
  %914 = vmatpush1.msra.mxu0 0.0
  %915 = vmatprep.subr.mxu0 0.0
  %916 = vmatpush1.msra.mxu0 0.0
  %917 = vmatprep.subr.mxu0 0.0
  %918 = vmatpush1.msra.mxu0 0.0
  %919 = vmatprep.subr.mxu0 0.0
  %920 = vmatpush1.msra.mxu0 0.0
  %921 = vmatprep.subr.mxu0 0.0
  %922 = vmatpush1.msra.mxu0 0.0
  %923 = vmatprep.subr.mxu0 0.0
  %924 = vmatpush1.msra.mxu0 0.0
  %925 = vmatprep.subr.mxu0 0.0
  %926 = vmatpush1.msra.mxu0 0.0
  %927 = vmatprep.subr.mxu0 0.0
  %928 = vmatpush1.msra.mxu0 0.0
  %929 = vmatprep.subr.mxu0 0.0
  %930 = vmatpush1.msra.mxu0 0.0
  %931 = vmatprep.subr.mxu0 0.0
  %932 = vmatpush1.msra.mxu0 0.0
  %933 = vmatprep.subr.mxu0 0.0
  %934 = vmatpush1.msra.mxu0 0.0
  %935 = vmatprep.subr.mxu0 0.0
  %936 = vmatpush1.msra.mxu0 0.0
  %937 = vmatprep.subr.mxu0 0.0
  %938 = vmatpush1.msra.mxu0 0.0
  %939 = vmatprep.subr.mxu0 0.0
  %940 = vmatpush1.msra.mxu0 0.0
  %941 = vmatprep.subr.mxu0 0.0
  %942 = vmatpush1.msra.mxu0 0.0
  %943 = vmatprep.subr.mxu0 0.0
  %944 = vmatpush1.msra.mxu0 0.0
  %945 = vmatprep.subr.mxu0 0.0
  %946 = vmatpush1.msra.mxu0 0.0
  %947 = vmatprep.mubr.f32.mxu0 0.0
  %948 = vmatmul.mubr.f32.gmra.mrb[0].mxu0 %v881
  %v949 = vpop.f32.mrb[0].mxu0
  %v950 = vadd.f32 0.0, %v949
  %v951 = vpop.f32.mrb[0].mxu0
  %952 = vdwg.mxu0
  %v954 = vlaneseq
  %v955 = vshrl.u32 %v954, 7
  %v956 = vsub.s32 0, %v955
  %v957 = vrot.slane %v38, %v956
  %960 = vrot.lane.b32.xlu0 %v873, 96
  %v961 = vpop.permute.xlu0 %960
  %v962 = vsel %vm53, %v961, 0
  %964 = vmatprep.subr.mxu0 0.0
  %965 = vmatpush1.msra.mxu0 %v34
  %966 = vmatprep.subr.mxu0 0.0
  %967 = vmatpush1.msra.mxu0 %v35
  %968 = vmatprep.subr.mxu0 0.0
  %969 = vmatpush1.msra.mxu0 %v36
  %970 = vmatprep.subr.mxu0 0.0
  %971 = vmatpush1.msra.mxu0 %v37
  %972 = vmatprep.subr.mxu0 0.0
  %973 = vmatpush1.msra.mxu0 0.0
  %974 = vmatprep.subr.mxu0 0.0
  %975 = vmatpush1.msra.mxu0 0.0
  %976 = vmatprep.subr.mxu0 0.0
  %977 = vmatpush1.msra.mxu0 0.0
  %978 = vmatprep.subr.mxu0 0.0
  %979 = vmatpush1.msra.mxu0 0.0
  %980 = vmatprep.subr.mxu0 0.0
  %981 = vmatpush1.msra.mxu0 0.0
  %982 = vmatprep.subr.mxu0 0.0
  %983 = vmatpush1.msra.mxu0 0.0
  %984 = vmatprep.subr.mxu0 0.0
  %985 = vmatpush1.msra.mxu0 0.0
  %986 = vmatprep.subr.mxu0 0.0
  %987 = vmatpush1.msra.mxu0 0.0
  %988 = vmatprep.subr.mxu0 0.0
  %989 = vmatpush1.msra.mxu0 0.0
  %990 = vmatprep.subr.mxu0 0.0
  %991 = vmatpush1.msra.mxu0 0.0
  %992 = vmatprep.subr.mxu0 0.0
  %993 = vmatpush1.msra.mxu0 0.0
  %994 = vmatprep.subr.mxu0 0.0
  %995 = vmatpush1.msra.mxu0 0.0
  %996 = vmatprep.subr.mxu0 0.0
  %997 = vmatpush1.msra.mxu0 0.0
  %998 = vmatprep.subr.mxu0 0.0
  %999 = vmatpush1.msra.mxu0 0.0
  %1000 = vmatprep.subr.mxu0 0.0
  %1001 = vmatpush1.msra.mxu0 0.0
  %1002 = vmatprep.subr.mxu0 0.0
  %1003 = vmatpush1.msra.mxu0 0.0
  %1004 = vmatprep.subr.mxu0 0.0
  %1005 = vmatpush1.msra.mxu0 0.0
  %1006 = vmatprep.subr.mxu0 0.0
  %1007 = vmatpush1.msra.mxu0 0.0
  %1008 = vmatprep.subr.mxu0 0.0
  %1009 = vmatpush1.msra.mxu0 0.0
  %1010 = vmatprep.subr.mxu0 0.0
  %1011 = vmatpush1.msra.mxu0 0.0
  %1012 = vmatprep.subr.mxu0 0.0
  %1013 = vmatpush1.msra.mxu0 0.0
  %1014 = vmatprep.subr.mxu0 0.0
  %1015 = vmatpush1.msra.mxu0 0.0
  %1016 = vmatprep.subr.mxu0 0.0
  %1017 = vmatpush1.msra.mxu0 0.0
  %1018 = vmatprep.subr.mxu0 0.0
  %1019 = vmatpush1.msra.mxu0 0.0
  %1020 = vmatprep.subr.mxu0 0.0
  %1021 = vmatpush1.msra.mxu0 0.0
  %1022 = vmatprep.subr.mxu0 0.0
  %1023 = vmatpush1.msra.mxu0 0.0
  %1024 = vmatprep.subr.mxu0 0.0
  %1025 = vmatpush1.msra.mxu0 0.0
  %1026 = vmatprep.subr.mxu0 0.0
  %1027 = vmatpush1.msra.mxu0 0.0
  %1028 = vmatprep.mubr.f32.mxu0 0.0
  %1029 = vmatmul.mubr.f32.gmra.mrb[0].mxu0 %v962
  %v1030 = vpop.f32.mrb[0].mxu0
  %v1031 = vadd.f32 %v957, %v1030
  %v1032 = vpop.f32.mrb[0].mxu0
  %1033 = vdwg.mxu0
  %v1034 = vadd.f32 %v950, %v1031
  %v1035 = vxor.u32 %v1034, 2147483648
  %v1036 = vmul.f32 %v1035, 1.442695
  %v1037 = vpow.pop %v1036
  %v1038 = vadd.f32 %v1037, 1.0
  %v1039 = vrcp.pop %v1038
  %v1040 = vmul.f32 1.0, %v1039
  %1042 = vrot.lane.b32.xlu0 %v1031, 64
  %v1043 = vpop.permute.xlu0 %1042
  %v1045 = vmul.f32 %v1040, %v1043
  %1047 = vrot.lane.b32.xlu0 %v1045, 64
  %v1048 = vpop.permute.xlu0 %1047
  %v1050 = vadd.f32 %v950, %v1048
  %v1051 = vtanh.pop %v1050
  %v1052 = vsub.f32 1.0, %v1040
  %1054 = vrot.lane.b32.xlu0 %v1051, 96
  %v1055 = vpop.permute.xlu0 %1054
  %v1057 = vmul.f32 %v1052, %v1055
  %v1058 = vmul.f32 %v1040, %v873
  %v1059 = vadd.f32 %v1057, %v1058
  %v1061 = vlaneseq
  %v1062 = vshrl.u32 %v1061, 7
  %v1063 = vsub.s32 0, %v1062
  %v1064 = vrot.slane %v45, %v1063
  %1067 = vrot.lane.b32.xlu0 %v1059, 96
  %v1068 = vpop.permute.xlu0 %1067
  %v1069 = vsel %vm53, %v1068, 0
  %1071 = vmatprep.subr.mxu0 0.0
  %1072 = vmatpush1.msra.mxu0 %v41
  %1073 = vmatprep.subr.mxu0 0.0
  %1074 = vmatpush1.msra.mxu0 %v42
  %1075 = vmatprep.subr.mxu0 0.0
  %1076 = vmatpush1.msra.mxu0 %v43
  %1077 = vmatprep.subr.mxu0 0.0
  %1078 = vmatpush1.msra.mxu0 %v44
  %1079 = vmatprep.subr.mxu0 0.0
  %1080 = vmatpush1.msra.mxu0 0.0
  %1081 = vmatprep.subr.mxu0 0.0
  %1082 = vmatpush1.msra.mxu0 0.0
  %1083 = vmatprep.subr.mxu0 0.0
  %1084 = vmatpush1.msra.mxu0 0.0
  %1085 = vmatprep.subr.mxu0 0.0
  %1086 = vmatpush1.msra.mxu0 0.0
  %1087 = vmatprep.subr.mxu0 0.0
  %1088 = vmatpush1.msra.mxu0 0.0
  %1089 = vmatprep.subr.mxu0 0.0
  %1090 = vmatpush1.msra.mxu0 0.0
  %1091 = vmatprep.subr.mxu0 0.0
  %1092 = vmatpush1.msra.mxu0 0.0
  %1093 = vmatprep.subr.mxu0 0.0
  %1094 = vmatpush1.msra.mxu0 0.0
  %1095 = vmatprep.subr.mxu0 0.0
  %1096 = vmatpush1.msra.mxu0 0.0
  %1097 = vmatprep.subr.mxu0 0.0
  %1098 = vmatpush1.msra.mxu0 0.0
  %1099 = vmatprep.subr.mxu0 0.0
  %1100 = vmatpush1.msra.mxu0 0.0
  %1101 = vmatprep.subr.mxu0 0.0
  %1102 = vmatpush1.msra.mxu0 0.0
  %1103 = vmatprep.subr.mxu0 0.0
  %1104 = vmatpush1.msra.mxu0 0.0
  %1105 = vmatprep.subr.mxu0 0.0
  %1106 = vmatpush1.msra.mxu0 0.0
  %1107 = vmatprep.subr.mxu0 0.0
  %1108 = vmatpush1.msra.mxu0 0.0
  %1109 = vmatprep.subr.mxu0 0.0
  %1110 = vmatpush1.msra.mxu0 0.0
  %1111 = vmatprep.subr.mxu0 0.0
  %1112 = vmatpush1.msra.mxu0 0.0
  %1113 = vmatprep.subr.mxu0 0.0
  %1114 = vmatpush1.msra.mxu0 0.0
  %1115 = vmatprep.subr.mxu0 0.0
  %1116 = vmatpush1.msra.mxu0 0.0
  %1117 = vmatprep.subr.mxu0 0.0
  %1118 = vmatpush1.msra.mxu0 0.0
  %1119 = vmatprep.subr.mxu0 0.0
  %1120 = vmatpush1.msra.mxu0 0.0
  %1121 = vmatprep.subr.mxu0 0.0
  %1122 = vmatpush1.msra.mxu0 0.0
  %1123 = vmatprep.subr.mxu0 0.0
  %1124 = vmatpush1.msra.mxu0 0.0
  %1125 = vmatprep.subr.mxu0 0.0
  %1126 = vmatpush1.msra.mxu0 0.0
  %1127 = vmatprep.subr.mxu0 0.0
  %1128 = vmatpush1.msra.mxu0 0.0
  %1129 = vmatprep.subr.mxu0 0.0
  %1130 = vmatpush1.msra.mxu0 0.0
  %1131 = vmatprep.subr.mxu0 0.0
  %1132 = vmatpush1.msra.mxu0 0.0
  %1133 = vmatprep.subr.mxu0 0.0
  %1134 = vmatpush1.msra.mxu0 0.0
  %1135 = vmatprep.mubr.f32.mxu0 0.0
  %1136 = vmatmul.mubr.f32.gmra.mrb[0].mxu0 %v1069
  %v1137 = vpop.f32.mrb[0].mxu0
  %v1138 = vadd.f32 %v1064, %v1137
  %v1139 = vpop.f32.mrb[0].mxu0
  %1140 = vdwg.mxu0
  %v1141 = vsel %vm879, %v1138, -inf
  %1142 = vmax.xlane.f32.xlu0 %v1141
  %v1143 = vpop.xlane.xlu0 %1142
  %v1144 = vsub.f32 %v1138, %v1143
  %v1145 = vmul.f32 %v1144, 1.442695
  %v1146 = vpow.pop %v1145
  %v1147 = vsel %vm879, %v1146, 0.0
  %1148 = vadd.xlane.f32.xlu0 %v1147
  %v1149 = vpop.xlane.xlu0 %1148
  %v1150 = vlog2.pop %v1149
  %v1151 = vmul.f32 %v1150, 0.6931472
  %v1152 = vadd.f32 %v1143, %v1151
  %v1153 = vsub.f32 %v1138, %v1152
  %vm1154 = vcmp.eq.f32.partialorder %v1138, %v1143
  %v1155 = vsel %vm1154, %v875, 16
  %v1156 = vsel %vm879, %v1155, 2147483647
  %v1157 = vand.u32 %v1156, 65535
  %v1158 = vshra.s32 %v1156, 16
  %v1159 = vcvt.s32.f32 %v1157
  %v1160 = vcvt.s32.f32 %v1158
  %1161 = vmin.xlane.f32.xlu0 %v1160
  %v1162 = vpop.xlane.xlu0 %1161
  %vm1163 = vcmp.eq.f32.partialorder %v1160, %v1162
  %v1164 = vsel %vm1163, %v1159, inf
  %1165 = vmin.xlane.f32.xlu0 %v1164
  %v1166 = vpop.xlane.xlu0 %1165
  %v1167 = vcvt.f32.s32 %v1166
  %v1168 = vcvt.f32.s32 %v1162
  %v1169 = vshll.u32 %v1168, 16
  %v1170 = vadd.s32 %v1169, %v1167
  %vm1171 = vcmp.eq.s32.totalorder %v875, %v1170
  %v1172 = vsel %vm1171, 1, 0
  %v1173 = vcvt.s32.f32 %v1172
  %v1175 = vsel %vm879, %v1173, 0
  %1177 = vmatprep.subr.mxu0 0.0
  %1178 = vmatpush1.msra.mxu0 %v39
  %1179 = vmatprep.subr.mxu0 0.0
  %1180 = vmatpush1.msra.mxu0 %v40
  %1181 = vmatprep.subr.mxu0 0.0
  %1182 = vmatpush1.msra.mxu0 0.0
  %1183 = vmatprep.subr.mxu0 0.0
  %1184 = vmatpush1.msra.mxu0 0.0
  %1185 = vmatprep.subr.mxu0 0.0
  %1186 = vmatpush1.msra.mxu0 0.0
  %1187 = vmatprep.subr.mxu0 0.0
  %1188 = vmatpush1.msra.mxu0 0.0
  %1189 = vmatprep.subr.mxu0 0.0
  %1190 = vmatpush1.msra.mxu0 0.0
  %1191 = vmatprep.subr.mxu0 0.0
  %1192 = vmatpush1.msra.mxu0 0.0
  %1193 = vmatprep.subr.mxu0 0.0
  %1194 = vmatpush1.msra.mxu0 0.0
  %1195 = vmatprep.subr.mxu0 0.0
  %1196 = vmatpush1.msra.mxu0 0.0
  %1197 = vmatprep.subr.mxu0 0.0
  %1198 = vmatpush1.msra.mxu0 0.0
  %1199 = vmatprep.subr.mxu0 0.0
  %1200 = vmatpush1.msra.mxu0 0.0
  %1201 = vmatprep.subr.mxu0 0.0
  %1202 = vmatpush1.msra.mxu0 0.0
  %1203 = vmatprep.subr.mxu0 0.0
  %1204 = vmatpush1.msra.mxu0 0.0
  %1205 = vmatprep.subr.mxu0 0.0
  %1206 = vmatpush1.msra.mxu0 0.0
  %1207 = vmatprep.subr.mxu0 0.0
  %1208 = vmatpush1.msra.mxu0 0.0
  %1209 = vmatprep.subr.mxu0 0.0
  %1210 = vmatpush1.msra.mxu0 0.0
  %1211 = vmatprep.subr.mxu0 0.0
  %1212 = vmatpush1.msra.mxu0 0.0
  %1213 = vmatprep.subr.mxu0 0.0
  %1214 = vmatpush1.msra.mxu0 0.0
  %1215 = vmatprep.subr.mxu0 0.0
  %1216 = vmatpush1.msra.mxu0 0.0
  %1217 = vmatprep.subr.mxu0 0.0
  %1218 = vmatpush1.msra.mxu0 0.0
  %1219 = vmatprep.subr.mxu0 0.0
  %1220 = vmatpush1.msra.mxu0 0.0
  %1221 = vmatprep.subr.mxu0 0.0
  %1222 = vmatpush1.msra.mxu0 0.0
  %1223 = vmatprep.subr.mxu0 0.0
  %1224 = vmatpush1.msra.mxu0 0.0
  %1225 = vmatprep.subr.mxu0 0.0
  %1226 = vmatpush1.msra.mxu0 0.0
  %1227 = vmatprep.subr.mxu0 0.0
  %1228 = vmatpush1.msra.mxu0 0.0
  %1229 = vmatprep.subr.mxu0 0.0
  %1230 = vmatpush1.msra.mxu0 0.0
  %1231 = vmatprep.subr.mxu0 0.0
  %1232 = vmatpush1.msra.mxu0 0.0
  %1233 = vmatprep.subr.mxu0 0.0
  %1234 = vmatpush1.msra.mxu0 0.0
  %1235 = vmatprep.subr.mxu0 0.0
  %1236 = vmatpush1.msra.mxu0 0.0
  %1237 = vmatprep.subr.mxu0 0.0
  %1238 = vmatpush1.msra.mxu0 0.0
  %1239 = vmatprep.subr.mxu0 0.0
  %1240 = vmatpush1.msra.mxu0 0.0
  %1241 = vmatprep.mubr.f32.mxu0 0.0
  %1242 = vmatmul.mubr.f32.gmra.mrb[0].mxu0 %v1175
  %v1243 = vpop.f32.mrb[0].mxu0
  %v1244 = vadd.f32 0.0, %v1243
  %v1245 = vpop.f32.mrb[0].mxu0
  %1246 = vdwg.mxu0
  %1247 = vmatprep.subr.mxu0 0.0
  %1248 = vmatpush1.msra.mxu0 %v34
  %1249 = vmatprep.subr.mxu0 0.0
  %1250 = vmatpush1.msra.mxu0 %v35
  %1251 = vmatprep.subr.mxu0 0.0
  %1252 = vmatpush1.msra.mxu0 %v36
  %1253 = vmatprep.subr.mxu0 0.0
  %1254 = vmatpush1.msra.mxu0 %v37
  %1255 = vmatprep.subr.mxu0 0.0
  %1256 = vmatpush1.msra.mxu0 0.0
  %1257 = vmatprep.subr.mxu0 0.0
  %1258 = vmatpush1.msra.mxu0 0.0
  %1259 = vmatprep.subr.mxu0 0.0
  %1260 = vmatpush1.msra.mxu0 0.0
  %1261 = vmatprep.subr.mxu0 0.0
  %1262 = vmatpush1.msra.mxu0 0.0
  %1263 = vmatprep.subr.mxu0 0.0
  %1264 = vmatpush1.msra.mxu0 0.0
  %1265 = vmatprep.subr.mxu0 0.0
  %1266 = vmatpush1.msra.mxu0 0.0
  %1267 = vmatprep.subr.mxu0 0.0
  %1268 = vmatpush1.msra.mxu0 0.0
  %1269 = vmatprep.subr.mxu0 0.0
  %1270 = vmatpush1.msra.mxu0 0.0
  %1271 = vmatprep.subr.mxu0 0.0
  %1272 = vmatpush1.msra.mxu0 0.0
  %1273 = vmatprep.subr.mxu0 0.0
  %1274 = vmatpush1.msra.mxu0 0.0
  %1275 = vmatprep.subr.mxu0 0.0
  %1276 = vmatpush1.msra.mxu0 0.0
  %1277 = vmatprep.subr.mxu0 0.0
  %1278 = vmatpush1.msra.mxu0 0.0
  %1279 = vmatprep.subr.mxu0 0.0
  %1280 = vmatpush1.msra.mxu0 0.0
  %1281 = vmatprep.subr.mxu0 0.0
  %1282 = vmatpush1.msra.mxu0 0.0
  %1283 = vmatprep.subr.mxu0 0.0
  %1284 = vmatpush1.msra.mxu0 0.0
  %1285 = vmatprep.subr.mxu0 0.0
  %1286 = vmatpush1.msra.mxu0 0.0
  %1287 = vmatprep.subr.mxu0 0.0
  %1288 = vmatpush1.msra.mxu0 0.0
  %1289 = vmatprep.subr.mxu0 0.0
  %1290 = vmatpush1.msra.mxu0 0.0
  %1291 = vmatprep.subr.mxu0 0.0
  %1292 = vmatpush1.msra.mxu0 0.0
  %1293 = vmatprep.subr.mxu0 0.0
  %1294 = vmatpush1.msra.mxu0 0.0
  %1295 = vmatprep.subr.mxu0 0.0
  %1296 = vmatpush1.msra.mxu0 0.0
  %1297 = vmatprep.subr.mxu0 0.0
  %1298 = vmatpush1.msra.mxu0 0.0
  %1299 = vmatprep.subr.mxu0 0.0
  %1300 = vmatpush1.msra.mxu0 0.0
  %1301 = vmatprep.subr.mxu0 0.0
  %1302 = vmatpush1.msra.mxu0 0.0
  %1303 = vmatprep.subr.mxu0 0.0
  %1304 = vmatpush1.msra.mxu0 0.0
  %1305 = vmatprep.subr.mxu0 0.0
  %1306 = vmatpush1.msra.mxu0 0.0
  %1307 = vmatprep.subr.mxu0 0.0
  %1308 = vmatpush1.msra.mxu0 0.0
  %1309 = vmatprep.subr.mxu0 0.0
  %1310 = vmatpush1.msra.mxu0 0.0
  %1311 = vmatprep.mubr.f32.mxu0 0.0
  %1312 = vmatmul.mubr.f32.gmra.mrb[0].mxu0 %v1069
  %v1313 = vpop.f32.mrb[0].mxu0
  %v1314 = vadd.f32 %v957, %v1313
  %v1315 = vpop.f32.mrb[0].mxu0
  %1316 = vdwg.mxu0
  %v1317 = vadd.f32 %v1244, %v1314
  %v1318 = vxor.u32 %v1317, 2147483648
  %v1319 = vmul.f32 %v1318, 1.442695
  %v1320 = vpow.pop %v1319
  %v1321 = vadd.f32 %v1320, 1.0
  %v1322 = vrcp.pop %v1321
  %v1323 = vmul.f32 1.0, %v1322
  %1325 = vrot.lane.b32.xlu0 %v1314, 64
  %v1326 = vpop.permute.xlu0 %1325
  %v1328 = vmul.f32 %v1323, %v1326
  %1330 = vrot.lane.b32.xlu0 %v1328, 64
  %v1331 = vpop.permute.xlu0 %1330
  %v1333 = vadd.f32 %v1244, %v1331
  %v1334 = vtanh.pop %v1333
  %v1335 = vsub.f32 1.0, %v1323
  %1337 = vrot.lane.b32.xlu0 %v1334, 96
  %v1338 = vpop.permute.xlu0 %1337
  %v1340 = vmul.f32 %v1335, %v1338
  %v1341 = vmul.f32 %v1323, %v1059
  %v1342 = vadd.f32 %v1340, %v1341
  %1344 = vrot.lane.b32.xlu0 %v1342, 96
  %v1345 = vpop.permute.xlu0 %1344
  %v1346 = vsel %vm53, %v1345, 0
  %1348 = vmatprep.subr.mxu0 0.0
  %1349 = vmatpush1.msra.mxu0 %v41
  %1350 = vmatprep.subr.mxu0 0.0
  %1351 = vmatpush1.msra.mxu0 %v42
  %1352 = vmatprep.subr.mxu0 0.0
  %1353 = vmatpush1.msra.mxu0 %v43
  %1354 = vmatprep.subr.mxu0 0.0
  %1355 = vmatpush1.msra.mxu0 %v44
  %1356 = vmatprep.subr.mxu0 0.0
  %1357 = vmatpush1.msra.mxu0 0.0
  %1358 = vmatprep.subr.mxu0 0.0
  %1359 = vmatpush1.msra.mxu0 0.0
  %1360 = vmatprep.subr.mxu0 0.0
  %1361 = vmatpush1.msra.mxu0 0.0
  %1362 = vmatprep.subr.mxu0 0.0
  %1363 = vmatpush1.msra.mxu0 0.0
  %1364 = vmatprep.subr.mxu0 0.0
  %1365 = vmatpush1.msra.mxu0 0.0
  %1366 = vmatprep.subr.mxu0 0.0
  %1367 = vmatpush1.msra.mxu0 0.0
  %1368 = vmatprep.subr.mxu0 0.0
  %1369 = vmatpush1.msra.mxu0 0.0
  %1370 = vmatprep.subr.mxu0 0.0
  %1371 = vmatpush1.msra.mxu0 0.0
  %1372 = vmatprep.subr.mxu0 0.0
  %1373 = vmatpush1.msra.mxu0 0.0
  %1374 = vmatprep.subr.mxu0 0.0
  %1375 = vmatpush1.msra.mxu0 0.0
  %1376 = vmatprep.subr.mxu0 0.0
  %1377 = vmatpush1.msra.mxu0 0.0
  %1378 = vmatprep.subr.mxu0 0.0
  %1379 = vmatpush1.msra.mxu0 0.0
  %1380 = vmatprep.subr.mxu0 0.0
  %1381 = vmatpush1.msra.mxu0 0.0
  %1382 = vmatprep.subr.mxu0 0.0
  %1383 = vmatpush1.msra.mxu0 0.0
  %1384 = vmatprep.subr.mxu0 0.0
  %1385 = vmatpush1.msra.mxu0 0.0
  %1386 = vmatprep.subr.mxu0 0.0
  %1387 = vmatpush1.msra.mxu0 0.0
  %1388 = vmatprep.subr.mxu0 0.0
  %1389 = vmatpush1.msra.mxu0 0.0
  %1390 = vmatprep.subr.mxu0 0.0
  %1391 = vmatpush1.msra.mxu0 0.0
  %1392 = vmatprep.subr.mxu0 0.0
  %1393 = vmatpush1.msra.mxu0 0.0
  %1394 = vmatprep.subr.mxu0 0.0
  %1395 = vmatpush1.msra.mxu0 0.0
  %1396 = vmatprep.subr.mxu0 0.0
  %1397 = vmatpush1.msra.mxu0 0.0
  %1398 = vmatprep.subr.mxu0 0.0
  %1399 = vmatpush1.msra.mxu0 0.0
  %1400 = vmatprep.subr.mxu0 0.0
  %1401 = vmatpush1.msra.mxu0 0.0
  %1402 = vmatprep.subr.mxu0 0.0
  %1403 = vmatpush1.msra.mxu0 0.0
  %1404 = vmatprep.subr.mxu0 0.0
  %1405 = vmatpush1.msra.mxu0 0.0
  %1406 = vmatprep.subr.mxu0 0.0
  %1407 = vmatpush1.msra.mxu0 0.0
  %1408 = vmatprep.subr.mxu0 0.0
  %1409 = vmatpush1.msra.mxu0 0.0
  %1410 = vmatprep.subr.mxu0 0.0
  %1411 = vmatpush1.msra.mxu0 0.0
  %1412 = vmatprep.mubr.f32.mxu0 0.0
  %1413 = vmatmul.mubr.f32.gmra.mrb[0].mxu0 %v1346
  %v1414 = vpop.f32.mrb[0].mxu0
  %v1415 = vadd.f32 %v1064, %v1414
  %v1416 = vpop.f32.mrb[0].mxu0
  %1417 = vdwg.mxu0
  %v1418 = vsel %vm879, %v1415, -inf
  %1419 = vmax.xlane.f32.xlu0 %v1418
  %v1420 = vpop.xlane.xlu0 %1419
  %v1421 = vsub.f32 %v1415, %v1420
  %v1422 = vmul.f32 %v1421, 1.442695
  %v1423 = vpow.pop %v1422
  %v1424 = vsel %vm879, %v1423, 0.0
  %1425 = vadd.xlane.f32.xlu0 %v1424
  %v1426 = vpop.xlane.xlu0 %1425
  %v1427 = vlog2.pop %v1426
  %v1428 = vmul.f32 %v1427, 0.6931472
  %v1429 = vadd.f32 %v1420, %v1428
  %v1430 = vsub.f32 %v1415, %v1429
  %vm1431 = vcmp.eq.f32.partialorder %v1415, %v1420
  %v1432 = vsel %vm1431, %v875, 16
  %v1433 = vsel %vm879, %v1432, 2147483647
  %v1434 = vand.u32 %v1433, 65535
  %v1435 = vshra.s32 %v1433, 16
  %v1436 = vcvt.s32.f32 %v1434
  %v1437 = vcvt.s32.f32 %v1435
  %1438 = vmin.xlane.f32.xlu0 %v1437
  %v1439 = vpop.xlane.xlu0 %1438
  %vm1440 = vcmp.eq.f32.partialorder %v1437, %v1439
  %v1441 = vsel %vm1440, %v1436, inf
  %1442 = vmin.xlane.f32.xlu0 %v1441
  %v1443 = vpop.xlane.xlu0 %1442
  %v1444 = vcvt.f32.s32 %v1443
  %v1445 = vcvt.f32.s32 %v1439
  %v1446 = vshll.u32 %v1445, 16
  %v1447 = vadd.s32 %v1446, %v1444
  %vm1448 = vcmp.eq.s32.totalorder %v875, %v1447
  %v1449 = vsel %vm1448, 1, 0
  %v1450 = vcvt.s32.f32 %v1449
  %v1452 = vsel %vm879, %v1450, 0
  %1454 = vmatprep.subr.mxu0 0.0
  %1455 = vmatpush1.msra.mxu0 %v39
  %1456 = vmatprep.subr.mxu0 0.0
  %1457 = vmatpush1.msra.mxu0 %v40
  %1458 = vmatprep.subr.mxu0 0.0
  %1459 = vmatpush1.msra.mxu0 0.0
  %1460 = vmatprep.subr.mxu0 0.0
  %1461 = vmatpush1.msra.mxu0 0.0
  %1462 = vmatprep.subr.mxu0 0.0
  %1463 = vmatpush1.msra.mxu0 0.0
  %1464 = vmatprep.subr.mxu0 0.0
  %1465 = vmatpush1.msra.mxu0 0.0
  %1466 = vmatprep.subr.mxu0 0.0
  %1467 = vmatpush1.msra.mxu0 0.0
  %1468 = vmatprep.subr.mxu0 0.0
  %1469 = vmatpush1.msra.mxu0 0.0
  %1470 = vmatprep.subr.mxu0 0.0
  %1471 = vmatpush1.msra.mxu0 0.0
  %1472 = vmatprep.subr.mxu0 0.0
  %1473 = vmatpush1.msra.mxu0 0.0
  %1474 = vmatprep.subr.mxu0 0.0
  %1475 = vmatpush1.msra.mxu0 0.0
  %1476 = vmatprep.subr.mxu0 0.0
  %1477 = vmatpush1.msra.mxu0 0.0
  %1478 = vmatprep.subr.mxu0 0.0
  %1479 = vmatpush1.msra.mxu0 0.0
  %1480 = vmatprep.subr.mxu0 0.0
  %1481 = vmatpush1.msra.mxu0 0.0
  %1482 = vmatprep.subr.mxu0 0.0
  %1483 = vmatpush1.msra.mxu0 0.0
  %1484 = vmatprep.subr.mxu0 0.0
  %1485 = vmatpush1.msra.mxu0 0.0
  %1486 = vmatprep.subr.mxu0 0.0
  %1487 = vmatpush1.msra.mxu0 0.0
  %1488 = vmatprep.subr.mxu0 0.0
  %1489 = vmatpush1.msra.mxu0 0.0
  %1490 = vmatprep.subr.mxu0 0.0
  %1491 = vmatpush1.msra.mxu0 0.0
  %1492 = vmatprep.subr.mxu0 0.0
  %1493 = vmatpush1.msra.mxu0 0.0
  %1494 = vmatprep.subr.mxu0 0.0
  %1495 = vmatpush1.msra.mxu0 0.0
  %1496 = vmatprep.subr.mxu0 0.0
  %1497 = vmatpush1.msra.mxu0 0.0
  %1498 = vmatprep.subr.mxu0 0.0
  %1499 = vmatpush1.msra.mxu0 0.0
  %1500 = vmatprep.subr.mxu0 0.0
  %1501 = vmatpush1.msra.mxu0 0.0
  %1502 = vmatprep.subr.mxu0 0.0
  %1503 = vmatpush1.msra.mxu0 0.0
  %1504 = vmatprep.subr.mxu0 0.0
  %1505 = vmatpush1.msra.mxu0 0.0
  %1506 = vmatprep.subr.mxu0 0.0
  %1507 = vmatpush1.msra.mxu0 0.0
  %1508 = vmatprep.subr.mxu0 0.0
  %1509 = vmatpush1.msra.mxu0 0.0
  %1510 = vmatprep.subr.mxu0 0.0
  %1511 = vmatpush1.msra.mxu0 0.0
  %1512 = vmatprep.subr.mxu0 0.0
  %1513 = vmatpush1.msra.mxu0 0.0
  %1514 = vmatprep.subr.mxu0 0.0
  %1515 = vmatpush1.msra.mxu0 0.0
  %1516 = vmatprep.subr.mxu0 0.0
  %1517 = vmatpush1.msra.mxu0 0.0
  %1518 = vmatprep.mubr.f32.mxu0 0.0
  %1519 = vmatmul.mubr.f32.gmra.mrb[0].mxu0 %v1452
  %v1520 = vpop.f32.mrb[0].mxu0
  %v1521 = vadd.f32 0.0, %v1520
  %v1522 = vpop.f32.mrb[0].mxu0
  %1523 = vdwg.mxu0
  %1524 = vmatprep.subr.mxu0 0.0
  %1525 = vmatpush1.msra.mxu0 %v34
  %1526 = vmatprep.subr.mxu0 0.0
  %1527 = vmatpush1.msra.mxu0 %v35
  %1528 = vmatprep.subr.mxu0 0.0
  %1529 = vmatpush1.msra.mxu0 %v36
  %1530 = vmatprep.subr.mxu0 0.0
  %1531 = vmatpush1.msra.mxu0 %v37
  %1532 = vmatprep.subr.mxu0 0.0
  %1533 = vmatpush1.msra.mxu0 0.0
  %1534 = vmatprep.subr.mxu0 0.0
  %1535 = vmatpush1.msra.mxu0 0.0
  %1536 = vmatprep.subr.mxu0 0.0
  %1537 = vmatpush1.msra.mxu0 0.0
  %1538 = vmatprep.subr.mxu0 0.0
  %1539 = vmatpush1.msra.mxu0 0.0
  %1540 = vmatprep.subr.mxu0 0.0
  %1541 = vmatpush1.msra.mxu0 0.0
  %1542 = vmatprep.subr.mxu0 0.0
  %1543 = vmatpush1.msra.mxu0 0.0
  %1544 = vmatprep.subr.mxu0 0.0
  %1545 = vmatpush1.msra.mxu0 0.0
  %1546 = vmatprep.subr.mxu0 0.0
  %1547 = vmatpush1.msra.mxu0 0.0
  %1548 = vmatprep.subr.mxu0 0.0
  %1549 = vmatpush1.msra.mxu0 0.0
  %1550 = vmatprep.subr.mxu0 0.0
  %1551 = vmatpush1.msra.mxu0 0.0
  %1552 = vmatprep.subr.mxu0 0.0
  %1553 = vmatpush1.msra.mxu0 0.0
  %1554 = vmatprep.subr.mxu0 0.0
  %1555 = vmatpush1.msra.mxu0 0.0
  %1556 = vmatprep.subr.mxu0 0.0
  %1557 = vmatpush1.msra.mxu0 0.0
  %1558 = vmatprep.subr.mxu0 0.0
  %1559 = vmatpush1.msra.mxu0 0.0
  %1560 = vmatprep.subr.mxu0 0.0
  %1561 = vmatpush1.msra.mxu0 0.0
  %1562 = vmatprep.subr.mxu0 0.0
  %1563 = vmatpush1.msra.mxu0 0.0
  %1564 = vmatprep.subr.mxu0 0.0
  %1565 = vmatpush1.msra.mxu0 0.0
  %1566 = vmatprep.subr.mxu0 0.0
  %1567 = vmatpush1.msra.mxu0 0.0
  %1568 = vmatprep.subr.mxu0 0.0
  %1569 = vmatpush1.msra.mxu0 0.0
  %1570 = vmatprep.subr.mxu0 0.0
  %1571 = vmatpush1.msra.mxu0 0.0
  %1572 = vmatprep.subr.mxu0 0.0
  %1573 = vmatpush1.msra.mxu0 0.0
  %1574 = vmatprep.subr.mxu0 0.0
  %1575 = vmatpush1.msra.mxu0 0.0
  %1576 = vmatprep.subr.mxu0 0.0
  %1577 = vmatpush1.msra.mxu0 0.0
  %1578 = vmatprep.subr.mxu0 0.0
  %1579 = vmatpush1.msra.mxu0 0.0
  %1580 = vmatprep.subr.mxu0 0.0
  %1581 = vmatpush1.msra.mxu0 0.0
  %1582 = vmatprep.subr.mxu0 0.0
  %1583 = vmatpush1.msra.mxu0 0.0
  %1584 = vmatprep.subr.mxu0 0.0
  %1585 = vmatpush1.msra.mxu0 0.0
  %1586 = vmatprep.subr.mxu0 0.0
  %1587 = vmatpush1.msra.mxu0 0.0
  %1588 = vmatprep.mubr.f32.mxu0 0.0
  %1589 = vmatmul.mubr.f32.gmra.mrb[0].mxu0 %v1346
  %v1590 = vpop.f32.mrb[0].mxu0
  %v1591 = vadd.f32 %v957, %v1590
  %v1592 = vpop.f32.mrb[0].mxu0
  %1593 = vdwg.mxu0
  %v1594 = vadd.f32 %v1521, %v1591
  %v1595 = vxor.u32 %v1594, 2147483648
  %v1596 = vmul.f32 %v1595, 1.442695
  %v1597 = vpow.pop %v1596
  %v1598 = vadd.f32 %v1597, 1.0
  %v1599 = vrcp.pop %v1598
  %v1600 = vmul.f32 1.0, %v1599
  %1602 = vrot.lane.b32.xlu0 %v1591, 64
  %v1603 = vpop.permute.xlu0 %1602
  %v1605 = vmul.f32 %v1600, %v1603
  %1607 = vrot.lane.b32.xlu0 %v1605, 64
  %v1608 = vpop.permute.xlu0 %1607
  %v1610 = vadd.f32 %v1521, %v1608
  %v1611 = vtanh.pop %v1610
  %v1612 = vsub.f32 1.0, %v1600
  %1614 = vrot.lane.b32.xlu0 %v1611, 96
  %v1615 = vpop.permute.xlu0 %1614
  %v1617 = vmul.f32 %v1612, %v1615
  %v1618 = vmul.f32 %v1600, %v1342
  %v1619 = vadd.f32 %v1617, %v1618
  %1621 = vrot.lane.b32.xlu0 %v1619, 96
  %v1622 = vpop.permute.xlu0 %1621
  %v1623 = vsel %vm53, %v1622, 0
  %1625 = vmatprep.subr.mxu0 0.0
  %1626 = vmatpush1.msra.mxu0 %v41
  %1627 = vmatprep.subr.mxu0 0.0
  %1628 = vmatpush1.msra.mxu0 %v42
  %1629 = vmatprep.subr.mxu0 0.0
  %1630 = vmatpush1.msra.mxu0 %v43
  %1631 = vmatprep.subr.mxu0 0.0
  %1632 = vmatpush1.msra.mxu0 %v44
  %1633 = vmatprep.subr.mxu0 0.0
  %1634 = vmatpush1.msra.mxu0 0.0
  %1635 = vmatprep.subr.mxu0 0.0
  %1636 = vmatpush1.msra.mxu0 0.0
  %1637 = vmatprep.subr.mxu0 0.0
  %1638 = vmatpush1.msra.mxu0 0.0
  %1639 = vmatprep.subr.mxu0 0.0
  %1640 = vmatpush1.msra.mxu0 0.0
  %1641 = vmatprep.subr.mxu0 0.0
  %1642 = vmatpush1.msra.mxu0 0.0
  %1643 = vmatprep.subr.mxu0 0.0
  %1644 = vmatpush1.msra.mxu0 0.0
  %1645 = vmatprep.subr.mxu0 0.0
  %1646 = vmatpush1.msra.mxu0 0.0
  %1647 = vmatprep.subr.mxu0 0.0
  %1648 = vmatpush1.msra.mxu0 0.0
  %1649 = vmatprep.subr.mxu0 0.0
  %1650 = vmatpush1.msra.mxu0 0.0
  %1651 = vmatprep.subr.mxu0 0.0
  %1652 = vmatpush1.msra.mxu0 0.0
  %1653 = vmatprep.subr.mxu0 0.0
  %1654 = vmatpush1.msra.mxu0 0.0
  %1655 = vmatprep.subr.mxu0 0.0
  %1656 = vmatpush1.msra.mxu0 0.0
  %1657 = vmatprep.subr.mxu0 0.0
  %1658 = vmatpush1.msra.mxu0 0.0
  %1659 = vmatprep.subr.mxu0 0.0
  %1660 = vmatpush1.msra.mxu0 0.0
  %1661 = vmatprep.subr.mxu0 0.0
  %1662 = vmatpush1.msra.mxu0 0.0
  %1663 = vmatprep.subr.mxu0 0.0
  %1664 = vmatpush1.msra.mxu0 0.0
  %1665 = vmatprep.subr.mxu0 0.0
  %1666 = vmatpush1.msra.mxu0 0.0
  %1667 = vmatprep.subr.mxu0 0.0
  %1668 = vmatpush1.msra.mxu0 0.0
  %1669 = vmatprep.subr.mxu0 0.0
  %1670 = vmatpush1.msra.mxu0 0.0
  %1671 = vmatprep.subr.mxu0 0.0
  %1672 = vmatpush1.msra.mxu0 0.0
  %1673 = vmatprep.subr.mxu0 0.0
  %1674 = vmatpush1.msra.mxu0 0.0
  %1675 = vmatprep.subr.mxu0 0.0
  %1676 = vmatpush1.msra.mxu0 0.0
  %1677 = vmatprep.subr.mxu0 0.0
  %1678 = vmatpush1.msra.mxu0 0.0
  %1679 = vmatprep.subr.mxu0 0.0
  %1680 = vmatpush1.msra.mxu0 0.0
  %1681 = vmatprep.subr.mxu0 0.0
  %1682 = vmatpush1.msra.mxu0 0.0
  %1683 = vmatprep.subr.mxu0 0.0
  %1684 = vmatpush1.msra.mxu0 0.0
  %1685 = vmatprep.subr.mxu0 0.0
  %1686 = vmatpush1.msra.mxu0 0.0
  %1687 = vmatprep.subr.mxu0 0.0
  %1688 = vmatpush1.msra.mxu0 0.0
  %1689 = vmatprep.mubr.f32.mxu0 0.0
  %1690 = vmatmul.mubr.f32.gmra.mrb[0].mxu0 %v1623
  %v1691 = vpop.f32.mrb[0].mxu0
  %v1692 = vadd.f32 %v1064, %v1691
  %v1693 = vpop.f32.mrb[0].mxu0
  %1694 = vdwg.mxu0
  %v1695 = vsel %vm879, %v1692, -inf
  %1696 = vmax.xlane.f32.xlu0 %v1695
  %v1697 = vpop.xlane.xlu0 %1696
  %v1698 = vsub.f32 %v1692, %v1697
  %v1699 = vmul.f32 %v1698, 1.442695
  %v1700 = vpow.pop %v1699
  %v1701 = vsel %vm879, %v1700, 0.0
  %1702 = vadd.xlane.f32.xlu0 %v1701
  %v1703 = vpop.xlane.xlu0 %1702
  %v1704 = vlog2.pop %v1703
  %v1705 = vmul.f32 %v1704, 0.6931472
  %v1706 = vadd.f32 %v1697, %v1705
  %v1707 = vsub.f32 %v1692, %v1706
  %vm1708 = vcmp.eq.f32.partialorder %v1692, %v1697
  %v1709 = vsel %vm1708, %v875, 16
  %v1710 = vsel %vm879, %v1709, 2147483647
  %v1711 = vand.u32 %v1710, 65535
  %v1712 = vshra.s32 %v1710, 16
  %v1713 = vcvt.s32.f32 %v1711
  %v1714 = vcvt.s32.f32 %v1712
  %1715 = vmin.xlane.f32.xlu0 %v1714
  %v1716 = vpop.xlane.xlu0 %1715
  %vm1717 = vcmp.eq.f32.partialorder %v1714, %v1716
  %v1718 = vsel %vm1717, %v1713, inf
  %1719 = vmin.xlane.f32.xlu0 %v1718
  %v1720 = vpop.xlane.xlu0 %1719
  %v1721 = vcvt.f32.s32 %v1720
  %v1722 = vcvt.f32.s32 %v1716
  %v1723 = vshll.u32 %v1722, 16
  %v1724 = vadd.s32 %v1723, %v1721
  %vm1725 = vcmp.eq.s32.totalorder %v875, %v1724
  %v1726 = vsel %vm1725, 1, 0
  %v1727 = vcvt.s32.f32 %v1726
  %v1729 = vsel %vm879, %v1727, 0
  %1731 = vmatprep.subr.mxu0 0.0
  %1732 = vmatpush1.msra.mxu0 %v39
  %1733 = vmatprep.subr.mxu0 0.0
  %1734 = vmatpush1.msra.mxu0 %v40
  %1735 = vmatprep.subr.mxu0 0.0
  %1736 = vmatpush1.msra.mxu0 0.0
  %1737 = vmatprep.subr.mxu0 0.0
  %1738 = vmatpush1.msra.mxu0 0.0
  %1739 = vmatprep.subr.mxu0 0.0
  %1740 = vmatpush1.msra.mxu0 0.0
  %1741 = vmatprep.subr.mxu0 0.0
  %1742 = vmatpush1.msra.mxu0 0.0
  %1743 = vmatprep.subr.mxu0 0.0
  %1744 = vmatpush1.msra.mxu0 0.0
  %1745 = vmatprep.subr.mxu0 0.0
  %1746 = vmatpush1.msra.mxu0 0.0
  %1747 = vmatprep.subr.mxu0 0.0
  %1748 = vmatpush1.msra.mxu0 0.0
  %1749 = vmatprep.subr.mxu0 0.0
  %1750 = vmatpush1.msra.mxu0 0.0
  %1751 = vmatprep.subr.mxu0 0.0
  %1752 = vmatpush1.msra.mxu0 0.0
  %1753 = vmatprep.subr.mxu0 0.0
  %1754 = vmatpush1.msra.mxu0 0.0
  %1755 = vmatprep.subr.mxu0 0.0
  %1756 = vmatpush1.msra.mxu0 0.0
  %1757 = vmatprep.subr.mxu0 0.0
  %1758 = vmatpush1.msra.mxu0 0.0
  %1759 = vmatprep.subr.mxu0 0.0
  %1760 = vmatpush1.msra.mxu0 0.0
  %1761 = vmatprep.subr.mxu0 0.0
  %1762 = vmatpush1.msra.mxu0 0.0
  %1763 = vmatprep.subr.mxu0 0.0
  %1764 = vmatpush1.msra.mxu0 0.0
  %1765 = vmatprep.subr.mxu0 0.0
  %1766 = vmatpush1.msra.mxu0 0.0
  %1767 = vmatprep.subr.mxu0 0.0
  %1768 = vmatpush1.msra.mxu0 0.0
  %1769 = vmatprep.subr.mxu0 0.0
  %1770 = vmatpush1.msra.mxu0 0.0
  %1771 = vmatprep.subr.mxu0 0.0
  %1772 = vmatpush1.msra.mxu0 0.0
  %1773 = vmatprep.subr.mxu0 0.0
  %1774 = vmatpush1.msra.mxu0 0.0
  %1775 = vmatprep.subr.mxu0 0.0
  %1776 = vmatpush1.msra.mxu0 0.0
  %1777 = vmatprep.subr.mxu0 0.0
  %1778 = vmatpush1.msra.mxu0 0.0
  %1779 = vmatprep.subr.mxu0 0.0
  %1780 = vmatpush1.msra.mxu0 0.0
  %1781 = vmatprep.subr.mxu0 0.0
  %1782 = vmatpush1.msra.mxu0 0.0
  %1783 = vmatprep.subr.mxu0 0.0
  %1784 = vmatpush1.msra.mxu0 0.0
  %1785 = vmatprep.subr.mxu0 0.0
  %1786 = vmatpush1.msra.mxu0 0.0
  %1787 = vmatprep.subr.mxu0 0.0
  %1788 = vmatpush1.msra.mxu0 0.0
  %1789 = vmatprep.subr.mxu0 0.0
  %1790 = vmatpush1.msra.mxu0 0.0
  %1791 = vmatprep.subr.mxu0 0.0
  %1792 = vmatpush1.msra.mxu0 0.0
  %1793 = vmatprep.subr.mxu0 0.0
  %1794 = vmatpush1.msra.mxu0 0.0
  %1795 = vmatprep.mubr.f32.mxu0 0.0
  %1796 = vmatmul.mubr.f32.gmra.mrb[0].mxu0 %v1729
  %v1797 = vpop.f32.mrb[0].mxu0
  %v1798 = vadd.f32 0.0, %v1797
  %v1799 = vpop.f32.mrb[0].mxu0
  %1800 = vdwg.mxu0
  %1801 = vmatprep.subr.mxu0 0.0
  %1802 = vmatpush1.msra.mxu0 %v34
  %1803 = vmatprep.subr.mxu0 0.0
  %1804 = vmatpush1.msra.mxu0 %v35
  %1805 = vmatprep.subr.mxu0 0.0
  %1806 = vmatpush1.msra.mxu0 %v36
  %1807 = vmatprep.subr.mxu0 0.0
  %1808 = vmatpush1.msra.mxu0 %v37
  %1809 = vmatprep.subr.mxu0 0.0
  %1810 = vmatpush1.msra.mxu0 0.0
  %1811 = vmatprep.subr.mxu0 0.0
  %1812 = vmatpush1.msra.mxu0 0.0
  %1813 = vmatprep.subr.mxu0 0.0
  %1814 = vmatpush1.msra.mxu0 0.0
  %1815 = vmatprep.subr.mxu0 0.0
  %1816 = vmatpush1.msra.mxu0 0.0
  %1817 = vmatprep.subr.mxu0 0.0
  %1818 = vmatpush1.msra.mxu0 0.0
  %1819 = vmatprep.subr.mxu0 0.0
  %1820 = vmatpush1.msra.mxu0 0.0
  %1821 = vmatprep.subr.mxu0 0.0
  %1822 = vmatpush1.msra.mxu0 0.0
  %1823 = vmatprep.subr.mxu0 0.0
  %1824 = vmatpush1.msra.mxu0 0.0
  %1825 = vmatprep.subr.mxu0 0.0
  %1826 = vmatpush1.msra.mxu0 0.0
  %1827 = vmatprep.subr.mxu0 0.0
  %1828 = vmatpush1.msra.mxu0 0.0
  %1829 = vmatprep.subr.mxu0 0.0
  %1830 = vmatpush1.msra.mxu0 0.0
  %1831 = vmatprep.subr.mxu0 0.0
  %1832 = vmatpush1.msra.mxu0 0.0
  %1833 = vmatprep.subr.mxu0 0.0
  %1834 = vmatpush1.msra.mxu0 0.0
  %1835 = vmatprep.subr.mxu0 0.0
  %1836 = vmatpush1.msra.mxu0 0.0
  %1837 = vmatprep.subr.mxu0 0.0
  %1838 = vmatpush1.msra.mxu0 0.0
  %1839 = vmatprep.subr.mxu0 0.0
  %1840 = vmatpush1.msra.mxu0 0.0
  %1841 = vmatprep.subr.mxu0 0.0
  %1842 = vmatpush1.msra.mxu0 0.0
  %1843 = vmatprep.subr.mxu0 0.0
  %1844 = vmatpush1.msra.mxu0 0.0
  %1845 = vmatprep.subr.mxu0 0.0
  %1846 = vmatpush1.msra.mxu0 0.0
  %1847 = vmatprep.subr.mxu0 0.0
  %1848 = vmatpush1.msra.mxu0 0.0
  %1849 = vmatprep.subr.mxu0 0.0
  %1850 = vmatpush1.msra.mxu0 0.0
  %1851 = vmatprep.subr.mxu0 0.0
  %1852 = vmatpush1.msra.mxu0 0.0
  %1853 = vmatprep.subr.mxu0 0.0
  %1854 = vmatpush1.msra.mxu0 0.0
  %1855 = vmatprep.subr.mxu0 0.0
  %1856 = vmatpush1.msra.mxu0 0.0
  %1857 = vmatprep.subr.mxu0 0.0
  %1858 = vmatpush1.msra.mxu0 0.0
  %1859 = vmatprep.subr.mxu0 0.0
  %1860 = vmatpush1.msra.mxu0 0.0
  %1861 = vmatprep.subr.mxu0 0.0
  %1862 = vmatpush1.msra.mxu0 0.0
  %1863 = vmatprep.subr.mxu0 0.0
  %1864 = vmatpush1.msra.mxu0 0.0
  %1865 = vmatprep.mubr.f32.mxu0 0.0
  %1866 = vmatmul.mubr.f32.gmra.mrb[0].mxu0 %v1623
  %v1867 = vpop.f32.mrb[0].mxu0
  %v1868 = vadd.f32 %v957, %v1867
  %v1869 = vpop.f32.mrb[0].mxu0
  %1870 = vdwg.mxu0
  %v1871 = vadd.f32 %v1798, %v1868
  %v1872 = vxor.u32 %v1871, 2147483648
  %v1873 = vmul.f32 %v1872, 1.442695
  %v1874 = vpow.pop %v1873
  %v1875 = vadd.f32 %v1874, 1.0
  %v1876 = vrcp.pop %v1875
  %v1877 = vmul.f32 1.0, %v1876
  %1879 = vrot.lane.b32.xlu0 %v1868, 64
  %v1880 = vpop.permute.xlu0 %1879
  %v1882 = vmul.f32 %v1877, %v1880
  %1884 = vrot.lane.b32.xlu0 %v1882, 64
  %v1885 = vpop.permute.xlu0 %1884
  %v1887 = vadd.f32 %v1798, %v1885
  %v1888 = vtanh.pop %v1887
  %v1889 = vsub.f32 1.0, %v1877
  %1891 = vrot.lane.b32.xlu0 %v1888, 96
  %v1892 = vpop.permute.xlu0 %1891
  %v1894 = vmul.f32 %v1889, %v1892
  %v1895 = vmul.f32 %v1877, %v1619
  %v1896 = vadd.f32 %v1894, %v1895
  %1898 = vrot.lane.b32.xlu0 %v1896, 96
  %v1899 = vpop.permute.xlu0 %1898
  %v1900 = vsel %vm53, %v1899, 0
  %1902 = vmatprep.subr.mxu0 0.0
  %1903 = vmatpush1.msra.mxu0 %v41
  %1904 = vmatprep.subr.mxu0 0.0
  %1905 = vmatpush1.msra.mxu0 %v42
  %1906 = vmatprep.subr.mxu0 0.0
  %1907 = vmatpush1.msra.mxu0 %v43
  %1908 = vmatprep.subr.mxu0 0.0
  %1909 = vmatpush1.msra.mxu0 %v44
  %1910 = vmatprep.subr.mxu0 0.0
  %1911 = vmatpush1.msra.mxu0 0.0
  %1912 = vmatprep.subr.mxu0 0.0
  %1913 = vmatpush1.msra.mxu0 0.0
  %1914 = vmatprep.subr.mxu0 0.0
  %1915 = vmatpush1.msra.mxu0 0.0
  %1916 = vmatprep.subr.mxu0 0.0
  %1917 = vmatpush1.msra.mxu0 0.0
  %1918 = vmatprep.subr.mxu0 0.0
  %1919 = vmatpush1.msra.mxu0 0.0
  %1920 = vmatprep.subr.mxu0 0.0
  %1921 = vmatpush1.msra.mxu0 0.0
  %1922 = vmatprep.subr.mxu0 0.0
  %1923 = vmatpush1.msra.mxu0 0.0
  %1924 = vmatprep.subr.mxu0 0.0
  %1925 = vmatpush1.msra.mxu0 0.0
  %1926 = vmatprep.subr.mxu0 0.0
  %1927 = vmatpush1.msra.mxu0 0.0
  %1928 = vmatprep.subr.mxu0 0.0
  %1929 = vmatpush1.msra.mxu0 0.0
  %1930 = vmatprep.subr.mxu0 0.0
  %1931 = vmatpush1.msra.mxu0 0.0
  %1932 = vmatprep.subr.mxu0 0.0
  %1933 = vmatpush1.msra.mxu0 0.0
  %1934 = vmatprep.subr.mxu0 0.0
  %1935 = vmatpush1.msra.mxu0 0.0
  %1936 = vmatprep.subr.mxu0 0.0
  %1937 = vmatpush1.msra.mxu0 0.0
  %1938 = vmatprep.subr.mxu0 0.0
  %1939 = vmatpush1.msra.mxu0 0.0
  %1940 = vmatprep.subr.mxu0 0.0
  %1941 = vmatpush1.msra.mxu0 0.0
  %1942 = vmatprep.subr.mxu0 0.0
  %1943 = vmatpush1.msra.mxu0 0.0
  %1944 = vmatprep.subr.mxu0 0.0
  %1945 = vmatpush1.msra.mxu0 0.0
  %1946 = vmatprep.subr.mxu0 0.0
  %1947 = vmatpush1.msra.mxu0 0.0
  %1948 = vmatprep.subr.mxu0 0.0
  %1949 = vmatpush1.msra.mxu0 0.0
  %1950 = vmatprep.subr.mxu0 0.0
  %1951 = vmatpush1.msra.mxu0 0.0
  %1952 = vmatprep.subr.mxu0 0.0
  %1953 = vmatpush1.msra.mxu0 0.0
  %1954 = vmatprep.subr.mxu0 0.0
  %1955 = vmatpush1.msra.mxu0 0.0
  %1956 = vmatprep.subr.mxu0 0.0
  %1957 = vmatpush1.msra.mxu0 0.0
  %1958 = vmatprep.subr.mxu0 0.0
  %1959 = vmatpush1.msra.mxu0 0.0
  %1960 = vmatprep.subr.mxu0 0.0
  %1961 = vmatpush1.msra.mxu0 0.0
  %1962 = vmatprep.subr.mxu0 0.0
  %1963 = vmatpush1.msra.mxu0 0.0
  %1964 = vmatprep.subr.mxu0 0.0
  %1965 = vmatpush1.msra.mxu0 0.0
  %1966 = vmatprep.mubr.f32.mxu0 0.0
  %1967 = vmatmul.mubr.f32.gmra.mrb[0].mxu0 %v1900
  %v1968 = vpop.f32.mrb[0].mxu0
  %v1969 = vadd.f32 %v1064, %v1968
  %v1970 = vpop.f32.mrb[0].mxu0
  %1971 = vdwg.mxu0
  %v1972 = vsel %vm879, %v1969, -inf
  %1973 = vmax.xlane.f32.xlu0 %v1972
  %v1974 = vpop.xlane.xlu0 %1973
  %v1975 = vsub.f32 %v1969, %v1974
  %v1976 = vmul.f32 %v1975, 1.442695
  %v1977 = vpow.pop %v1976
  %v1978 = vsel %vm879, %v1977, 0.0
  %1979 = vadd.xlane.f32.xlu0 %v1978
  %v1980 = vpop.xlane.xlu0 %1979
  %v1981 = vlog2.pop %v1980
  %v1982 = vmul.f32 %v1981, 0.6931472
  %v1983 = vadd.f32 %v1974, %v1982
  %v1984 = vsub.f32 %v1969, %v1983
  %vm1985 = vcmp.eq.f32.partialorder %v1969, %v1974
  %v1986 = vsel %vm1985, %v875, 16
  %v1987 = vsel %vm879, %v1986, 2147483647
  %v1988 = vand.u32 %v1987, 65535
  %v1989 = vshra.s32 %v1987, 16
  %v1990 = vcvt.s32.f32 %v1988
  %v1991 = vcvt.s32.f32 %v1989
  %1992 = vmin.xlane.f32.xlu0 %v1991
  %v1993 = vpop.xlane.xlu0 %1992
  %vm1994 = vcmp.eq.f32.partialorder %v1991, %v1993
  %v1995 = vsel %vm1994, %v1990, inf
  %1996 = vmin.xlane.f32.xlu0 %v1995
  %v1997 = vpop.xlane.xlu0 %1996
  %v1998 = vcvt.f32.s32 %v1997
  %v1999 = vcvt.f32.s32 %v1993
  %v2000 = vshll.u32 %v1999, 16
  %v2001 = vadd.s32 %v2000, %v1998
  %vm2002 = vcmp.eq.s32.totalorder %v875, %v2001
  %v2003 = vsel %vm2002, 1, 0
  %v2004 = vcvt.s32.f32 %v2003
  %v2006 = vsel %vm879, %v2004, 0
  %2008 = vmatprep.subr.mxu0 0.0
  %2009 = vmatpush1.msra.mxu0 %v39
  %2010 = vmatprep.subr.mxu0 0.0
  %2011 = vmatpush1.msra.mxu0 %v40
  %2012 = vmatprep.subr.mxu0 0.0
  %2013 = vmatpush1.msra.mxu0 0.0
  %2014 = vmatprep.subr.mxu0 0.0
  %2015 = vmatpush1.msra.mxu0 0.0
  %2016 = vmatprep.subr.mxu0 0.0
  %2017 = vmatpush1.msra.mxu0 0.0
  %2018 = vmatprep.subr.mxu0 0.0
  %2019 = vmatpush1.msra.mxu0 0.0
  %2020 = vmatprep.subr.mxu0 0.0
  %2021 = vmatpush1.msra.mxu0 0.0
  %2022 = vmatprep.subr.mxu0 0.0
  %2023 = vmatpush1.msra.mxu0 0.0
  %2024 = vmatprep.subr.mxu0 0.0
  %2025 = vmatpush1.msra.mxu0 0.0
  %2026 = vmatprep.subr.mxu0 0.0
  %2027 = vmatpush1.msra.mxu0 0.0
  %2028 = vmatprep.subr.mxu0 0.0
  %2029 = vmatpush1.msra.mxu0 0.0
  %2030 = vmatprep.subr.mxu0 0.0
  %2031 = vmatpush1.msra.mxu0 0.0
  %2032 = vmatprep.subr.mxu0 0.0
  %2033 = vmatpush1.msra.mxu0 0.0
  %2034 = vmatprep.subr.mxu0 0.0
  %2035 = vmatpush1.msra.mxu0 0.0
  %2036 = vmatprep.subr.mxu0 0.0
  %2037 = vmatpush1.msra.mxu0 0.0
  %2038 = vmatprep.subr.mxu0 0.0
  %2039 = vmatpush1.msra.mxu0 0.0
  %2040 = vmatprep.subr.mxu0 0.0
  %2041 = vmatpush1.msra.mxu0 0.0
  %2042 = vmatprep.subr.mxu0 0.0
  %2043 = vmatpush1.msra.mxu0 0.0
  %2044 = vmatprep.subr.mxu0 0.0
  %2045 = vmatpush1.msra.mxu0 0.0
  %2046 = vmatprep.subr.mxu0 0.0
  %2047 = vmatpush1.msra.mxu0 0.0
  %2048 = vmatprep.subr.mxu0 0.0
  %2049 = vmatpush1.msra.mxu0 0.0
  %2050 = vmatprep.subr.mxu0 0.0
  %2051 = vmatpush1.msra.mxu0 0.0
  %2052 = vmatprep.subr.mxu0 0.0
  %2053 = vmatpush1.msra.mxu0 0.0
  %2054 = vmatprep.subr.mxu0 0.0
  %2055 = vmatpush1.msra.mxu0 0.0
  %2056 = vmatprep.subr.mxu0 0.0
  %2057 = vmatpush1.msra.mxu0 0.0
  %2058 = vmatprep.subr.mxu0 0.0
  %2059 = vmatpush1.msra.mxu0 0.0
  %2060 = vmatprep.subr.mxu0 0.0
  %2061 = vmatpush1.msra.mxu0 0.0
  %2062 = vmatprep.subr.mxu0 0.0
  %2063 = vmatpush1.msra.mxu0 0.0
  %2064 = vmatprep.subr.mxu0 0.0
  %2065 = vmatpush1.msra.mxu0 0.0
  %2066 = vmatprep.subr.mxu0 0.0
  %2067 = vmatpush1.msra.mxu0 0.0
  %2068 = vmatprep.subr.mxu0 0.0
  %2069 = vmatpush1.msra.mxu0 0.0
  %2070 = vmatprep.subr.mxu0 0.0
  %2071 = vmatpush1.msra.mxu0 0.0
  %2072 = vmatprep.mubr.f32.mxu0 0.0
  %2073 = vmatmul.mubr.f32.gmra.mrb[0].mxu0 %v2006
  %v2074 = vpop.f32.mrb[0].mxu0
  %v2075 = vadd.f32 0.0, %v2074
  %v2076 = vpop.f32.mrb[0].mxu0
  %2077 = vdwg.mxu0
  %2078 = vmatprep.subr.mxu0 0.0
  %2079 = vmatpush1.msra.mxu0 %v34
  %2080 = vmatprep.subr.mxu0 0.0
  %2081 = vmatpush1.msra.mxu0 %v35
  %2082 = vmatprep.subr.mxu0 0.0
  %2083 = vmatpush1.msra.mxu0 %v36
  %2084 = vmatprep.subr.mxu0 0.0
  %2085 = vmatpush1.msra.mxu0 %v37
  %2086 = vmatprep.subr.mxu0 0.0
  %2087 = vmatpush1.msra.mxu0 0.0
  %2088 = vmatprep.subr.mxu0 0.0
  %2089 = vmatpush1.msra.mxu0 0.0
  %2090 = vmatprep.subr.mxu0 0.0
  %2091 = vmatpush1.msra.mxu0 0.0
  %2092 = vmatprep.subr.mxu0 0.0
  %2093 = vmatpush1.msra.mxu0 0.0
  %2094 = vmatprep.subr.mxu0 0.0
  %2095 = vmatpush1.msra.mxu0 0.0
  %2096 = vmatprep.subr.mxu0 0.0
  %2097 = vmatpush1.msra.mxu0 0.0
  %2098 = vmatprep.subr.mxu0 0.0
  %2099 = vmatpush1.msra.mxu0 0.0
  %2100 = vmatprep.subr.mxu0 0.0
  %2101 = vmatpush1.msra.mxu0 0.0
  %2102 = vmatprep.subr.mxu0 0.0
  %2103 = vmatpush1.msra.mxu0 0.0
  %2104 = vmatprep.subr.mxu0 0.0
  %2105 = vmatpush1.msra.mxu0 0.0
  %2106 = vmatprep.subr.mxu0 0.0
  %2107 = vmatpush1.msra.mxu0 0.0
  %2108 = vmatprep.subr.mxu0 0.0
  %2109 = vmatpush1.msra.mxu0 0.0
  %2110 = vmatprep.subr.mxu0 0.0
  %2111 = vmatpush1.msra.mxu0 0.0
  %2112 = vmatprep.subr.mxu0 0.0
  %2113 = vmatpush1.msra.mxu0 0.0
  %2114 = vmatprep.subr.mxu0 0.0
  %2115 = vmatpush1.msra.mxu0 0.0
  %2116 = vmatprep.subr.mxu0 0.0
  %2117 = vmatpush1.msra.mxu0 0.0
  %2118 = vmatprep.subr.mxu0 0.0
  %2119 = vmatpush1.msra.mxu0 0.0
  %2120 = vmatprep.subr.mxu0 0.0
  %2121 = vmatpush1.msra.mxu0 0.0
  %2122 = vmatprep.subr.mxu0 0.0
  %2123 = vmatpush1.msra.mxu0 0.0
  %2124 = vmatprep.subr.mxu0 0.0
  %2125 = vmatpush1.msra.mxu0 0.0
  %2126 = vmatprep.subr.mxu0 0.0
  %2127 = vmatpush1.msra.mxu0 0.0
  %2128 = vmatprep.subr.mxu0 0.0
  %2129 = vmatpush1.msra.mxu0 0.0
  %2130 = vmatprep.subr.mxu0 0.0
  %2131 = vmatpush1.msra.mxu0 0.0
  %2132 = vmatprep.subr.mxu0 0.0
  %2133 = vmatpush1.msra.mxu0 0.0
  %2134 = vmatprep.subr.mxu0 0.0
  %2135 = vmatpush1.msra.mxu0 0.0
  %2136 = vmatprep.subr.mxu0 0.0
  %2137 = vmatpush1.msra.mxu0 0.0
  %2138 = vmatprep.subr.mxu0 0.0
  %2139 = vmatpush1.msra.mxu0 0.0
  %2140 = vmatprep.subr.mxu0 0.0
  %2141 = vmatpush1.msra.mxu0 0.0
  %2142 = vmatprep.mubr.f32.mxu0 0.0
  %2143 = vmatmul.mubr.f32.gmra.mrb[0].mxu0 %v1900
  %v2144 = vpop.f32.mrb[0].mxu0
  %v2145 = vadd.f32 %v957, %v2144
  %v2146 = vpop.f32.mrb[0].mxu0
  %2147 = vdwg.mxu0
  %v2148 = vadd.f32 %v2075, %v2145
  %v2149 = vxor.u32 %v2148, 2147483648
  %v2150 = vmul.f32 %v2149, 1.442695
  %v2151 = vpow.pop %v2150
  %v2152 = vadd.f32 %v2151, 1.0
  %v2153 = vrcp.pop %v2152
  %v2154 = vmul.f32 1.0, %v2153
  %2156 = vrot.lane.b32.xlu0 %v2145, 64
  %v2157 = vpop.permute.xlu0 %2156
  %v2159 = vmul.f32 %v2154, %v2157
  %2161 = vrot.lane.b32.xlu0 %v2159, 64
  %v2162 = vpop.permute.xlu0 %2161
  %v2164 = vadd.f32 %v2075, %v2162
  %v2165 = vtanh.pop %v2164
  %v2166 = vsub.f32 1.0, %v2154
  %2168 = vrot.lane.b32.xlu0 %v2165, 96
  %v2169 = vpop.permute.xlu0 %2168
  %v2171 = vmul.f32 %v2166, %v2169
  %v2172 = vmul.f32 %v2154, %v1896
  %v2173 = vadd.f32 %v2171, %v2172
  %2175 = vrot.lane.b32.xlu0 %v2173, 96
  %v2176 = vpop.permute.xlu0 %2175
  %v2177 = vsel %vm53, %v2176, 0
  %2179 = vmatprep.subr.mxu0 0.0
  %2180 = vmatpush1.msra.mxu0 %v41
  %2181 = vmatprep.subr.mxu0 0.0
  %2182 = vmatpush1.msra.mxu0 %v42
  %2183 = vmatprep.subr.mxu0 0.0
  %2184 = vmatpush1.msra.mxu0 %v43
  %2185 = vmatprep.subr.mxu0 0.0
  %2186 = vmatpush1.msra.mxu0 %v44
  %2187 = vmatprep.subr.mxu0 0.0
  %2188 = vmatpush1.msra.mxu0 0.0
  %2189 = vmatprep.subr.mxu0 0.0
  %2190 = vmatpush1.msra.mxu0 0.0
  %2191 = vmatprep.subr.mxu0 0.0
  %2192 = vmatpush1.msra.mxu0 0.0
  %2193 = vmatprep.subr.mxu0 0.0
  %2194 = vmatpush1.msra.mxu0 0.0
  %2195 = vmatprep.subr.mxu0 0.0
  %2196 = vmatpush1.msra.mxu0 0.0
  %2197 = vmatprep.subr.mxu0 0.0
  %2198 = vmatpush1.msra.mxu0 0.0
  %2199 = vmatprep.subr.mxu0 0.0
  %2200 = vmatpush1.msra.mxu0 0.0
  %2201 = vmatprep.subr.mxu0 0.0
  %2202 = vmatpush1.msra.mxu0 0.0
  %2203 = vmatprep.subr.mxu0 0.0
  %2204 = vmatpush1.msra.mxu0 0.0
  %2205 = vmatprep.subr.mxu0 0.0
  %2206 = vmatpush1.msra.mxu0 0.0
  %2207 = vmatprep.subr.mxu0 0.0
  %2208 = vmatpush1.msra.mxu0 0.0
  %2209 = vmatprep.subr.mxu0 0.0
  %2210 = vmatpush1.msra.mxu0 0.0
  %2211 = vmatprep.subr.mxu0 0.0
  %2212 = vmatpush1.msra.mxu0 0.0
  %2213 = vmatprep.subr.mxu0 0.0
  %2214 = vmatpush1.msra.mxu0 0.0
  %2215 = vmatprep.subr.mxu0 0.0
  %2216 = vmatpush1.msra.mxu0 0.0
  %2217 = vmatprep.subr.mxu0 0.0
  %2218 = vmatpush1.msra.mxu0 0.0
  %2219 = vmatprep.subr.mxu0 0.0
  %2220 = vmatpush1.msra.mxu0 0.0
  %2221 = vmatprep.subr.mxu0 0.0
  %2222 = vmatpush1.msra.mxu0 0.0
  %2223 = vmatprep.subr.mxu0 0.0
  %2224 = vmatpush1.msra.mxu0 0.0
  %2225 = vmatprep.subr.mxu0 0.0
  %2226 = vmatpush1.msra.mxu0 0.0
  %2227 = vmatprep.subr.mxu0 0.0
  %2228 = vmatpush1.msra.mxu0 0.0
  %2229 = vmatprep.subr.mxu0 0.0
  %2230 = vmatpush1.msra.mxu0 0.0
  %2231 = vmatprep.subr.mxu0 0.0
  %2232 = vmatpush1.msra.mxu0 0.0
  %2233 = vmatprep.subr.mxu0 0.0
  %2234 = vmatpush1.msra.mxu0 0.0
  %2235 = vmatprep.subr.mxu0 0.0
  %2236 = vmatpush1.msra.mxu0 0.0
  %2237 = vmatprep.subr.mxu0 0.0
  %2238 = vmatpush1.msra.mxu0 0.0
  %2239 = vmatprep.subr.mxu0 0.0
  %2240 = vmatpush1.msra.mxu0 0.0
  %2241 = vmatprep.subr.mxu0 0.0
  %2242 = vmatpush1.msra.mxu0 0.0
  %2243 = vmatprep.mubr.f32.mxu0 0.0
  %2244 = vmatmul.mubr.f32.gmra.mrb[0].mxu0 %v2177
  %v2245 = vpop.f32.mrb[0].mxu0
  %v2246 = vadd.f32 %v1064, %v2245
  %v2247 = vpop.f32.mrb[0].mxu0
  %2248 = vdwg.mxu0
  %v2249 = vsel %vm879, %v2246, -inf
  %2250 = vmax.xlane.f32.xlu0 %v2249
  %v2251 = vpop.xlane.xlu0 %2250
  %v2252 = vsub.f32 %v2246, %v2251
  %v2253 = vmul.f32 %v2252, 1.442695
  %v2254 = vpow.pop %v2253
  %v2255 = vsel %vm879, %v2254, 0.0
  %2256 = vadd.xlane.f32.xlu0 %v2255
  %v2257 = vpop.xlane.xlu0 %2256
  %v2258 = vlog2.pop %v2257
  %v2259 = vmul.f32 %v2258, 0.6931472
  %v2260 = vadd.f32 %v2251, %v2259
  %v2261 = vsub.f32 %v2246, %v2260
  %vm2262 = vcmp.eq.f32.partialorder %v2246, %v2251
  %v2263 = vsel %vm2262, %v875, 16
  %v2264 = vsel %vm879, %v2263, 2147483647
  %v2265 = vand.u32 %v2264, 65535
  %v2266 = vshra.s32 %v2264, 16
  %v2267 = vcvt.s32.f32 %v2265
  %v2268 = vcvt.s32.f32 %v2266
  %2269 = vmin.xlane.f32.xlu0 %v2268
  %v2270 = vpop.xlane.xlu0 %2269
  %vm2271 = vcmp.eq.f32.partialorder %v2268, %v2270
  %v2272 = vsel %vm2271, %v2267, inf
  %2273 = vmin.xlane.f32.xlu0 %v2272
  %v2274 = vpop.xlane.xlu0 %2273
  %v2275 = vcvt.f32.s32 %v2274
  %v2276 = vcvt.f32.s32 %v2270
  %v2277 = vshll.u32 %v2276, 16
  %v2278 = vadd.s32 %v2277, %v2275
  %vm2279 = vcmp.eq.s32.totalorder %v875, %v2278
  %v2280 = vsel %vm2279, 1, 0
  %v2281 = vcvt.s32.f32 %v2280
  %v2283 = vsel %vm879, %v2281, 0
  %2285 = vmatprep.subr.mxu0 0.0
  %2286 = vmatpush1.msra.mxu0 %v39
  %2287 = vmatprep.subr.mxu0 0.0
  %2288 = vmatpush1.msra.mxu0 %v40
  %2289 = vmatprep.subr.mxu0 0.0
  %2290 = vmatpush1.msra.mxu0 0.0
  %2291 = vmatprep.subr.mxu0 0.0
  %2292 = vmatpush1.msra.mxu0 0.0
  %2293 = vmatprep.subr.mxu0 0.0
  %2294 = vmatpush1.msra.mxu0 0.0
  %2295 = vmatprep.subr.mxu0 0.0
  %2296 = vmatpush1.msra.mxu0 0.0
  %2297 = vmatprep.subr.mxu0 0.0
  %2298 = vmatpush1.msra.mxu0 0.0
  %2299 = vmatprep.subr.mxu0 0.0
  %2300 = vmatpush1.msra.mxu0 0.0
  %2301 = vmatprep.subr.mxu0 0.0
  %2302 = vmatpush1.msra.mxu0 0.0
  %2303 = vmatprep.subr.mxu0 0.0
  %2304 = vmatpush1.msra.mxu0 0.0
  %2305 = vmatprep.subr.mxu0 0.0
  %2306 = vmatpush1.msra.mxu0 0.0
  %2307 = vmatprep.subr.mxu0 0.0
  %2308 = vmatpush1.msra.mxu0 0.0
  %2309 = vmatprep.subr.mxu0 0.0
  %2310 = vmatpush1.msra.mxu0 0.0
  %2311 = vmatprep.subr.mxu0 0.0
  %2312 = vmatpush1.msra.mxu0 0.0
  %2313 = vmatprep.subr.mxu0 0.0
  %2314 = vmatpush1.msra.mxu0 0.0
  %2315 = vmatprep.subr.mxu0 0.0
  %2316 = vmatpush1.msra.mxu0 0.0
  %2317 = vmatprep.subr.mxu0 0.0
  %2318 = vmatpush1.msra.mxu0 0.0
  %2319 = vmatprep.subr.mxu0 0.0
  %2320 = vmatpush1.msra.mxu0 0.0
  %2321 = vmatprep.subr.mxu0 0.0
  %2322 = vmatpush1.msra.mxu0 0.0
  %2323 = vmatprep.subr.mxu0 0.0
  %2324 = vmatpush1.msra.mxu0 0.0
  %2325 = vmatprep.subr.mxu0 0.0
  %2326 = vmatpush1.msra.mxu0 0.0
  %2327 = vmatprep.subr.mxu0 0.0
  %2328 = vmatpush1.msra.mxu0 0.0
  %2329 = vmatprep.subr.mxu0 0.0
  %2330 = vmatpush1.msra.mxu0 0.0
  %2331 = vmatprep.subr.mxu0 0.0
  %2332 = vmatpush1.msra.mxu0 0.0
  %2333 = vmatprep.subr.mxu0 0.0
  %2334 = vmatpush1.msra.mxu0 0.0
  %2335 = vmatprep.subr.mxu0 0.0
  %2336 = vmatpush1.msra.mxu0 0.0
  %2337 = vmatprep.subr.mxu0 0.0
  %2338 = vmatpush1.msra.mxu0 0.0
  %2339 = vmatprep.subr.mxu0 0.0
  %2340 = vmatpush1.msra.mxu0 0.0
  %2341 = vmatprep.subr.mxu0 0.0
  %2342 = vmatpush1.msra.mxu0 0.0
  %2343 = vmatprep.subr.mxu0 0.0
  %2344 = vmatpush1.msra.mxu0 0.0
  %2345 = vmatprep.subr.mxu0 0.0
  %2346 = vmatpush1.msra.mxu0 0.0
  %2347 = vmatprep.subr.mxu0 0.0
  %2348 = vmatpush1.msra.mxu0 0.0
  %2349 = vmatprep.mubr.f32.mxu0 0.0
  %2350 = vmatmul.mubr.f32.gmra.mrb[0].mxu0 %v2283
  %v2351 = vpop.f32.mrb[0].mxu0
  %v2352 = vadd.f32 0.0, %v2351
  %v2353 = vpop.f32.mrb[0].mxu0
  %2354 = vdwg.mxu0
  %2355 = vmatprep.subr.mxu0 0.0
  %2356 = vmatpush1.msra.mxu0 %v34
  %2357 = vmatprep.subr.mxu0 0.0
  %2358 = vmatpush1.msra.mxu0 %v35
  %2359 = vmatprep.subr.mxu0 0.0
  %2360 = vmatpush1.msra.mxu0 %v36
  %2361 = vmatprep.subr.mxu0 0.0
  %2362 = vmatpush1.msra.mxu0 %v37
  %2363 = vmatprep.subr.mxu0 0.0
  %2364 = vmatpush1.msra.mxu0 0.0
  %2365 = vmatprep.subr.mxu0 0.0
  %2366 = vmatpush1.msra.mxu0 0.0
  %2367 = vmatprep.subr.mxu0 0.0
  %2368 = vmatpush1.msra.mxu0 0.0
  %2369 = vmatprep.subr.mxu0 0.0
  %2370 = vmatpush1.msra.mxu0 0.0
  %2371 = vmatprep.subr.mxu0 0.0
  %2372 = vmatpush1.msra.mxu0 0.0
  %2373 = vmatprep.subr.mxu0 0.0
  %2374 = vmatpush1.msra.mxu0 0.0
  %2375 = vmatprep.subr.mxu0 0.0
  %2376 = vmatpush1.msra.mxu0 0.0
  %2377 = vmatprep.subr.mxu0 0.0
  %2378 = vmatpush1.msra.mxu0 0.0
  %2379 = vmatprep.subr.mxu0 0.0
  %2380 = vmatpush1.msra.mxu0 0.0
  %2381 = vmatprep.subr.mxu0 0.0
  %2382 = vmatpush1.msra.mxu0 0.0
  %2383 = vmatprep.subr.mxu0 0.0
  %2384 = vmatpush1.msra.mxu0 0.0
  %2385 = vmatprep.subr.mxu0 0.0
  %2386 = vmatpush1.msra.mxu0 0.0
  %2387 = vmatprep.subr.mxu0 0.0
  %2388 = vmatpush1.msra.mxu0 0.0
  %2389 = vmatprep.subr.mxu0 0.0
  %2390 = vmatpush1.msra.mxu0 0.0
  %2391 = vmatprep.subr.mxu0 0.0
  %2392 = vmatpush1.msra.mxu0 0.0
  %2393 = vmatprep.subr.mxu0 0.0
  %2394 = vmatpush1.msra.mxu0 0.0
  %2395 = vmatprep.subr.mxu0 0.0
  %2396 = vmatpush1.msra.mxu0 0.0
  %2397 = vmatprep.subr.mxu0 0.0
  %2398 = vmatpush1.msra.mxu0 0.0
  %2399 = vmatprep.subr.mxu0 0.0
  %2400 = vmatpush1.msra.mxu0 0.0
  %2401 = vmatprep.subr.mxu0 0.0
  %2402 = vmatpush1.msra.mxu0 0.0
  %2403 = vmatprep.subr.mxu0 0.0
  %2404 = vmatpush1.msra.mxu0 0.0
  %2405 = vmatprep.subr.mxu0 0.0
  %2406 = vmatpush1.msra.mxu0 0.0
  %2407 = vmatprep.subr.mxu0 0.0
  %2408 = vmatpush1.msra.mxu0 0.0
  %2409 = vmatprep.subr.mxu0 0.0
  %2410 = vmatpush1.msra.mxu0 0.0
  %2411 = vmatprep.subr.mxu0 0.0
  %2412 = vmatpush1.msra.mxu0 0.0
  %2413 = vmatprep.subr.mxu0 0.0
  %2414 = vmatpush1.msra.mxu0 0.0
  %2415 = vmatprep.subr.mxu0 0.0
  %2416 = vmatpush1.msra.mxu0 0.0
  %2417 = vmatprep.subr.mxu0 0.0
  %2418 = vmatpush1.msra.mxu0 0.0
  %2419 = vmatprep.mubr.f32.mxu0 0.0
  %2420 = vmatmul.mubr.f32.gmra.mrb[0].mxu0 %v2177
  %v2421 = vpop.f32.mrb[0].mxu0
  %v2422 = vadd.f32 %v957, %v2421
  %v2423 = vpop.f32.mrb[0].mxu0
  %2424 = vdwg.mxu0
  %v2425 = vadd.f32 %v2352, %v2422
  %v2426 = vxor.u32 %v2425, 2147483648
  %v2427 = vmul.f32 %v2426, 1.442695
  %v2428 = vpow.pop %v2427
  %v2429 = vadd.f32 %v2428, 1.0
  %v2430 = vrcp.pop %v2429
  %v2431 = vmul.f32 1.0, %v2430
  %2433 = vrot.lane.b32.xlu0 %v2422, 64
  %v2434 = vpop.permute.xlu0 %2433
  %v2436 = vmul.f32 %v2431, %v2434
  %2438 = vrot.lane.b32.xlu0 %v2436, 64
  %v2439 = vpop.permute.xlu0 %2438
  %v2441 = vadd.f32 %v2352, %v2439
  %v2442 = vtanh.pop %v2441
  %v2443 = vsub.f32 1.0, %v2431
  %2445 = vrot.lane.b32.xlu0 %v2442, 96
  %v2446 = vpop.permute.xlu0 %2445
  %v2448 = vmul.f32 %v2443, %v2446
  %v2449 = vmul.f32 %v2431, %v2173
  %v2450 = vadd.f32 %v2448, %v2449
  %2452 = vrot.lane.b32.xlu0 %v2450, 96
  %v2453 = vpop.permute.xlu0 %2452
  %v2454 = vsel %vm53, %v2453, 0
  %2456 = vmatprep.subr.mxu0 0.0
  %2457 = vmatpush1.msra.mxu0 %v41
  %2458 = vmatprep.subr.mxu0 0.0
  %2459 = vmatpush1.msra.mxu0 %v42
  %2460 = vmatprep.subr.mxu0 0.0
  %2461 = vmatpush1.msra.mxu0 %v43
  %2462 = vmatprep.subr.mxu0 0.0
  %2463 = vmatpush1.msra.mxu0 %v44
  %2464 = vmatprep.subr.mxu0 0.0
  %2465 = vmatpush1.msra.mxu0 0.0
  %2466 = vmatprep.subr.mxu0 0.0
  %2467 = vmatpush1.msra.mxu0 0.0
  %2468 = vmatprep.subr.mxu0 0.0
  %2469 = vmatpush1.msra.mxu0 0.0
  %2470 = vmatprep.subr.mxu0 0.0
  %2471 = vmatpush1.msra.mxu0 0.0
  %2472 = vmatprep.subr.mxu0 0.0
  %2473 = vmatpush1.msra.mxu0 0.0
  %2474 = vmatprep.subr.mxu0 0.0
  %2475 = vmatpush1.msra.mxu0 0.0
  %2476 = vmatprep.subr.mxu0 0.0
  %2477 = vmatpush1.msra.mxu0 0.0
  %2478 = vmatprep.subr.mxu0 0.0
  %2479 = vmatpush1.msra.mxu0 0.0
  %2480 = vmatprep.subr.mxu0 0.0
  %2481 = vmatpush1.msra.mxu0 0.0
  %2482 = vmatprep.subr.mxu0 0.0
  %2483 = vmatpush1.msra.mxu0 0.0
  %2484 = vmatprep.subr.mxu0 0.0
  %2485 = vmatpush1.msra.mxu0 0.0
  %2486 = vmatprep.subr.mxu0 0.0
  %2487 = vmatpush1.msra.mxu0 0.0
  %2488 = vmatprep.subr.mxu0 0.0
  %2489 = vmatpush1.msra.mxu0 0.0
  %2490 = vmatprep.subr.mxu0 0.0
  %2491 = vmatpush1.msra.mxu0 0.0
  %2492 = vmatprep.subr.mxu0 0.0
  %2493 = vmatpush1.msra.mxu0 0.0
  %2494 = vmatprep.subr.mxu0 0.0
  %2495 = vmatpush1.msra.mxu0 0.0
  %2496 = vmatprep.subr.mxu0 0.0
  %2497 = vmatpush1.msra.mxu0 0.0
  %2498 = vmatprep.subr.mxu0 0.0
  %2499 = vmatpush1.msra.mxu0 0.0
  %2500 = vmatprep.subr.mxu0 0.0
  %2501 = vmatpush1.msra.mxu0 0.0
  %2502 = vmatprep.subr.mxu0 0.0
  %2503 = vmatpush1.msra.mxu0 0.0
  %2504 = vmatprep.subr.mxu0 0.0
  %2505 = vmatpush1.msra.mxu0 0.0
  %2506 = vmatprep.subr.mxu0 0.0
  %2507 = vmatpush1.msra.mxu0 0.0
  %2508 = vmatprep.subr.mxu0 0.0
  %2509 = vmatpush1.msra.mxu0 0.0
  %2510 = vmatprep.subr.mxu0 0.0
  %2511 = vmatpush1.msra.mxu0 0.0
  %2512 = vmatprep.subr.mxu0 0.0
  %2513 = vmatpush1.msra.mxu0 0.0
  %2514 = vmatprep.subr.mxu0 0.0
  %2515 = vmatpush1.msra.mxu0 0.0
  %2516 = vmatprep.subr.mxu0 0.0
  %2517 = vmatpush1.msra.mxu0 0.0
  %2518 = vmatprep.subr.mxu0 0.0
  %2519 = vmatpush1.msra.mxu0 0.0
  %2520 = vmatprep.mubr.f32.mxu0 0.0
  %2521 = vmatmul.mubr.f32.gmra.mrb[0].mxu0 %v2454
  %v2522 = vpop.f32.mrb[0].mxu0
  %v2523 = vadd.f32 %v1064, %v2522
  %v2524 = vpop.f32.mrb[0].mxu0
  %2525 = vdwg.mxu0
  %v2526 = vsel %vm879, %v2523, -inf
  %2527 = vmax.xlane.f32.xlu0 %v2526
  %v2528 = vpop.xlane.xlu0 %2527
  %v2529 = vsub.f32 %v2523, %v2528
  %v2530 = vmul.f32 %v2529, 1.442695
  %v2531 = vpow.pop %v2530
  %v2532 = vsel %vm879, %v2531, 0.0
  %2533 = vadd.xlane.f32.xlu0 %v2532
  %v2534 = vpop.xlane.xlu0 %2533
  %v2535 = vlog2.pop %v2534
  %v2536 = vmul.f32 %v2535, 0.6931472
  %v2537 = vadd.f32 %v2528, %v2536
  %v2538 = vsub.f32 %v2523, %v2537
  %vm2539 = vcmp.eq.f32.partialorder %v2523, %v2528
  %v2540 = vsel %vm2539, %v875, 16
  %v2541 = vsel %vm879, %v2540, 2147483647
  %v2542 = vand.u32 %v2541, 65535
  %v2543 = vshra.s32 %v2541, 16
  %v2544 = vcvt.s32.f32 %v2542
  %v2545 = vcvt.s32.f32 %v2543
  %2546 = vmin.xlane.f32.xlu0 %v2545
  %v2547 = vpop.xlane.xlu0 %2546
  %vm2548 = vcmp.eq.f32.partialorder %v2545, %v2547
  %v2549 = vsel %vm2548, %v2544, inf
  %2550 = vmin.xlane.f32.xlu0 %v2549
  %v2551 = vpop.xlane.xlu0 %2550
  %v2552 = vcvt.f32.s32 %v2551
  %v2553 = vcvt.f32.s32 %v2547
  %v2554 = vshll.u32 %v2553, 16
  %v2555 = vadd.s32 %v2554, %v2552
  %vm2556 = vcmp.eq.s32.totalorder %v875, %v2555
  %v2557 = vsel %vm2556, 1, 0
  %v2558 = vcvt.s32.f32 %v2557
  %v2560 = vsel %vm879, %v2558, 0
  %2562 = vmatprep.subr.mxu0 0.0
  %2563 = vmatpush1.msra.mxu0 %v39
  %2564 = vmatprep.subr.mxu0 0.0
  %2565 = vmatpush1.msra.mxu0 %v40
  %2566 = vmatprep.subr.mxu0 0.0
  %2567 = vmatpush1.msra.mxu0 0.0
  %2568 = vmatprep.subr.mxu0 0.0
  %2569 = vmatpush1.msra.mxu0 0.0
  %2570 = vmatprep.subr.mxu0 0.0
  %2571 = vmatpush1.msra.mxu0 0.0
  %2572 = vmatprep.subr.mxu0 0.0
  %2573 = vmatpush1.msra.mxu0 0.0
  %2574 = vmatprep.subr.mxu0 0.0
  %2575 = vmatpush1.msra.mxu0 0.0
  %2576 = vmatprep.subr.mxu0 0.0
  %2577 = vmatpush1.msra.mxu0 0.0
  %2578 = vmatprep.subr.mxu0 0.0
  %2579 = vmatpush1.msra.mxu0 0.0
  %2580 = vmatprep.subr.mxu0 0.0
  %2581 = vmatpush1.msra.mxu0 0.0
  %2582 = vmatprep.subr.mxu0 0.0
  %2583 = vmatpush1.msra.mxu0 0.0
  %2584 = vmatprep.subr.mxu0 0.0
  %2585 = vmatpush1.msra.mxu0 0.0
  %2586 = vmatprep.subr.mxu0 0.0
  %2587 = vmatpush1.msra.mxu0 0.0
  %2588 = vmatprep.subr.mxu0 0.0
  %2589 = vmatpush1.msra.mxu0 0.0
  %2590 = vmatprep.subr.mxu0 0.0
  %2591 = vmatpush1.msra.mxu0 0.0
  %2592 = vmatprep.subr.mxu0 0.0
  %2593 = vmatpush1.msra.mxu0 0.0
  %2594 = vmatprep.subr.mxu0 0.0
  %2595 = vmatpush1.msra.mxu0 0.0
  %2596 = vmatprep.subr.mxu0 0.0
  %2597 = vmatpush1.msra.mxu0 0.0
  %2598 = vmatprep.subr.mxu0 0.0
  %2599 = vmatpush1.msra.mxu0 0.0
  %2600 = vmatprep.subr.mxu0 0.0
  %2601 = vmatpush1.msra.mxu0 0.0
  %2602 = vmatprep.subr.mxu0 0.0
  %2603 = vmatpush1.msra.mxu0 0.0
  %2604 = vmatprep.subr.mxu0 0.0
  %2605 = vmatpush1.msra.mxu0 0.0
  %2606 = vmatprep.subr.mxu0 0.0
  %2607 = vmatpush1.msra.mxu0 0.0
  %2608 = vmatprep.subr.mxu0 0.0
  %2609 = vmatpush1.msra.mxu0 0.0
  %2610 = vmatprep.subr.mxu0 0.0
  %2611 = vmatpush1.msra.mxu0 0.0
  %2612 = vmatprep.subr.mxu0 0.0
  %2613 = vmatpush1.msra.mxu0 0.0
  %2614 = vmatprep.subr.mxu0 0.0
  %2615 = vmatpush1.msra.mxu0 0.0
  %2616 = vmatprep.subr.mxu0 0.0
  %2617 = vmatpush1.msra.mxu0 0.0
  %2618 = vmatprep.subr.mxu0 0.0
  %2619 = vmatpush1.msra.mxu0 0.0
  %2620 = vmatprep.subr.mxu0 0.0
  %2621 = vmatpush1.msra.mxu0 0.0
  %2622 = vmatprep.subr.mxu0 0.0
  %2623 = vmatpush1.msra.mxu0 0.0
  %2624 = vmatprep.subr.mxu0 0.0
  %2625 = vmatpush1.msra.mxu0 0.0
  %2626 = vmatprep.mubr.f32.mxu0 0.0
  %2627 = vmatmul.mubr.f32.gmra.mrb[0].mxu0 %v2560
  %v2628 = vpop.f32.mrb[0].mxu0
  %v2629 = vadd.f32 0.0, %v2628
  %v2630 = vpop.f32.mrb[0].mxu0
  %2631 = vdwg.mxu0
  %2632 = vmatprep.subr.mxu0 0.0
  %2633 = vmatpush1.msra.mxu0 %v34
  %2634 = vmatprep.subr.mxu0 0.0
  %2635 = vmatpush1.msra.mxu0 %v35
  %2636 = vmatprep.subr.mxu0 0.0
  %2637 = vmatpush1.msra.mxu0 %v36
  %2638 = vmatprep.subr.mxu0 0.0
  %2639 = vmatpush1.msra.mxu0 %v37
  %2640 = vmatprep.subr.mxu0 0.0
  %2641 = vmatpush1.msra.mxu0 0.0
  %2642 = vmatprep.subr.mxu0 0.0
  %2643 = vmatpush1.msra.mxu0 0.0
  %2644 = vmatprep.subr.mxu0 0.0
  %2645 = vmatpush1.msra.mxu0 0.0
  %2646 = vmatprep.subr.mxu0 0.0
  %2647 = vmatpush1.msra.mxu0 0.0
  %2648 = vmatprep.subr.mxu0 0.0
  %2649 = vmatpush1.msra.mxu0 0.0
  %2650 = vmatprep.subr.mxu0 0.0
  %2651 = vmatpush1.msra.mxu0 0.0
  %2652 = vmatprep.subr.mxu0 0.0
  %2653 = vmatpush1.msra.mxu0 0.0
  %2654 = vmatprep.subr.mxu0 0.0
  %2655 = vmatpush1.msra.mxu0 0.0
  %2656 = vmatprep.subr.mxu0 0.0
  %2657 = vmatpush1.msra.mxu0 0.0
  %2658 = vmatprep.subr.mxu0 0.0
  %2659 = vmatpush1.msra.mxu0 0.0
  %2660 = vmatprep.subr.mxu0 0.0
  %2661 = vmatpush1.msra.mxu0 0.0
  %2662 = vmatprep.subr.mxu0 0.0
  %2663 = vmatpush1.msra.mxu0 0.0
  %2664 = vmatprep.subr.mxu0 0.0
  %2665 = vmatpush1.msra.mxu0 0.0
  %2666 = vmatprep.subr.mxu0 0.0
  %2667 = vmatpush1.msra.mxu0 0.0
  %2668 = vmatprep.subr.mxu0 0.0
  %2669 = vmatpush1.msra.mxu0 0.0
  %2670 = vmatprep.subr.mxu0 0.0
  %2671 = vmatpush1.msra.mxu0 0.0
  %2672 = vmatprep.subr.mxu0 0.0
  %2673 = vmatpush1.msra.mxu0 0.0
  %2674 = vmatprep.subr.mxu0 0.0
  %2675 = vmatpush1.msra.mxu0 0.0
  %2676 = vmatprep.subr.mxu0 0.0
  %2677 = vmatpush1.msra.mxu0 0.0
  %2678 = vmatprep.subr.mxu0 0.0
  %2679 = vmatpush1.msra.mxu0 0.0
  %2680 = vmatprep.subr.mxu0 0.0
  %2681 = vmatpush1.msra.mxu0 0.0
  %2682 = vmatprep.subr.mxu0 0.0
  %2683 = vmatpush1.msra.mxu0 0.0
  %2684 = vmatprep.subr.mxu0 0.0
  %2685 = vmatpush1.msra.mxu0 0.0
  %2686 = vmatprep.subr.mxu0 0.0
  %2687 = vmatpush1.msra.mxu0 0.0
  %2688 = vmatprep.subr.mxu0 0.0
  %2689 = vmatpush1.msra.mxu0 0.0
  %2690 = vmatprep.subr.mxu0 0.0
  %2691 = vmatpush1.msra.mxu0 0.0
  %2692 = vmatprep.subr.mxu0 0.0
  %2693 = vmatpush1.msra.mxu0 0.0
  %2694 = vmatprep.subr.mxu0 0.0
  %2695 = vmatpush1.msra.mxu0 0.0
  %2696 = vmatprep.mubr.f32.mxu0 0.0
  %2697 = vmatmul.mubr.f32.gmra.mrb[0].mxu0 %v2454
  %v2698 = vpop.f32.mrb[0].mxu0
  %v2699 = vadd.f32 %v957, %v2698
  %v2700 = vpop.f32.mrb[0].mxu0
  %2701 = vdwg.mxu0
  %v2702 = vadd.f32 %v2629, %v2699
  %v2703 = vxor.u32 %v2702, 2147483648
  %v2704 = vmul.f32 %v2703, 1.442695
  %v2705 = vpow.pop %v2704
  %v2706 = vadd.f32 %v2705, 1.0
  %v2707 = vrcp.pop %v2706
  %v2708 = vmul.f32 1.0, %v2707
  %2710 = vrot.lane.b32.xlu0 %v2699, 64
  %v2711 = vpop.permute.xlu0 %2710
  %v2713 = vmul.f32 %v2708, %v2711
  %2715 = vrot.lane.b32.xlu0 %v2713, 64
  %v2716 = vpop.permute.xlu0 %2715
  %v2718 = vadd.f32 %v2629, %v2716
  %v2719 = vtanh.pop %v2718
  %v2720 = vsub.f32 1.0, %v2708
  %2722 = vrot.lane.b32.xlu0 %v2719, 96
  %v2723 = vpop.permute.xlu0 %2722
  %v2725 = vmul.f32 %v2720, %v2723
  %v2726 = vmul.f32 %v2708, %v2450
  %v2727 = vadd.f32 %v2725, %v2726
  %2729 = vrot.lane.b32.xlu0 %v2727, 96
  %v2730 = vpop.permute.xlu0 %2729
  %v2731 = vsel %vm53, %v2730, 0
  %2733 = vmatprep.subr.mxu0 0.0
  %2734 = vmatpush1.msra.mxu0 %v41
  %2735 = vmatprep.subr.mxu0 0.0
  %2736 = vmatpush1.msra.mxu0 %v42
  %2737 = vmatprep.subr.mxu0 0.0
  %2738 = vmatpush1.msra.mxu0 %v43
  %2739 = vmatprep.subr.mxu0 0.0
  %2740 = vmatpush1.msra.mxu0 %v44
  %2741 = vmatprep.subr.mxu0 0.0
  %2742 = vmatpush1.msra.mxu0 0.0
  %2743 = vmatprep.subr.mxu0 0.0
  %2744 = vmatpush1.msra.mxu0 0.0
  %2745 = vmatprep.subr.mxu0 0.0
  %2746 = vmatpush1.msra.mxu0 0.0
  %2747 = vmatprep.subr.mxu0 0.0
  %2748 = vmatpush1.msra.mxu0 0.0
  %2749 = vmatprep.subr.mxu0 0.0
  %2750 = vmatpush1.msra.mxu0 0.0
  %2751 = vmatprep.subr.mxu0 0.0
  %2752 = vmatpush1.msra.mxu0 0.0
  %2753 = vmatprep.subr.mxu0 0.0
  %2754 = vmatpush1.msra.mxu0 0.0
  %2755 = vmatprep.subr.mxu0 0.0
  %2756 = vmatpush1.msra.mxu0 0.0
  %2757 = vmatprep.subr.mxu0 0.0
  %2758 = vmatpush1.msra.mxu0 0.0
  %2759 = vmatprep.subr.mxu0 0.0
  %2760 = vmatpush1.msra.mxu0 0.0
  %2761 = vmatprep.subr.mxu0 0.0
  %2762 = vmatpush1.msra.mxu0 0.0
  %2763 = vmatprep.subr.mxu0 0.0
  %2764 = vmatpush1.msra.mxu0 0.0
  %2765 = vmatprep.subr.mxu0 0.0
  %2766 = vmatpush1.msra.mxu0 0.0
  %2767 = vmatprep.subr.mxu0 0.0
  %2768 = vmatpush1.msra.mxu0 0.0
  %2769 = vmatprep.subr.mxu0 0.0
  %2770 = vmatpush1.msra.mxu0 0.0
  %2771 = vmatprep.subr.mxu0 0.0
  %2772 = vmatpush1.msra.mxu0 0.0
  %2773 = vmatprep.subr.mxu0 0.0
  %2774 = vmatpush1.msra.mxu0 0.0
  %2775 = vmatprep.subr.mxu0 0.0
  %2776 = vmatpush1.msra.mxu0 0.0
  %2777 = vmatprep.subr.mxu0 0.0
  %2778 = vmatpush1.msra.mxu0 0.0
  %2779 = vmatprep.subr.mxu0 0.0
  %2780 = vmatpush1.msra.mxu0 0.0
  %2781 = vmatprep.subr.mxu0 0.0
  %2782 = vmatpush1.msra.mxu0 0.0
  %2783 = vmatprep.subr.mxu0 0.0
  %2784 = vmatpush1.msra.mxu0 0.0
  %2785 = vmatprep.subr.mxu0 0.0
  %2786 = vmatpush1.msra.mxu0 0.0
  %2787 = vmatprep.subr.mxu0 0.0
  %2788 = vmatpush1.msra.mxu0 0.0
  %2789 = vmatprep.subr.mxu0 0.0
  %2790 = vmatpush1.msra.mxu0 0.0
  %2791 = vmatprep.subr.mxu0 0.0
  %2792 = vmatpush1.msra.mxu0 0.0
  %2793 = vmatprep.subr.mxu0 0.0
  %2794 = vmatpush1.msra.mxu0 0.0
  %2795 = vmatprep.subr.mxu0 0.0
  %2796 = vmatpush1.msra.mxu0 0.0
  %2797 = vmatprep.mubr.f32.mxu0 0.0
  %2798 = vmatmul.mubr.f32.gmra.mrb[0].mxu0 %v2731
  %v2799 = vpop.f32.mrb[0].mxu0
  %v2800 = vadd.f32 %v1064, %v2799
  %v2801 = vpop.f32.mrb[0].mxu0
  %2802 = vdwg.mxu0
  %v2803 = vsel %vm879, %v2800, -inf
  %2804 = vmax.xlane.f32.xlu0 %v2803
  %v2805 = vpop.xlane.xlu0 %2804
  %v2806 = vsub.f32 %v2800, %v2805
  %v2807 = vmul.f32 %v2806, 1.442695
  %v2808 = vpow.pop %v2807
  %v2809 = vsel %vm879, %v2808, 0.0
  %2810 = vadd.xlane.f32.xlu0 %v2809
  %v2811 = vpop.xlane.xlu0 %2810
  %v2812 = vlog2.pop %v2811
  %v2813 = vmul.f32 %v2812, 0.6931472
  %v2814 = vadd.f32 %v2805, %v2813
  %v2815 = vsub.f32 %v2800, %v2814
  %vm2816 = vcmp.eq.f32.partialorder %v2800, %v2805
  %v2817 = vsel %vm2816, %v875, 16
  %v2818 = vsel %vm879, %v2817, 2147483647
  %v2819 = vand.u32 %v2818, 65535
  %v2820 = vshra.s32 %v2818, 16
  %v2821 = vcvt.s32.f32 %v2819
  %v2822 = vcvt.s32.f32 %v2820
  %2823 = vmin.xlane.f32.xlu0 %v2822
  %v2824 = vpop.xlane.xlu0 %2823
  %vm2825 = vcmp.eq.f32.partialorder %v2822, %v2824
  %v2826 = vsel %vm2825, %v2821, inf
  %2827 = vmin.xlane.f32.xlu0 %v2826
  %v2828 = vpop.xlane.xlu0 %2827
  %v2829 = vcvt.f32.s32 %v2828
  %v2830 = vcvt.f32.s32 %v2824
  %v2831 = vshll.u32 %v2830, 16
  %v2832 = vadd.s32 %v2831, %v2829
  %vm2833 = vcmp.eq.s32.totalorder %v875, %v2832
  %v2834 = vsel %vm2833, 1, 0
  %v2835 = vcvt.s32.f32 %v2834
  %v2837 = vsel %vm879, %v2835, 0
  %2839 = vmatprep.subr.mxu0 0.0
  %2840 = vmatpush1.msra.mxu0 %v39
  %2841 = vmatprep.subr.mxu0 0.0
  %2842 = vmatpush1.msra.mxu0 %v40
  %2843 = vmatprep.subr.mxu0 0.0
  %2844 = vmatpush1.msra.mxu0 0.0
  %2845 = vmatprep.subr.mxu0 0.0
  %2846 = vmatpush1.msra.mxu0 0.0
  %2847 = vmatprep.subr.mxu0 0.0
  %2848 = vmatpush1.msra.mxu0 0.0
  %2849 = vmatprep.subr.mxu0 0.0
  %2850 = vmatpush1.msra.mxu0 0.0
  %2851 = vmatprep.subr.mxu0 0.0
  %2852 = vmatpush1.msra.mxu0 0.0
  %2853 = vmatprep.subr.mxu0 0.0
  %2854 = vmatpush1.msra.mxu0 0.0
  %2855 = vmatprep.subr.mxu0 0.0
  %2856 = vmatpush1.msra.mxu0 0.0
  %2857 = vmatprep.subr.mxu0 0.0
  %2858 = vmatpush1.msra.mxu0 0.0
  %2859 = vmatprep.subr.mxu0 0.0
  %2860 = vmatpush1.msra.mxu0 0.0
  %2861 = vmatprep.subr.mxu0 0.0
  %2862 = vmatpush1.msra.mxu0 0.0
  %2863 = vmatprep.subr.mxu0 0.0
  %2864 = vmatpush1.msra.mxu0 0.0
  %2865 = vmatprep.subr.mxu0 0.0
  %2866 = vmatpush1.msra.mxu0 0.0
  %2867 = vmatprep.subr.mxu0 0.0
  %2868 = vmatpush1.msra.mxu0 0.0
  %2869 = vmatprep.subr.mxu0 0.0
  %2870 = vmatpush1.msra.mxu0 0.0
  %2871 = vmatprep.subr.mxu0 0.0
  %2872 = vmatpush1.msra.mxu0 0.0
  %2873 = vmatprep.subr.mxu0 0.0
  %2874 = vmatpush1.msra.mxu0 0.0
  %2875 = vmatprep.subr.mxu0 0.0
  %2876 = vmatpush1.msra.mxu0 0.0
  %2877 = vmatprep.subr.mxu0 0.0
  %2878 = vmatpush1.msra.mxu0 0.0
  %2879 = vmatprep.subr.mxu0 0.0
  %2880 = vmatpush1.msra.mxu0 0.0
  %2881 = vmatprep.subr.mxu0 0.0
  %2882 = vmatpush1.msra.mxu0 0.0
  %2883 = vmatprep.subr.mxu0 0.0
  %2884 = vmatpush1.msra.mxu0 0.0
  %2885 = vmatprep.subr.mxu0 0.0
  %2886 = vmatpush1.msra.mxu0 0.0
  %2887 = vmatprep.subr.mxu0 0.0
  %2888 = vmatpush1.msra.mxu0 0.0
  %2889 = vmatprep.subr.mxu0 0.0
  %2890 = vmatpush1.msra.mxu0 0.0
  %2891 = vmatprep.subr.mxu0 0.0
  %2892 = vmatpush1.msra.mxu0 0.0
  %2893 = vmatprep.subr.mxu0 0.0
  %2894 = vmatpush1.msra.mxu0 0.0
  %2895 = vmatprep.subr.mxu0 0.0
  %2896 = vmatpush1.msra.mxu0 0.0
  %2897 = vmatprep.subr.mxu0 0.0
  %2898 = vmatpush1.msra.mxu0 0.0
  %2899 = vmatprep.subr.mxu0 0.0
  %2900 = vmatpush1.msra.mxu0 0.0
  %2901 = vmatprep.subr.mxu0 0.0
  %2902 = vmatpush1.msra.mxu0 0.0
  %2903 = vmatprep.mubr.f32.mxu0 0.0
  %2904 = vmatmul.mubr.f32.gmra.mrb[0].mxu0 %v2837
  %v2905 = vpop.f32.mrb[0].mxu0
  %v2906 = vadd.f32 0.0, %v2905
  %v2907 = vpop.f32.mrb[0].mxu0
  %2908 = vdwg.mxu0
  %2909 = vmatprep.subr.mxu0 0.0
  %2910 = vmatpush1.msra.mxu0 %v34
  %2911 = vmatprep.subr.mxu0 0.0
  %2912 = vmatpush1.msra.mxu0 %v35
  %2913 = vmatprep.subr.mxu0 0.0
  %2914 = vmatpush1.msra.mxu0 %v36
  %2915 = vmatprep.subr.mxu0 0.0
  %2916 = vmatpush1.msra.mxu0 %v37
  %2917 = vmatprep.subr.mxu0 0.0
  %2918 = vmatpush1.msra.mxu0 0.0
  %2919 = vmatprep.subr.mxu0 0.0
  %2920 = vmatpush1.msra.mxu0 0.0
  %2921 = vmatprep.subr.mxu0 0.0
  %2922 = vmatpush1.msra.mxu0 0.0
  %2923 = vmatprep.subr.mxu0 0.0
  %2924 = vmatpush1.msra.mxu0 0.0
  %2925 = vmatprep.subr.mxu0 0.0
  %2926 = vmatpush1.msra.mxu0 0.0
  %2927 = vmatprep.subr.mxu0 0.0
  %2928 = vmatpush1.msra.mxu0 0.0
  %2929 = vmatprep.subr.mxu0 0.0
  %2930 = vmatpush1.msra.mxu0 0.0
  %2931 = vmatprep.subr.mxu0 0.0
  %2932 = vmatpush1.msra.mxu0 0.0
  %2933 = vmatprep.subr.mxu0 0.0
  %2934 = vmatpush1.msra.mxu0 0.0
  %2935 = vmatprep.subr.mxu0 0.0
  %2936 = vmatpush1.msra.mxu0 0.0
  %2937 = vmatprep.subr.mxu0 0.0
  %2938 = vmatpush1.msra.mxu0 0.0
  %2939 = vmatprep.subr.mxu0 0.0
  %2940 = vmatpush1.msra.mxu0 0.0
  %2941 = vmatprep.subr.mxu0 0.0
  %2942 = vmatpush1.msra.mxu0 0.0
  %2943 = vmatprep.subr.mxu0 0.0
  %2944 = vmatpush1.msra.mxu0 0.0
  %2945 = vmatprep.subr.mxu0 0.0
  %2946 = vmatpush1.msra.mxu0 0.0
  %2947 = vmatprep.subr.mxu0 0.0
  %2948 = vmatpush1.msra.mxu0 0.0
  %2949 = vmatprep.subr.mxu0 0.0
  %2950 = vmatpush1.msra.mxu0 0.0
  %2951 = vmatprep.subr.mxu0 0.0
  %2952 = vmatpush1.msra.mxu0 0.0
  %2953 = vmatprep.subr.mxu0 0.0
  %2954 = vmatpush1.msra.mxu0 0.0
  %2955 = vmatprep.subr.mxu0 0.0
  %2956 = vmatpush1.msra.mxu0 0.0
  %2957 = vmatprep.subr.mxu0 0.0
  %2958 = vmatpush1.msra.mxu0 0.0
  %2959 = vmatprep.subr.mxu0 0.0
  %2960 = vmatpush1.msra.mxu0 0.0
  %2961 = vmatprep.subr.mxu0 0.0
  %2962 = vmatpush1.msra.mxu0 0.0
  %2963 = vmatprep.subr.mxu0 0.0
  %2964 = vmatpush1.msra.mxu0 0.0
  %2965 = vmatprep.subr.mxu0 0.0
  %2966 = vmatpush1.msra.mxu0 0.0
  %2967 = vmatprep.subr.mxu0 0.0
  %2968 = vmatpush1.msra.mxu0 0.0
  %2969 = vmatprep.subr.mxu0 0.0
  %2970 = vmatpush1.msra.mxu0 0.0
  %2971 = vmatprep.subr.mxu0 0.0
  %2972 = vmatpush1.msra.mxu0 0.0
  %2973 = vmatprep.mubr.f32.mxu0 0.0
  %2974 = vmatmul.mubr.f32.gmra.mrb[0].mxu0 %v2731
  %v2975 = vpop.f32.mrb[0].mxu0
  %v2976 = vadd.f32 %v957, %v2975
  %v2977 = vpop.f32.mrb[0].mxu0
  %2978 = vdwg.mxu0
  %v2979 = vadd.f32 %v2906, %v2976
  %v2980 = vxor.u32 %v2979, 2147483648
  %v2981 = vmul.f32 %v2980, 1.442695
  %v2982 = vpow.pop %v2981
  %v2983 = vadd.f32 %v2982, 1.0
  %v2984 = vrcp.pop %v2983
  %v2985 = vmul.f32 1.0, %v2984
  %2987 = vrot.lane.b32.xlu0 %v2976, 64
  %v2988 = vpop.permute.xlu0 %2987
  %v2990 = vmul.f32 %v2985, %v2988
  %2992 = vrot.lane.b32.xlu0 %v2990, 64
  %v2993 = vpop.permute.xlu0 %2992
  %v2995 = vadd.f32 %v2906, %v2993
  %v2996 = vtanh.pop %v2995
  %v2997 = vsub.f32 1.0, %v2985
  %2999 = vrot.lane.b32.xlu0 %v2996, 96
  %v3000 = vpop.permute.xlu0 %2999
  %v3002 = vmul.f32 %v2997, %v3000
  %v3003 = vmul.f32 %v2985, %v2727
  %v3004 = vadd.f32 %v3002, %v3003
  %3006 = vrot.lane.b32.xlu0 %v3004, 96
  %v3007 = vpop.permute.xlu0 %3006
  %v3008 = vsel %vm53, %v3007, 0
  %3010 = vmatprep.subr.mxu0 0.0
  %3011 = vmatpush1.msra.mxu0 %v41
  %3012 = vmatprep.subr.mxu0 0.0
  %3013 = vmatpush1.msra.mxu0 %v42
  %3014 = vmatprep.subr.mxu0 0.0
  %3015 = vmatpush1.msra.mxu0 %v43
  %3016 = vmatprep.subr.mxu0 0.0
  %3017 = vmatpush1.msra.mxu0 %v44
  %3018 = vmatprep.subr.mxu0 0.0
  %3019 = vmatpush1.msra.mxu0 0.0
  %3020 = vmatprep.subr.mxu0 0.0
  %3021 = vmatpush1.msra.mxu0 0.0
  %3022 = vmatprep.subr.mxu0 0.0
  %3023 = vmatpush1.msra.mxu0 0.0
  %3024 = vmatprep.subr.mxu0 0.0
  %3025 = vmatpush1.msra.mxu0 0.0
  %3026 = vmatprep.subr.mxu0 0.0
  %3027 = vmatpush1.msra.mxu0 0.0
  %3028 = vmatprep.subr.mxu0 0.0
  %3029 = vmatpush1.msra.mxu0 0.0
  %3030 = vmatprep.subr.mxu0 0.0
  %3031 = vmatpush1.msra.mxu0 0.0
  %3032 = vmatprep.subr.mxu0 0.0
  %3033 = vmatpush1.msra.mxu0 0.0
  %3034 = vmatprep.subr.mxu0 0.0
  %3035 = vmatpush1.msra.mxu0 0.0
  %3036 = vmatprep.subr.mxu0 0.0
  %3037 = vmatpush1.msra.mxu0 0.0
  %3038 = vmatprep.subr.mxu0 0.0
  %3039 = vmatpush1.msra.mxu0 0.0
  %3040 = vmatprep.subr.mxu0 0.0
  %3041 = vmatpush1.msra.mxu0 0.0
  %3042 = vmatprep.subr.mxu0 0.0
  %3043 = vmatpush1.msra.mxu0 0.0
  %3044 = vmatprep.subr.mxu0 0.0
  %3045 = vmatpush1.msra.mxu0 0.0
  %3046 = vmatprep.subr.mxu0 0.0
  %3047 = vmatpush1.msra.mxu0 0.0
  %3048 = vmatprep.subr.mxu0 0.0
  %3049 = vmatpush1.msra.mxu0 0.0
  %3050 = vmatprep.subr.mxu0 0.0
  %3051 = vmatpush1.msra.mxu0 0.0
  %3052 = vmatprep.subr.mxu0 0.0
  %3053 = vmatpush1.msra.mxu0 0.0
  %3054 = vmatprep.subr.mxu0 0.0
  %3055 = vmatpush1.msra.mxu0 0.0
  %3056 = vmatprep.subr.mxu0 0.0
  %3057 = vmatpush1.msra.mxu0 0.0
  %3058 = vmatprep.subr.mxu0 0.0
  %3059 = vmatpush1.msra.mxu0 0.0
  %3060 = vmatprep.subr.mxu0 0.0
  %3061 = vmatpush1.msra.mxu0 0.0
  %3062 = vmatprep.subr.mxu0 0.0
  %3063 = vmatpush1.msra.mxu0 0.0
  %3064 = vmatprep.subr.mxu0 0.0
  %3065 = vmatpush1.msra.mxu0 0.0
  %3066 = vmatprep.subr.mxu0 0.0
  %3067 = vmatpush1.msra.mxu0 0.0
  %3068 = vmatprep.subr.mxu0 0.0
  %3069 = vmatpush1.msra.mxu0 0.0
  %3070 = vmatprep.subr.mxu0 0.0
  %3071 = vmatpush1.msra.mxu0 0.0
  %3072 = vmatprep.subr.mxu0 0.0
  %3073 = vmatpush1.msra.mxu0 0.0
  %3074 = vmatprep.mubr.f32.mxu0 0.0
  %3075 = vmatmul.mubr.f32.gmra.mrb[0].mxu0 %v3008
  %v3076 = vpop.f32.mrb[0].mxu0
  %v3077 = vadd.f32 %v1064, %v3076
  %v3078 = vpop.f32.mrb[0].mxu0
  %3079 = vdwg.mxu0
  %v3080 = vsel %vm879, %v3077, -inf
  %3081 = vmax.xlane.f32.xlu0 %v3080
  %v3082 = vpop.xlane.xlu0 %3081
  %v3083 = vsub.f32 %v3077, %v3082
  %v3084 = vmul.f32 %v3083, 1.442695
  %v3085 = vpow.pop %v3084
  %v3086 = vsel %vm879, %v3085, 0.0
  %3087 = vadd.xlane.f32.xlu0 %v3086
  %v3088 = vpop.xlane.xlu0 %3087
  %v3089 = vlog2.pop %v3088
  %v3090 = vmul.f32 %v3089, 0.6931472
  %v3091 = vadd.f32 %v3082, %v3090
  %v3092 = vsub.f32 %v3077, %v3091
  %3094 = vrot.lane.b32.xlu0 %v1430, 16
  %v3095 = vpop.permute.xlu0 %3094
  %3098 = vrot.lane.b32.xlu0 %v1707, 32
  %v3099 = vpop.permute.xlu0 %3098
  %3102 = vrot.lane.b32.xlu0 %v1984, 48
  %v3103 = vpop.permute.xlu0 %3102
  %3106 = vrot.lane.b32.xlu0 %v2261, 64
  %v3107 = vpop.permute.xlu0 %3106
  %3110 = vrot.lane.b32.xlu0 %v2538, 80
  %v3111 = vpop.permute.xlu0 %3110
  %3114 = vrot.lane.b32.xlu0 %v2815, 96
  %v3115 = vpop.permute.xlu0 %3114
  %3118 = vrot.lane.b32.xlu0 %v3092, 112
  %v3119 = vpop.permute.xlu0 %3118
  %v3121 = vsel %vm879, %v1153, %v3095
  %v3122 = vsel %vm53, %v3121, %v3099
  %vm3123 = vcmask 392192
  %v3124 = vsel %vm3123, %v3122, %v3103
  %vm3125 = vcmask 523264
  %v3126 = vsel %vm3125, %v3124, %v3107
  %vm3127 = vcmask 654336
  %v3128 = vsel %vm3127, %v3126, %v3111
  %vm3129 = vcmask 785408
  %v3130 = vsel %vm3129, %v3128, %v3115
  %vm3131 = vcmask 916480
  %v3132 = vsel %vm3131, %v3130, %v3119
  %3133 = vst [vmem:[%s8] sm:$0xff] %v3132
  // Predicated region
  $region34: #{transduction_forward.1} parent=0 // pred_check
    _
  $region35: #{transduction_forward.1} parent=0 // pred_check_branch
    %3135 = sbr.rel (0) target = $region37
  $region36: #{transduction_forward.1} parent=0 // pred_region
    _
  $region37: #{transduction_forward.1} parent=0 // pred_fallthru
    _
  // Predicated region
  $region38: #{transduction_forward.1} parent=0 // pred_check
    _
  $region39: #{transduction_forward.1} parent=0 // pred_check_branch
    %3137 = sbr.rel (0) target = $region41
  $region40: #{transduction_forward.1} parent=0 // pred_region
    _
  $region41: #{transduction_forward.1} parent=0 // pred_fallthru
    _

</llo_original>
